<compile_context>
chip_gen: v5e
topology: v5e:2x2
jax: 0.10.0
libtpu: 0.0.40
codegen_flags: <defaults>
</compile_context>

<pallas_src>
import math
from functools import partial

import numpy as np
import jax
import jax.numpy as jnp
from jax.experimental import pallas as pl
from jax.experimental.pallas import tpu as pltpu


# ----------------------------------------------------------------------------
# Model configuration (small synthetic shapes; all static Python ints)
# ----------------------------------------------------------------------------

IMG_SIZE = 16
PATCH = 4
IN_CHANS = 3
EMBED_DIM = 32          # must equal decoder dim (see reference forward_encoder)
DEC_EMBED_DIM = 32
DEPTH = 2
DEC_DEPTH = 1
NUM_HEADS = 4
DEC_NUM_HEADS = 4
MLP_RATIO = 4.0
NUM_PATCHES = (IMG_SIZE // PATCH) ** 2   # 16
SEQ = NUM_PATCHES + 1                    # 17 (cls token included)
MASK_RATIO = 0.75

HIDDEN = int(EMBED_DIM * MLP_RATIO)            # 128
PATCH_DIM = PATCH * PATCH * IN_CHANS           # 48
SMALL_W = ((max(EMBED_DIM, 3 * EMBED_DIM, HIDDEN, PATCH_DIM) + 127) // 128) * 128
LN_EPS = 1e-5

# bf16 MXU operands with f32 accumulation (review item for v6e/v7x; also valid
# on v5e's bf16 MXU).  Residual stream / LN stats / softmax remain f32.
USE_BF16_MATMUL = True
MM_DTYPE = jnp.bfloat16 if USE_BF16_MATMUL else jnp.float32

assert EMBED_DIM == DEC_EMBED_DIM, \
    "reference forward_encoder mixes encoder tokens with decoder mask tokens"
assert EMBED_DIM % NUM_HEADS == 0 and DEC_EMBED_DIM % DEC_NUM_HEADS == 0
assert int(DEC_EMBED_DIM * MLP_RATIO) == HIDDEN
assert DEPTH >= 1 and DEC_DEPTH >= 1


# ----------------------------------------------------------------------------
# In-kernel building blocks (operate on VMEM-resident values)
# ----------------------------------------------------------------------------

def _layernorm(v, g, b, eps):
    mu = jnp.mean(v, axis=-1, keepdims=True)
    var = jnp.mean(jnp.square(v - mu), axis=-1, keepdims=True)
    return (v - mu) * jax.lax.rsqrt(var + eps) * g + b


def _vit_block(x, wqkv, wproj, wfc1, wfc2, small, heads, eps):
    """Pre-norm ViT block: x + MHSA(LN1(x)); x + MLP(LN2(x)).  All in VMEM.

    `small` packs [ln1_g, ln1_b, ln2_g, ln2_b, b_proj, b_fc2, b_qkv, b_fc1]
    as rows of a (8, SMALL_W) f32 slab.  The Q rows of wqkv / b_qkv are
    pre-scaled by 1/sqrt(dh) on the host.
    """
    S, D = x.shape
    HID = wfc1.shape[-1]
    dh = D // heads

    ln1_g, ln1_b = small[0:1, :D], small[1:2, :D]
    ln2_g, ln2_b = small[2:3, :D], small[3:4, :D]
    b_proj, b_fc2 = small[4:5, :D], small[5:6, :D]
    b_qkv = small[6:7, :3 * D]
    b_fc1 = small[7:8, :HID]

    # ---- attention branch ---------------------------------------------------
    h = _layernorm(x, ln1_g, ln1_b, eps)
    qkv = jnp.dot(h.astype(wqkv.dtype), wqkv,
                  preferred_element_type=jnp.float32) + b_qkv          # (S, 3D)

    # Heads are static lane slices of the in-VMEM qkv; per-head outputs are
    # concatenated along lanes and fed through ONE (S,D)@(D,D) projection.
    # TODO(synk): option B (heads stacked along sublanes -> one block-diagonal
    # (H*S,H*S) score matmul) skipped: at dh=8, S=17 the required
    # (S,H,dh)->(H,S,dh) relayouts cost more than the saved MXU pushes.
    heads_out = []
    for hd in range(heads):
        q = qkv[:, hd * dh:(hd + 1) * dh]          # 1/sqrt(dh) already folded in
        k = qkv[:, D + hd * dh:D + (hd + 1) * dh]
        v = qkv[:, 2 * D + hd * dh:2 * D + (hd + 1) * dh]
        s = jax.lax.dot_general(q, k, (((1,), (1,)), ((), ())),
                                preferred_element_type=jnp.float32)    # (S, S)
        s = s - jnp.max(s, axis=-1, keepdims=True)
        p = jnp.exp(s)
        p = p * pl.reciprocal(jnp.sum(p, axis=-1, keepdims=True), approx=True)
        heads_out.append(jnp.dot(p, v, preferred_element_type=jnp.float32))
    o = jnp.concatenate(heads_out, axis=-1)                            # (S, D)
    x = x + jnp.dot(o.astype(wproj.dtype), wproj,
                    preferred_element_type=jnp.float32) + b_proj

    # ---- MLP branch ----------------------------------------------------------
    h = _layernorm(x, ln2_g, ln2_b, eps)
    h = jnp.dot(h.astype(wfc1.dtype), wfc1,
                preferred_element_type=jnp.float32) + b_fc1
    # TODO(synk): PyTorch nn.GELU defaults to the exact erf form; the tanh
    # approximation is used for guaranteed Mosaic lowering.
    h = jax.nn.gelu(h, approximate=True)
    h = jnp.dot(h.astype(wfc2.dtype), wfc2,
                preferred_element_type=jnp.float32) + b_fc2
    return x + h


# ----------------------------------------------------------------------------
# The single fused forward kernel (one batch element per grid step)
# ----------------------------------------------------------------------------

def _mae_forward_kernel(
    patches_ref, mask_ref,                       # per-batch data
    patch_w_ref, misc_ref, tok_ref, pos_ref,     # model-level params
    ewqkv_ref, ewproj_ref, ewfc1_ref, ewfc2_ref, esmall_ref,   # encoder stacks
    dwqkv_ref, dwproj_ref, dwfc1_ref, dwfc2_ref, dsmall_ref,   # decoder stacks
    pred_w_ref,
    pred_ref, loss_ref,                          # outputs
    *, enc_depth, dec_depth, enc_heads, dec_heads, eps, norm_pix_loss,
):
    S = patches_ref.shape[1]
    L = S - 1
    D = patch_w_ref.shape[1]
    P = pred_w_ref.shape[1]

    patches = patches_ref[0]          # (S, P) f32; rows 0..L-1 real, row L zero
    m = mask_ref[0]                   # (S, 1) f32; 1 on masked rows and cls row

    patch_b = misc_ref[0:1, :D]
    norm_g, norm_b = misc_ref[1:2, :D], misc_ref[2:3, :D]
    dnorm_g, dnorm_b = misc_ref[3:4, :D], misc_ref[4:5, :D]
    pred_b = misc_ref[5:6, :P]

    # PatchEmbed: Conv2d(k=p, stride=p) as one (S, p*p*C)@(p*p*C, D) matmul;
    # weight rows are pre-permuted on the host to patchify (ph, pw, c) order so
    # the same `patches` array serves as the loss target.
    xp = jnp.dot(patches.astype(patch_w_ref.dtype), patch_w_ref[...],
                 preferred_element_type=jnp.float32) + patch_b          # (S, D)

    # random-masking gather + mask-token un-shuffle + cls insertion collapse to
    # a per-row select.  The cls token lives in the LAST row (attention is
    # permutation-equivariant; its pos-embedding was moved with it on the
    # host), so all later row slices start at 0.
    x = xp * (1.0 - m) + tok_ref[...] * m + pos_ref[...]                # (S, D)

    for i in range(enc_depth):
        x = _vit_block(x, ewqkv_ref[i], ewproj_ref[i], ewfc1_ref[i],
                       ewfc2_ref[i], esmall_ref[i], enc_heads, eps)
    x = _layernorm(x, norm_g, norm_b, eps)          # encoder `norm`, fused

    for i in range(dec_depth):
        x = _vit_block(x, dwqkv_ref[i], dwproj_ref[i], dwfc1_ref[i],
                       dwfc2_ref[i], dsmall_ref[i], dec_heads, eps)
    x = _layernorm(x, dnorm_g, dnorm_b, eps)        # decoder_norm, fused

    # decoder_pred on the L patch rows only (cls prediction is dropped anyway).
    y = jnp.dot(x[:L, :].astype(pred_w_ref.dtype), pred_w_ref[...],
                preferred_element_type=jnp.float32) + pred_b            # (L, P)
    pred_ref[0] = y.astype(pred_ref.dtype)

    # masked-MSE partial sums: [sum(per_patch_mse * mask), sum(mask)]
    tgt = patches[:L, :]
    if norm_pix_loss:
        mu = jnp.mean(tgt, axis=-1, keepdims=True)
        var = jnp.sum(jnp.square(tgt - mu), axis=-1, keepdims=True) / (P - 1)
        tgt = (tgt - mu) * jax.lax.rsqrt(var + 1e-6)
    d = y - tgt
    per_patch = jnp.mean(d * d, axis=-1, keepdims=True)                 # (L, 1)
    mp = m[:L, :]
    vals = jnp.concatenate([per_patch * mp, mp], axis=-1)               # (L, 2)
    loss_ref[0] = jnp.sum(vals, axis=0, keepdims=True)                  # (1, 2)


def _full_spec(shape):
    nd = len(shape)
    return pl.BlockSpec(shape, lambda b, _nd=nd: (0,) * _nd)


def mae_forward_call(kp, patches_ext, mask_ext, norm_pix_loss):
    """One pallas_call for the whole network.  Grid over batch (parallel)."""
    B, S, PD = patches_ext.shape
    L = S - 1
    P = kp["pred_w"].shape[1]

    in_specs = [
        pl.BlockSpec((1, S, PD), lambda b: (b, 0, 0)),
        pl.BlockSpec((1, S, 1), lambda b: (b, 0, 0)),
        _full_spec(kp["patch_w"].shape),
        _full_spec(kp["misc"].shape),
        _full_spec(kp["tok"].shape),
        _full_spec(kp["pos"].shape),
        _full_spec(kp["enc"]["w_qkv"].shape),
        _full_spec(kp["enc"]["w_proj"].shape),
        _full_spec(kp["enc"]["w_fc1"].shape),
        _full_spec(kp["enc"]["w_fc2"].shape),
        _full_spec(kp["enc"]["small"].shape),
        _full_spec(kp["dec"]["w_qkv"].shape),
        _full_spec(kp["dec"]["w_proj"].shape),
        _full_spec(kp["dec"]["w_fc1"].shape),
        _full_spec(kp["dec"]["w_fc2"].shape),
        _full_spec(kp["dec"]["small"].shape),
        _full_spec(kp["pred_w"].shape),
    ]
    out_specs = [
        pl.BlockSpec((1, L, P), lambda b: (b, 0, 0)),
        pl.BlockSpec((1, 1, 2), lambda b: (b, 0, 0)),
    ]
    out_shape = (jax.ShapeDtypeStruct((B, L, P), jnp.float32),
                 jax.ShapeDtypeStruct((B, 1, 2), jnp.float32))

    kern = partial(_mae_forward_kernel,
                   enc_depth=DEPTH, dec_depth=DEC_DEPTH,
                   enc_heads=NUM_HEADS, dec_heads=DEC_NUM_HEADS,
                   eps=LN_EPS, norm_pix_loss=norm_pix_loss)

    return pl.pallas_call(
        kern,
        out_shape=out_shape,
        grid=(B,),
        in_specs=in_specs,
        out_specs=out_specs,
        compiler_params=pltpu.CompilerParams(
            dimension_semantics=("parallel",)),   # v7x: 2 TCs split the batch
    )(patches_ext, mask_ext,
      kp["patch_w"], kp["misc"], kp["tok"], kp["pos"],
      kp["enc"]["w_qkv"], kp["enc"]["w_proj"], kp["enc"]["w_fc1"],
      kp["enc"]["w_fc2"], kp["enc"]["small"],
      kp["dec"]["w_qkv"], kp["dec"]["w_proj"], kp["dec"]["w_fc1"],
      kp["dec"]["w_fc2"], kp["dec"]["small"],
      kp["pred_w"])


# ----------------------------------------------------------------------------
# Parameter initialization (PyTorch-equivalent structure, deterministic)
# ----------------------------------------------------------------------------

def _get_1d_sincos(embed_dim, pos):
    omega = np.arange(embed_dim // 2, dtype=np.float64)
    omega /= embed_dim / 2.0
    omega = 1.0 / 10000 ** omega
    out = np.einsum("m,d->md", pos.reshape(-1), omega)
    return np.concatenate([np.sin(out), np.cos(out)], axis=1)


def get_2d_sincos_pos_embed(embed_dim, grid_size, cls_token=False):
    gh = np.arange(grid_size, dtype=np.float32)
    gw = np.arange(grid_size, dtype=np.float32)
    grid = np.stack(np.meshgrid(gw, gh), axis=0).reshape(2, 1, grid_size, grid_size)
    emb_h = _get_1d_sincos(embed_dim // 2, grid[0])
    emb_w = _get_1d_sincos(embed_dim // 2, grid[1])
    emb = np.concatenate([emb_h, emb_w], axis=1)
    if cls_token:
        emb = np.concatenate([np.zeros([1, embed_dim]), emb], axis=0)
    return emb.astype(np.float32)


def _xavier(key, fan_in, fan_out):
    bound = math.sqrt(6.0 / (fan_in + fan_out))
    return jax.random.uniform(key, (fan_in, fan_out), jnp.float32, -bound, bound)


def _init_block(key, dim, mlp_ratio):
    ks = jax.random.split(key, 4)
    hidden = int(dim * mlp_ratio)
    return dict(
        ln1_g=jnp.ones((dim,), jnp.float32), ln1_b=jnp.zeros((dim,), jnp.float32),
        w_qkv=_xavier(ks[0], dim, 3 * dim), b_qkv=jnp.zeros((3 * dim,), jnp.float32),
        w_proj=_xavier(ks[1], dim, dim), b_proj=jnp.zeros((dim,), jnp.float32),
        ln2_g=jnp.ones((dim,), jnp.float32), ln2_b=jnp.zeros((dim,), jnp.float32),
        w_fc1=_xavier(ks[2], dim, hidden), b_fc1=jnp.zeros((hidden,), jnp.float32),
        w_fc2=_xavier(ks[3], hidden, dim), b_fc2=jnp.zeros((dim,), jnp.float32),
    )


def init_params(key):
    ks = jax.random.split(key, 8)
    grid_size = IMG_SIZE // PATCH
    return dict(
        # PatchEmbed conv weight flattened in conv (c, ph, pw) row order.
        patch_w=_xavier(ks[0], IN_CHANS * PATCH * PATCH, EMBED_DIM),
        patch_b=jnp.zeros((EMBED_DIM,), jnp.float32),
        cls_token=0.02 * jax.random.normal(ks[1], (1, 1, EMBED_DIM), jnp.float32),
        mask_token=0.02 * jax.random.normal(ks[2], (1, 1, DEC_EMBED_DIM), jnp.float32),
        decoder_pos_embed=jnp.asarray(
            get_2d_sincos_pos_embed(DEC_EMBED_DIM, grid_size, cls_token=True))[None],
        blocks=[_init_block(jax.random.fold_in(ks[3], i), EMBED_DIM, MLP_RATIO)
                for i in range(DEPTH)],
        norm_g=jnp.ones((EMBED_DIM,), jnp.float32),
        norm_b=jnp.zeros((EMBED_DIM,), jnp.float32),
        decoder_blocks=[_init_block(jax.random.fold_in(ks[4], i), DEC_EMBED_DIM,
                                    MLP_RATIO)
                        for i in range(DEC_DEPTH)],
        dnorm_g=jnp.ones((DEC_EMBED_DIM,), jnp.float32),
        dnorm_b=jnp.zeros((DEC_EMBED_DIM,), jnp.float32),
        pred_w=_xavier(ks[5], DEC_EMBED_DIM, PATCH * PATCH * IN_CHANS),
        pred_b=jnp.zeros((PATCH * PATCH * IN_CHANS,), jnp.float32),
        # TODO(synk): self.pos_embed / self.decoder_embed exist in __init__ but
        # are never used by forward(); not materialized.
    )


# ----------------------------------------------------------------------------
# One-time packing of params into kernel operands (stack / pad / cast / fold)
# ----------------------------------------------------------------------------

def _pad_row(v, width):
    v = jnp.asarray(v, jnp.float32).reshape(1, -1)
    return jnp.pad(v, ((0, 0), (0, width - v.shape[1])))


def _stack_blocks(blocks, dim, heads, width):
    scale = float(dim // heads) ** -0.5
    wqkv, wproj, wfc1, wfc2, small = [], [], [], [], []
    for bp in blocks:
        # fold 1/sqrt(dh) into the Q columns of w_qkv / b_qkv (zero in-kernel cost)
        wq = jnp.concatenate([bp["w_qkv"][:, :dim] * scale, bp["w_qkv"][:, dim:]], axis=1)
        bq = jnp.concatenate([bp["b_qkv"][:dim] * scale, bp["b_qkv"][dim:]], axis=0)
        wqkv.append(wq.astype(MM_DTYPE))
        wproj.append(bp["w_proj"].astype(MM_DTYPE))
        wfc1.append(bp["w_fc1"].astype(MM_DTYPE))
        wfc2.append(bp["w_fc2"].astype(MM_DTYPE))
        rows = [bp["ln1_g"], bp["ln1_b"], bp["ln2_g"], bp["ln2_b"],
                bp["b_proj"], bp["b_fc2"], bq, bp["b_fc1"]]
        small.append(jnp.concatenate([_pad_row(r, width) for r in rows], axis=0))
    return dict(w_qkv=jnp.stack(wqkv), w_proj=jnp.stack(wproj),
                w_fc1=jnp.stack(wfc1), w_fc2=jnp.stack(wfc2),
                small=jnp.stack(small))


def pack_params(p):
    # Permute PatchEmbed weight rows from conv (c, ph, pw) order to the
    # patchify (ph, pw, c) order so ONE patch array feeds both the embed matmul
    # and the loss target.
    w = p["patch_w"].reshape(IN_CHANS, PATCH, PATCH, EMBED_DIM)
    w = jnp.transpose(w, (1, 2, 0, 3)).reshape(PATCH * PATCH * IN_CHANS, EMBED_DIM)

    misc_rows = [p["patch_b"], p["norm_g"], p["norm_b"],
                 p["dnorm_g"], p["dnorm_b"], p["pred_b"]]
    misc = jnp.concatenate([_pad_row(r, SMALL_W) for r in misc_rows], axis=0)

    # Per-row token table (mask_token for patch rows, cls token in the LAST
    # row) and the matching permuted decoder_pos_embed (cls pos-embed moved to
    # the last row with it).
    tok = jnp.concatenate(
        [jnp.broadcast_to(p["mask_token"].reshape(1, -1), (NUM_PATCHES, DEC_EMBED_DIM)),
         p["cls_token"].reshape(1, -1)], axis=0)
    pos = p["decoder_pos_embed"].reshape(SEQ, DEC_EMBED_DIM)
    pos = jnp.concatenate([pos[1:], pos[:1]], axis=0)

    return dict(
        patch_w=w.astype(MM_DTYPE),
        misc=misc,
        tok=tok.astype(jnp.float32),
        pos=pos.astype(jnp.float32),
        enc=_stack_blocks(p["blocks"], EMBED_DIM, NUM_HEADS, SMALL_W),
        dec=_stack_blocks(p["decoder_blocks"], DEC_EMBED_DIM, DEC_NUM_HEADS, SMALL_W),
        pred_w=p["pred_w"].astype(MM_DTYPE),
    )


# ----------------------------------------------------------------------------
# Forward pass (minimal JAX glue, compute in the single Pallas kernel)
# ----------------------------------------------------------------------------

def patchify(imgs):
    """Module's patchify(): nchpwq -> nhwpqc -> (N, L, p*p*3)."""
    N, C, H, W = imgs.shape
    h = w = H // PATCH
    x = imgs.reshape(N, C, h, PATCH, w, PATCH)
    x = jnp.transpose(x, (0, 2, 4, 3, 5, 1))
    return x.reshape(N, h * w, PATCH * PATCH * C)


def random_mask(key, n, L, mask_ratio):
    # TODO(synk): per-sample argsort (the random permutation) has no clean
    # Pallas equivalent and stays in plain JAX; only the 0/1 mask is needed by
    # the kernel (the gather/un-shuffle collapses to a select in-kernel).
    len_keep = int(L * (1 - mask_ratio))
    noise = jax.random.uniform(key, (n, L))
    ids_shuffle = jnp.argsort(noise, axis=1)
    ids_restore = jnp.argsort(ids_shuffle, axis=1)
    return (ids_restore >= len_keep).astype(jnp.float32)   # (n, L), 1 = masked


@partial(jax.jit, static_argnames=("mask_ratio", "norm_pix_loss"))
def forward(kparams, imgs, key, mask_ratio=MASK_RATIO, norm_pix_loss=False):
    patches = patchify(imgs)                                   # (B, L, p*p*C)
    B, L, _ = patches.shape
    mask = random_mask(key, B, L, mask_ratio)                  # (B, L)

    # append a dummy row for the cls slot (kernel keeps cls in the last row)
    patches_ext = jnp.pad(patches, ((0, 0), (0, 1), (0, 0)))
    mask_ext = jnp.pad(mask, ((0, 0), (0, 1)), constant_values=1.0)[:, :, None]

    pred, parts = mae_forward_call(kparams, patches_ext, mask_ext, norm_pix_loss)
    # per-batch [num, den] partials -> scalar masked-MSE loss
    # TODO(synk): no guard for sum(mask)==0 (mask_ratio=0); matches reference.
    loss = jnp.sum(parts[:, 0, 0]) / jnp.sum(parts[:, 0, 1])
    return loss, pred, mask


# ----------------------------------------------------------------------------
# Main
# ----------------------------------------------------------------------------

if __name__ == "__main__":
    root = jax.random.PRNGKey(0)
    pkey, xkey, mkey = jax.random.split(root, 3)

    params = init_params(pkey)
    kparams = pack_params(params)            # one-time host-side packing
    imgs = jax.random.normal(xkey, (2, IN_CHANS, IMG_SIZE, IMG_SIZE), jnp.float32)

    loss, pred, mask = forward(kparams, imgs, mkey)
    jax.block_until_ready((loss, pred, mask))

    assert pred.shape == (2, NUM_PATCHES, PATCH * PATCH * IN_CHANS)
    assert mask.shape == (2, NUM_PATCHES)
    assert bool(jnp.isfinite(loss))

    print("KERNEL_OK")
</pallas_src>

<mosaic_0001>
module attributes {stable_mosaic.version = 11 : i64} {
  func.func @_mae_forward_kernel(%arg0: i32, %arg1: memref<1x17x48xf32, #tpu.memory_space<vmem>>, %arg2: memref<1x17x1xf32, #tpu.memory_space<vmem>>, %arg3: memref<48x32xbf16, #tpu.memory_space<vmem>>, %arg4: memref<6x128xf32, #tpu.memory_space<vmem>>, %arg5: memref<17x32xf32, #tpu.memory_space<vmem>>, %arg6: memref<17x32xf32, #tpu.memory_space<vmem>>, %arg7: memref<2x32x96xbf16, #tpu.memory_space<vmem>>, %arg8: memref<2x32x32xbf16, #tpu.memory_space<vmem>>, %arg9: memref<2x32x128xbf16, #tpu.memory_space<vmem>>, %arg10: memref<2x128x32xbf16, #tpu.memory_space<vmem>>, %arg11: memref<2x8x128xf32, #tpu.memory_space<vmem>>, %arg12: memref<1x32x96xbf16, #tpu.memory_space<vmem>>, %arg13: memref<1x32x32xbf16, #tpu.memory_space<vmem>>, %arg14: memref<1x32x128xbf16, #tpu.memory_space<vmem>>, %arg15: memref<1x128x32xbf16, #tpu.memory_space<vmem>>, %arg16: memref<1x8x128xf32, #tpu.memory_space<vmem>>, %arg17: memref<32x48xbf16, #tpu.memory_space<vmem>>, %arg18: memref<1x16x48xf32, #tpu.memory_space<vmem>>, %arg19: memref<1x1x2xf32, #tpu.memory_space<vmem>>) attributes {dimension_semantics = [#tpu.dimension_semantics<parallel>], iteration_bounds = array<i64: 2>, scalar_prefetch = 0 : i64, scratch_operands = 0 : i64, tpu.core_type = #tpu.core_type<tc>, window_params = [{transform_indices = @transform_0, window_bounds = array<i64: 1, 17, 48>}, {transform_indices = @transform_1, window_bounds = array<i64: 1, 17, 1>}, {pipeline_mode = #tpu.pipeline_mode<synchronous>, transform_indices = @transform_2, window_bounds = array<i64: 48, 32>}, {pipeline_mode = #tpu.pipeline_mode<synchronous>, transform_indices = @transform_3, window_bounds = array<i64: 6, 128>}, {pipeline_mode = #tpu.pipeline_mode<synchronous>, transform_indices = @transform_4, window_bounds = array<i64: 17, 32>}, {pipeline_mode = #tpu.pipeline_mode<synchronous>, transform_indices = @transform_5, window_bounds = array<i64: 17, 32>}, {pipeline_mode = #tpu.pipeline_mode<synchronous>, transform_indices = @transform_6, window_bounds = array<i64: 2, 32, 96>}, {pipeline_mode = #tpu.pipeline_mode<synchronous>, transform_indices = @transform_7, window_bounds = array<i64: 2, 32, 32>}, {pipeline_mode = #tpu.pipeline_mode<synchronous>, transform_indices = @transform_8, window_bounds = array<i64: 2, 32, 128>}, {pipeline_mode = #tpu.pipeline_mode<synchronous>, transform_indices = @transform_9, window_bounds = array<i64: 2, 128, 32>}, {pipeline_mode = #tpu.pipeline_mode<synchronous>, transform_indices = @transform_10, window_bounds = array<i64: 2, 8, 128>}, {pipeline_mode = #tpu.pipeline_mode<synchronous>, transform_indices = @transform_11, window_bounds = array<i64: 1, 32, 96>}, {pipeline_mode = #tpu.pipeline_mode<synchronous>, transform_indices = @transform_12, window_bounds = array<i64: 1, 32, 32>}, {pipeline_mode = #tpu.pipeline_mode<synchronous>, transform_indices = @transform_13, window_bounds = array<i64: 1, 32, 128>}, {pipeline_mode = #tpu.pipeline_mode<synchronous>, transform_indices = @transform_14, window_bounds = array<i64: 1, 128, 32>}, {pipeline_mode = #tpu.pipeline_mode<synchronous>, transform_indices = @transform_15, window_bounds = array<i64: 1, 8, 128>}, {pipeline_mode = #tpu.pipeline_mode<synchronous>, transform_indices = @transform_16, window_bounds = array<i64: 32, 48>}, {transform_indices = @transform_17, window_bounds = array<i64: 1, 16, 48>}, {transform_indices = @transform_18, window_bounds = array<i64: 1, 1, 2>}]} {
    %c0 = arith.constant 0 : index
    %c0_0 = arith.constant 0 : index
    %c0_1 = arith.constant 0 : index
    %0 = vector.load %arg1[%c0, %c0_0, %c0_1] : memref<1x17x48xf32, #tpu.memory_space<vmem>>, vector<1x17x48xf32>
    %1 = vector.shape_cast %0 : vector<1x17x48xf32> to vector<17x48xf32>
    %c0_2 = arith.constant 0 : index
    %c0_3 = arith.constant 0 : index
    %c0_4 = arith.constant 0 : index
    %2 = vector.load %arg2[%c0_2, %c0_3, %c0_4] : memref<1x17x1xf32, #tpu.memory_space<vmem>>, vector<1x17x1xf32>
    %3 = vector.shape_cast %2 : vector<1x17x1xf32> to vector<17x1xf32>
    %c0_5 = arith.constant 0 : index
    %c0_6 = arith.constant 0 : index
    %4 = vector.load %arg4[%c0_5, %c0_6] : memref<6x128xf32, #tpu.memory_space<vmem>>, vector<1x32xf32>
    %c1 = arith.constant 1 : index
    %c0_7 = arith.constant 0 : index
    %5 = vector.load %arg4[%c1, %c0_7] : memref<6x128xf32, #tpu.memory_space<vmem>>, vector<1x32xf32>
    %c2 = arith.constant 2 : index
    %c0_8 = arith.constant 0 : index
    %6 = vector.load %arg4[%c2, %c0_8] : memref<6x128xf32, #tpu.memory_space<vmem>>, vector<1x32xf32>
    %c3 = arith.constant 3 : index
    %c0_9 = arith.constant 0 : index
    %7 = vector.load %arg4[%c3, %c0_9] : memref<6x128xf32, #tpu.memory_space<vmem>>, vector<1x32xf32>
    %c4 = arith.constant 4 : index
    %c0_10 = arith.constant 0 : index
    %8 = vector.load %arg4[%c4, %c0_10] : memref<6x128xf32, #tpu.memory_space<vmem>>, vector<1x32xf32>
    %c5 = arith.constant 5 : index
    %c0_11 = arith.constant 0 : index
    %9 = vector.load %arg4[%c5, %c0_11] : memref<6x128xf32, #tpu.memory_space<vmem>>, vector<1x48xf32>
    %10 = arith.truncf %1 : vector<17x48xf32> to vector<17x48xbf16>
    %c0_12 = arith.constant 0 : index
    %c0_13 = arith.constant 0 : index
    %11 = vector.load %arg3[%c0_12, %c0_13] : memref<48x32xbf16, #tpu.memory_space<vmem>>, vector<48x32xbf16>
    %cst = arith.constant dense<0.000000e+00> : vector<17x32xf32>
    %12 = tpu.matmul %10, %11, %cst {dimension_numbers = #tpu.dot_dimension_numbers<[1], [0], [0], [1], [0, 0, 1, 1], [], []>} : vector<17x48xbf16>, vector<48x32xbf16>, vector<17x32xf32> -> vector<17x32xf32>
    %13 = vector.broadcast %4 : vector<1x32xf32> to vector<17x32xf32>
    %14 = arith.addf %12, %13 : vector<17x32xf32>
    %cst_14 = arith.constant 1.000000e+00 : f32
    %15 = vector.broadcast %cst_14 : f32 to vector<17x1xf32>
    %16 = arith.subf %15, %3 : vector<17x1xf32>
    %17 = vector.broadcast %16 : vector<17x1xf32> to vector<17x32xf32>
    %18 = arith.mulf %14, %17 : vector<17x32xf32>
    %c0_15 = arith.constant 0 : index
    %c0_16 = arith.constant 0 : index
    %19 = vector.load %arg5[%c0_15, %c0_16] : memref<17x32xf32, #tpu.memory_space<vmem>>, vector<17x32xf32>
    %20 = vector.broadcast %3 : vector<17x1xf32> to vector<17x32xf32>
    %21 = arith.mulf %19, %20 : vector<17x32xf32>
    %22 = arith.addf %18, %21 : vector<17x32xf32>
    %c0_17 = arith.constant 0 : index
    %c0_18 = arith.constant 0 : index
    %23 = vector.load %arg6[%c0_17, %c0_18] : memref<17x32xf32, #tpu.memory_space<vmem>>, vector<17x32xf32>
    %24 = arith.addf %22, %23 : vector<17x32xf32>
    %c0_19 = arith.constant 0 : index
    %c0_20 = arith.constant 0 : index
    %c0_21 = arith.constant 0 : index
    %25 = vector.load %arg7[%c0_19, %c0_20, %c0_21] : memref<2x32x96xbf16, #tpu.memory_space<vmem>>, vector<1x32x96xbf16>
    %26 = vector.shape_cast %25 : vector<1x32x96xbf16> to vector<32x96xbf16>
    %c0_22 = arith.constant 0 : index
    %c0_23 = arith.constant 0 : index
    %c0_24 = arith.constant 0 : index
    %27 = vector.load %arg8[%c0_22, %c0_23, %c0_24] : memref<2x32x32xbf16, #tpu.memory_space<vmem>>, vector<1x32x32xbf16>
    %28 = vector.shape_cast %27 : vector<1x32x32xbf16> to vector<32x32xbf16>
    %c0_25 = arith.constant 0 : index
    %c0_26 = arith.constant 0 : index
    %c0_27 = arith.constant 0 : index
    %29 = vector.load %arg9[%c0_25, %c0_26, %c0_27] : memref<2x32x128xbf16, #tpu.memory_space<vmem>>, vector<1x32x128xbf16>
    %30 = vector.shape_cast %29 : vector<1x32x128xbf16> to vector<32x128xbf16>
    %c0_28 = arith.constant 0 : index
    %c0_29 = arith.constant 0 : index
    %c0_30 = arith.constant 0 : index
    %31 = vector.load %arg10[%c0_28, %c0_29, %c0_30] : memref<2x128x32xbf16, #tpu.memory_space<vmem>>, vector<1x128x32xbf16>
    %32 = vector.shape_cast %31 : vector<1x128x32xbf16> to vector<128x32xbf16>
    %c0_31 = arith.constant 0 : index
    %c0_32 = arith.constant 0 : index
    %c0_33 = arith.constant 0 : index
    %33 = vector.load %arg11[%c0_31, %c0_32, %c0_33] : memref<2x8x128xf32, #tpu.memory_space<vmem>>, vector<1x8x128xf32>
    %34 = vector.shape_cast %33 : vector<1x8x128xf32> to vector<8x128xf32>
    %35 = vector.extract_strided_slice %34 {offsets = [0, 0], sizes = [1, 32], strides = [1, 1]} : vector<8x128xf32> to vector<1x32xf32>
    %36 = vector.extract_strided_slice %34 {offsets = [1, 0], sizes = [1, 32], strides = [1, 1]} : vector<8x128xf32> to vector<1x32xf32>
    %37 = vector.extract_strided_slice %34 {offsets = [2, 0], sizes = [1, 32], strides = [1, 1]} : vector<8x128xf32> to vector<1x32xf32>
    %38 = vector.extract_strided_slice %34 {offsets = [3, 0], sizes = [1, 32], strides = [1, 1]} : vector<8x128xf32> to vector<1x32xf32>
    %39 = vector.extract_strided_slice %34 {offsets = [4, 0], sizes = [1, 32], strides = [1, 1]} : vector<8x128xf32> to vector<1x32xf32>
    %40 = vector.extract_strided_slice %34 {offsets = [5, 0], sizes = [1, 32], strides = [1, 1]} : vector<8x128xf32> to vector<1x32xf32>
    %41 = vector.extract_strided_slice %34 {offsets = [6, 0], sizes = [1, 96], strides = [1, 1]} : vector<8x128xf32> to vector<1x96xf32>
    %42 = vector.extract_strided_slice %34 {offsets = [7, 0], sizes = [1, 128], strides = [1, 1]} : vector<8x128xf32> to vector<1x128xf32>
    %cst_34 = arith.constant dense<0.000000e+00> : vector<17xf32>
    %43 = vector.multi_reduction <add>, %24, %cst_34 [1] : vector<17x32xf32> to vector<17xf32>
    %44 = vector.shape_cast %43 : vector<17xf32> to vector<17x1xf32>
    %cst_35 = arith.constant 3.200000e+01 : f32
    %45 = vector.broadcast %cst_35 : f32 to vector<17x1xf32>
    %46 = arith.divf %44, %45 : vector<17x1xf32>
    %47 = vector.broadcast %46 : vector<17x1xf32> to vector<17x32xf32>
    %48 = arith.subf %24, %47 : vector<17x32xf32>
    %49 = arith.mulf %48, %48 : vector<17x32xf32>
    %cst_36 = arith.constant dense<0.000000e+00> : vector<17xf32>
    %50 = vector.multi_reduction <add>, %49, %cst_36 [1] : vector<17x32xf32> to vector<17xf32>
    %51 = vector.shape_cast %50 : vector<17xf32> to vector<17x1xf32>
    %cst_37 = arith.constant 3.200000e+01 : f32
    %52 = vector.broadcast %cst_37 : f32 to vector<17x1xf32>
    %53 = arith.divf %51, %52 : vector<17x1xf32>
    %54 = vector.broadcast %46 : vector<17x1xf32> to vector<17x32xf32>
    %55 = arith.subf %24, %54 : vector<17x32xf32>
    %cst_38 = arith.constant 9.99999974E-6 : f32
    %56 = vector.broadcast %cst_38 : f32 to vector<17x1xf32>
    %57 = arith.addf %53, %56 : vector<17x1xf32>
    %58 = math.rsqrt %57 : vector<17x1xf32>
    %59 = vector.broadcast %58 : vector<17x1xf32> to vector<17x32xf32>
    %60 = arith.mulf %55, %59 : vector<17x32xf32>
    %61 = vector.broadcast %35 : vector<1x32xf32> to vector<17x32xf32>
    %62 = arith.mulf %60, %61 : vector<17x32xf32>
    %63 = vector.broadcast %36 : vector<1x32xf32> to vector<17x32xf32>
    %64 = arith.addf %62, %63 : vector<17x32xf32>
    %65 = arith.truncf %64 : vector<17x32xf32> to vector<17x32xbf16>
    %cst_39 = arith.constant dense<0.000000e+00> : vector<17x96xf32>
    %66 = tpu.matmul %65, %26, %cst_39 {dimension_numbers = #tpu.dot_dimension_numbers<[1], [0], [0], [1], [0, 0, 1, 1], [], []>} : vector<17x32xbf16>, vector<32x96xbf16>, vector<17x96xf32> -> vector<17x96xf32>
    %67 = vector.broadcast %41 : vector<1x96xf32> to vector<17x96xf32>
    %68 = arith.addf %66, %67 : vector<17x96xf32>
    %69 = vector.extract_strided_slice %68 {offsets = [0, 0], sizes = [17, 8], strides = [1, 1]} : vector<17x96xf32> to vector<17x8xf32>
    %70 = vector.extract_strided_slice %68 {offsets = [0, 32], sizes = [17, 8], strides = [1, 1]} : vector<17x96xf32> to vector<17x8xf32>
    %71 = vector.extract_strided_slice %68 {offsets = [0, 64], sizes = [17, 8], strides = [1, 1]} : vector<17x96xf32> to vector<17x8xf32>
    %cst_40 = arith.constant dense<0.000000e+00> : vector<17x17xf32>
    %72 = tpu.matmul %69, %70, %cst_40 {dimension_numbers = #tpu.dot_dimension_numbers<[1], [1], [0], [0], [0, 0, 1, 0], [], []>} : vector<17x8xf32>, vector<17x8xf32>, vector<17x17xf32> -> vector<17x17xf32>
    %cst_41 = arith.constant dense<0xFF800000> : vector<17xf32>
    %73 = vector.multi_reduction <maximumf>, %72, %cst_41 [1] : vector<17x17xf32> to vector<17xf32>
    %74 = vector.shape_cast %73 : vector<17xf32> to vector<17x1xf32>
    %75 = vector.broadcast %74 : vector<17x1xf32> to vector<17x17xf32>
    %76 = arith.subf %72, %75 : vector<17x17xf32>
    %77 = math.exp %76 : vector<17x17xf32>
    %cst_42 = arith.constant dense<0.000000e+00> : vector<17xf32>
    %78 = vector.multi_reduction <add>, %77, %cst_42 [1] : vector<17x17xf32> to vector<17xf32>
    %79 = vector.shape_cast %78 : vector<17xf32> to vector<17x1xf32>
    %80 = tpu.reciprocal %79 {approx = true} : vector<17x1xf32> -> vector<17x1xf32>
    %81 = vector.broadcast %80 : vector<17x1xf32> to vector<17x17xf32>
    %82 = arith.mulf %77, %81 : vector<17x17xf32>
    %cst_43 = arith.constant dense<0.000000e+00> : vector<17x8xf32>
    %83 = tpu.matmul %82, %71, %cst_43 {dimension_numbers = #tpu.dot_dimension_numbers<[1], [0], [0], [1], [0, 0, 1, 1], [], []>} : vector<17x17xf32>, vector<17x8xf32>, vector<17x8xf32> -> vector<17x8xf32>
    %84 = vector.extract_strided_slice %68 {offsets = [0, 8], sizes = [17, 8], strides = [1, 1]} : vector<17x96xf32> to vector<17x8xf32>
    %85 = vector.extract_strided_slice %68 {offsets = [0, 40], sizes = [17, 8], strides = [1, 1]} : vector<17x96xf32> to vector<17x8xf32>
    %86 = vector.extract_strided_slice %68 {offsets = [0, 72], sizes = [17, 8], strides = [1, 1]} : vector<17x96xf32> to vector<17x8xf32>
    %cst_44 = arith.constant dense<0.000000e+00> : vector<17x17xf32>
    %87 = tpu.matmul %84, %85, %cst_44 {dimension_numbers = #tpu.dot_dimension_numbers<[1], [1], [0], [0], [0, 0, 1, 0], [], []>} : vector<17x8xf32>, vector<17x8xf32>, vector<17x17xf32> -> vector<17x17xf32>
    %cst_45 = arith.constant dense<0xFF800000> : vector<17xf32>
    %88 = vector.multi_reduction <maximumf>, %87, %cst_45 [1] : vector<17x17xf32> to vector<17xf32>
    %89 = vector.shape_cast %88 : vector<17xf32> to vector<17x1xf32>
    %90 = vector.broadcast %89 : vector<17x1xf32> to vector<17x17xf32>
    %91 = arith.subf %87, %90 : vector<17x17xf32>
    %92 = math.exp %91 : vector<17x17xf32>
    %cst_46 = arith.constant dense<0.000000e+00> : vector<17xf32>
    %93 = vector.multi_reduction <add>, %92, %cst_46 [1] : vector<17x17xf32> to vector<17xf32>
    %94 = vector.shape_cast %93 : vector<17xf32> to vector<17x1xf32>
    %95 = tpu.reciprocal %94 {approx = true} : vector<17x1xf32> -> vector<17x1xf32>
    %96 = vector.broadcast %95 : vector<17x1xf32> to vector<17x17xf32>
    %97 = arith.mulf %92, %96 : vector<17x17xf32>
    %cst_47 = arith.constant dense<0.000000e+00> : vector<17x8xf32>
    %98 = tpu.matmul %97, %86, %cst_47 {dimension_numbers = #tpu.dot_dimension_numbers<[1], [0], [0], [1], [0, 0, 1, 1], [], []>} : vector<17x17xf32>, vector<17x8xf32>, vector<17x8xf32> -> vector<17x8xf32>
    %99 = vector.extract_strided_slice %68 {offsets = [0, 16], sizes = [17, 8], strides = [1, 1]} : vector<17x96xf32> to vector<17x8xf32>
    %100 = vector.extract_strided_slice %68 {offsets = [0, 48], sizes = [17, 8], strides = [1, 1]} : vector<17x96xf32> to vector<17x8xf32>
    %101 = vector.extract_strided_slice %68 {offsets = [0, 80], sizes = [17, 8], strides = [1, 1]} : vector<17x96xf32> to vector<17x8xf32>
    %cst_48 = arith.constant dense<0.000000e+00> : vector<17x17xf32>
    %102 = tpu.matmul %99, %100, %cst_48 {dimension_numbers = #tpu.dot_dimension_numbers<[1], [1], [0], [0], [0, 0, 1, 0], [], []>} : vector<17x8xf32>, vector<17x8xf32>, vector<17x17xf32> -> vector<17x17xf32>
    %cst_49 = arith.constant dense<0xFF800000> : vector<17xf32>
    %103 = vector.multi_reduction <maximumf>, %102, %cst_49 [1] : vector<17x17xf32> to vector<17xf32>
    %104 = vector.shape_cast %103 : vector<17xf32> to vector<17x1xf32>
    %105 = vector.broadcast %104 : vector<17x1xf32> to vector<17x17xf32>
    %106 = arith.subf %102, %105 : vector<17x17xf32>
    %107 = math.exp %106 : vector<17x17xf32>
    %cst_50 = arith.constant dense<0.000000e+00> : vector<17xf32>
    %108 = vector.multi_reduction <add>, %107, %cst_50 [1] : vector<17x17xf32> to vector<17xf32>
    %109 = vector.shape_cast %108 : vector<17xf32> to vector<17x1xf32>
    %110 = tpu.reciprocal %109 {approx = true} : vector<17x1xf32> -> vector<17x1xf32>
    %111 = vector.broadcast %110 : vector<17x1xf32> to vector<17x17xf32>
    %112 = arith.mulf %107, %111 : vector<17x17xf32>
    %cst_51 = arith.constant dense<0.000000e+00> : vector<17x8xf32>
    %113 = tpu.matmul %112, %101, %cst_51 {dimension_numbers = #tpu.dot_dimension_numbers<[1], [0], [0], [1], [0, 0, 1, 1], [], []>} : vector<17x17xf32>, vector<17x8xf32>, vector<17x8xf32> -> vector<17x8xf32>
    %114 = vector.extract_strided_slice %68 {offsets = [0, 24], sizes = [17, 8], strides = [1, 1]} : vector<17x96xf32> to vector<17x8xf32>
    %115 = vector.extract_strided_slice %68 {offsets = [0, 56], sizes = [17, 8], strides = [1, 1]} : vector<17x96xf32> to vector<17x8xf32>
    %116 = vector.extract_strided_slice %68 {offsets = [0, 88], sizes = [17, 8], strides = [1, 1]} : vector<17x96xf32> to vector<17x8xf32>
    %cst_52 = arith.constant dense<0.000000e+00> : vector<17x17xf32>
    %117 = tpu.matmul %114, %115, %cst_52 {dimension_numbers = #tpu.dot_dimension_numbers<[1], [1], [0], [0], [0, 0, 1, 0], [], []>} : vector<17x8xf32>, vector<17x8xf32>, vector<17x17xf32> -> vector<17x17xf32>
    %cst_53 = arith.constant dense<0xFF800000> : vector<17xf32>
    %118 = vector.multi_reduction <maximumf>, %117, %cst_53 [1] : vector<17x17xf32> to vector<17xf32>
    %119 = vector.shape_cast %118 : vector<17xf32> to vector<17x1xf32>
    %120 = vector.broadcast %119 : vector<17x1xf32> to vector<17x17xf32>
    %121 = arith.subf %117, %120 : vector<17x17xf32>
    %122 = math.exp %121 : vector<17x17xf32>
    %cst_54 = arith.constant dense<0.000000e+00> : vector<17xf32>
    %123 = vector.multi_reduction <add>, %122, %cst_54 [1] : vector<17x17xf32> to vector<17xf32>
    %124 = vector.shape_cast %123 : vector<17xf32> to vector<17x1xf32>
    %125 = tpu.reciprocal %124 {approx = true} : vector<17x1xf32> -> vector<17x1xf32>
    %126 = vector.broadcast %125 : vector<17x1xf32> to vector<17x17xf32>
    %127 = arith.mulf %122, %126 : vector<17x17xf32>
    %cst_55 = arith.constant dense<0.000000e+00> : vector<17x8xf32>
    %128 = tpu.matmul %127, %116, %cst_55 {dimension_numbers = #tpu.dot_dimension_numbers<[1], [0], [0], [1], [0, 0, 1, 1], [], []>} : vector<17x17xf32>, vector<17x8xf32>, vector<17x8xf32> -> vector<17x8xf32>
    %129 = tpu.concatenate %83, %98, %113, %128 in 1 : vector<17x8xf32>, vector<17x8xf32>, vector<17x8xf32>, vector<17x8xf32> -> vector<17x32xf32>
    %130 = arith.truncf %129 : vector<17x32xf32> to vector<17x32xbf16>
    %cst_56 = arith.constant dense<0.000000e+00> : vector<17x32xf32>
    %131 = tpu.matmul %130, %28, %cst_56 {dimension_numbers = #tpu.dot_dimension_numbers<[1], [0], [0], [1], [0, 0, 1, 1], [], []>} : vector<17x32xbf16>, vector<32x32xbf16>, vector<17x32xf32> -> vector<17x32xf32>
    %132 = arith.addf %24, %131 : vector<17x32xf32>
    %133 = vector.broadcast %39 : vector<1x32xf32> to vector<17x32xf32>
    %134 = arith.addf %132, %133 : vector<17x32xf32>
    %cst_57 = arith.constant dense<0.000000e+00> : vector<17xf32>
    %135 = vector.multi_reduction <add>, %134, %cst_57 [1] : vector<17x32xf32> to vector<17xf32>
    %136 = vector.shape_cast %135 : vector<17xf32> to vector<17x1xf32>
    %cst_58 = arith.constant 3.200000e+01 : f32
    %137 = vector.broadcast %cst_58 : f32 to vector<17x1xf32>
    %138 = arith.divf %136, %137 : vector<17x1xf32>
    %139 = vector.broadcast %138 : vector<17x1xf32> to vector<17x32xf32>
    %140 = arith.subf %134, %139 : vector<17x32xf32>
    %141 = arith.mulf %140, %140 : vector<17x32xf32>
    %cst_59 = arith.constant dense<0.000000e+00> : vector<17xf32>
    %142 = vector.multi_reduction <add>, %141, %cst_59 [1] : vector<17x32xf32> to vector<17xf32>
    %143 = vector.shape_cast %142 : vector<17xf32> to vector<17x1xf32>
    %cst_60 = arith.constant 3.200000e+01 : f32
    %144 = vector.broadcast %cst_60 : f32 to vector<17x1xf32>
    %145 = arith.divf %143, %144 : vector<17x1xf32>
    %146 = vector.broadcast %138 : vector<17x1xf32> to vector<17x32xf32>
    %147 = arith.subf %134, %146 : vector<17x32xf32>
    %cst_61 = arith.constant 9.99999974E-6 : f32
    %148 = vector.broadcast %cst_61 : f32 to vector<17x1xf32>
    %149 = arith.addf %145, %148 : vector<17x1xf32>
    %150 = math.rsqrt %149 : vector<17x1xf32>
    %151 = vector.broadcast %150 : vector<17x1xf32> to vector<17x32xf32>
    %152 = arith.mulf %147, %151 : vector<17x32xf32>
    %153 = vector.broadcast %37 : vector<1x32xf32> to vector<17x32xf32>
    %154 = arith.mulf %152, %153 : vector<17x32xf32>
    %155 = vector.broadcast %38 : vector<1x32xf32> to vector<17x32xf32>
    %156 = arith.addf %154, %155 : vector<17x32xf32>
    %157 = arith.truncf %156 : vector<17x32xf32> to vector<17x32xbf16>
    %cst_62 = arith.constant dense<0.000000e+00> : vector<17x128xf32>
    %158 = tpu.matmul %157, %30, %cst_62 {dimension_numbers = #tpu.dot_dimension_numbers<[1], [0], [0], [1], [0, 0, 1, 1], [], []>} : vector<17x32xbf16>, vector<32x128xbf16>, vector<17x128xf32> -> vector<17x128xf32>
    %159 = vector.broadcast %42 : vector<1x128xf32> to vector<17x128xf32>
    %160 = arith.addf %158, %159 : vector<17x128xf32>
    %161 = arith.mulf %160, %160 : vector<17x128xf32>
    %162 = arith.mulf %160, %161 : vector<17x128xf32>
    %cst_63 = arith.constant 4.471500e-02 : f32
    %163 = vector.broadcast %cst_63 : f32 to vector<17x128xf32>
    %164 = arith.mulf %163, %162 : vector<17x128xf32>
    %165 = arith.addf %160, %164 : vector<17x128xf32>
    %cst_64 = arith.constant 0.797884583 : f32
    %166 = vector.broadcast %cst_64 : f32 to vector<17x128xf32>
    %167 = arith.mulf %166, %165 : vector<17x128xf32>
    %168 = math.tanh %167 : vector<17x128xf32>
    %cst_65 = arith.constant 1.000000e+00 : f32
    %169 = vector.broadcast %cst_65 : f32 to vector<17x128xf32>
    %170 = arith.addf %169, %168 : vector<17x128xf32>
    %cst_66 = arith.constant 5.000000e-01 : f32
    %171 = vector.broadcast %cst_66 : f32 to vector<17x128xf32>
    %172 = arith.mulf %171, %170 : vector<17x128xf32>
    %173 = arith.mulf %160, %172 : vector<17x128xf32>
    %174 = arith.truncf %173 : vector<17x128xf32> to vector<17x128xbf16>
    %cst_67 = arith.constant dense<0.000000e+00> : vector<17x32xf32>
    %175 = tpu.matmul %174, %32, %cst_67 {dimension_numbers = #tpu.dot_dimension_numbers<[1], [0], [0], [1], [0, 0, 1, 1], [], []>} : vector<17x128xbf16>, vector<128x32xbf16>, vector<17x32xf32> -> vector<17x32xf32>
    %176 = vector.broadcast %40 : vector<1x32xf32> to vector<17x32xf32>
    %177 = arith.addf %175, %176 : vector<17x32xf32>
    %178 = arith.addf %134, %177 : vector<17x32xf32>
    %c1_68 = arith.constant 1 : index
    %c0_69 = arith.constant 0 : index
    %c0_70 = arith.constant 0 : index
    %179 = vector.load %arg7[%c1_68, %c0_69, %c0_70] : memref<2x32x96xbf16, #tpu.memory_space<vmem>>, vector<1x32x96xbf16>
    %180 = vector.shape_cast %179 : vector<1x32x96xbf16> to vector<32x96xbf16>
    %c1_71 = arith.constant 1 : index
    %c0_72 = arith.constant 0 : index
    %c0_73 = arith.constant 0 : index
    %181 = vector.load %arg8[%c1_71, %c0_72, %c0_73] : memref<2x32x32xbf16, #tpu.memory_space<vmem>>, vector<1x32x32xbf16>
    %182 = vector.shape_cast %181 : vector<1x32x32xbf16> to vector<32x32xbf16>
    %c1_74 = arith.constant 1 : index
    %c0_75 = arith.constant 0 : index
    %c0_76 = arith.constant 0 : index
    %183 = vector.load %arg9[%c1_74, %c0_75, %c0_76] : memref<2x32x128xbf16, #tpu.memory_space<vmem>>, vector<1x32x128xbf16>
    %184 = vector.shape_cast %183 : vector<1x32x128xbf16> to vector<32x128xbf16>
    %c1_77 = arith.constant 1 : index
    %c0_78 = arith.constant 0 : index
    %c0_79 = arith.constant 0 : index
    %185 = vector.load %arg10[%c1_77, %c0_78, %c0_79] : memref<2x128x32xbf16, #tpu.memory_space<vmem>>, vector<1x128x32xbf16>
    %186 = vector.shape_cast %185 : vector<1x128x32xbf16> to vector<128x32xbf16>
    %c1_80 = arith.constant 1 : index
    %c0_81 = arith.constant 0 : index
    %c0_82 = arith.constant 0 : index
    %187 = vector.load %arg11[%c1_80, %c0_81, %c0_82] : memref<2x8x128xf32, #tpu.memory_space<vmem>>, vector<1x8x128xf32>
    %188 = vector.shape_cast %187 : vector<1x8x128xf32> to vector<8x128xf32>
    %189 = vector.extract_strided_slice %188 {offsets = [0, 0], sizes = [1, 32], strides = [1, 1]} : vector<8x128xf32> to vector<1x32xf32>
    %190 = vector.extract_strided_slice %188 {offsets = [1, 0], sizes = [1, 32], strides = [1, 1]} : vector<8x128xf32> to vector<1x32xf32>
    %191 = vector.extract_strided_slice %188 {offsets = [2, 0], sizes = [1, 32], strides = [1, 1]} : vector<8x128xf32> to vector<1x32xf32>
    %192 = vector.extract_strided_slice %188 {offsets = [3, 0], sizes = [1, 32], strides = [1, 1]} : vector<8x128xf32> to vector<1x32xf32>
    %193 = vector.extract_strided_slice %188 {offsets = [4, 0], sizes = [1, 32], strides = [1, 1]} : vector<8x128xf32> to vector<1x32xf32>
    %194 = vector.extract_strided_slice %188 {offsets = [5, 0], sizes = [1, 32], strides = [1, 1]} : vector<8x128xf32> to vector<1x32xf32>
    %195 = vector.extract_strided_slice %188 {offsets = [6, 0], sizes = [1, 96], strides = [1, 1]} : vector<8x128xf32> to vector<1x96xf32>
    %196 = vector.extract_strided_slice %188 {offsets = [7, 0], sizes = [1, 128], strides = [1, 1]} : vector<8x128xf32> to vector<1x128xf32>
    %cst_83 = arith.constant dense<0.000000e+00> : vector<17xf32>
    %197 = vector.multi_reduction <add>, %178, %cst_83 [1] : vector<17x32xf32> to vector<17xf32>
    %198 = vector.shape_cast %197 : vector<17xf32> to vector<17x1xf32>
    %cst_84 = arith.constant 3.200000e+01 : f32
    %199 = vector.broadcast %cst_84 : f32 to vector<17x1xf32>
    %200 = arith.divf %198, %199 : vector<17x1xf32>
    %201 = vector.broadcast %200 : vector<17x1xf32> to vector<17x32xf32>
    %202 = arith.subf %178, %201 : vector<17x32xf32>
    %203 = arith.mulf %202, %202 : vector<17x32xf32>
    %cst_85 = arith.constant dense<0.000000e+00> : vector<17xf32>
    %204 = vector.multi_reduction <add>, %203, %cst_85 [1] : vector<17x32xf32> to vector<17xf32>
    %205 = vector.shape_cast %204 : vector<17xf32> to vector<17x1xf32>
    %cst_86 = arith.constant 3.200000e+01 : f32
    %206 = vector.broadcast %cst_86 : f32 to vector<17x1xf32>
    %207 = arith.divf %205, %206 : vector<17x1xf32>
    %208 = vector.broadcast %200 : vector<17x1xf32> to vector<17x32xf32>
    %209 = arith.subf %178, %208 : vector<17x32xf32>
    %cst_87 = arith.constant 9.99999974E-6 : f32
    %210 = vector.broadcast %cst_87 : f32 to vector<17x1xf32>
    %211 = arith.addf %207, %210 : vector<17x1xf32>
    %212 = math.rsqrt %211 : vector<17x1xf32>
    %213 = vector.broadcast %212 : vector<17x1xf32> to vector<17x32xf32>
    %214 = arith.mulf %209, %213 : vector<17x32xf32>
    %215 = vector.broadcast %189 : vector<1x32xf32> to vector<17x32xf32>
    %216 = arith.mulf %214, %215 : vector<17x32xf32>
    %217 = vector.broadcast %190 : vector<1x32xf32> to vector<17x32xf32>
    %218 = arith.addf %216, %217 : vector<17x32xf32>
    %219 = arith.truncf %218 : vector<17x32xf32> to vector<17x32xbf16>
    %cst_88 = arith.constant dense<0.000000e+00> : vector<17x96xf32>
    %220 = tpu.matmul %219, %180, %cst_88 {dimension_numbers = #tpu.dot_dimension_numbers<[1], [0], [0], [1], [0, 0, 1, 1], [], []>} : vector<17x32xbf16>, vector<32x96xbf16>, vector<17x96xf32> -> vector<17x96xf32>
    %221 = vector.broadcast %195 : vector<1x96xf32> to vector<17x96xf32>
    %222 = arith.addf %220, %221 : vector<17x96xf32>
    %223 = vector.extract_strided_slice %222 {offsets = [0, 0], sizes = [17, 8], strides = [1, 1]} : vector<17x96xf32> to vector<17x8xf32>
    %224 = vector.extract_strided_slice %222 {offsets = [0, 32], sizes = [17, 8], strides = [1, 1]} : vector<17x96xf32> to vector<17x8xf32>
    %225 = vector.extract_strided_slice %222 {offsets = [0, 64], sizes = [17, 8], strides = [1, 1]} : vector<17x96xf32> to vector<17x8xf32>
    %cst_89 = arith.constant dense<0.000000e+00> : vector<17x17xf32>
    %226 = tpu.matmul %223, %224, %cst_89 {dimension_numbers = #tpu.dot_dimension_numbers<[1], [1], [0], [0], [0, 0, 1, 0], [], []>} : vector<17x8xf32>, vector<17x8xf32>, vector<17x17xf32> -> vector<17x17xf32>
    %cst_90 = arith.constant dense<0xFF800000> : vector<17xf32>
    %227 = vector.multi_reduction <maximumf>, %226, %cst_90 [1] : vector<17x17xf32> to vector<17xf32>
    %228 = vector.shape_cast %227 : vector<17xf32> to vector<17x1xf32>
    %229 = vector.broadcast %228 : vector<17x1xf32> to vector<17x17xf32>
    %230 = arith.subf %226, %229 : vector<17x17xf32>
    %231 = math.exp %230 : vector<17x17xf32>
    %cst_91 = arith.constant dense<0.000000e+00> : vector<17xf32>
    %232 = vector.multi_reduction <add>, %231, %cst_91 [1] : vector<17x17xf32> to vector<17xf32>
    %233 = vector.shape_cast %232 : vector<17xf32> to vector<17x1xf32>
    %234 = tpu.reciprocal %233 {approx = true} : vector<17x1xf32> -> vector<17x1xf32>
    %235 = vector.broadcast %234 : vector<17x1xf32> to vector<17x17xf32>
    %236 = arith.mulf %231, %235 : vector<17x17xf32>
    %cst_92 = arith.constant dense<0.000000e+00> : vector<17x8xf32>
    %237 = tpu.matmul %236, %225, %cst_92 {dimension_numbers = #tpu.dot_dimension_numbers<[1], [0], [0], [1], [0, 0, 1, 1], [], []>} : vector<17x17xf32>, vector<17x8xf32>, vector<17x8xf32> -> vector<17x8xf32>
    %238 = vector.extract_strided_slice %222 {offsets = [0, 8], sizes = [17, 8], strides = [1, 1]} : vector<17x96xf32> to vector<17x8xf32>
    %239 = vector.extract_strided_slice %222 {offsets = [0, 40], sizes = [17, 8], strides = [1, 1]} : vector<17x96xf32> to vector<17x8xf32>
    %240 = vector.extract_strided_slice %222 {offsets = [0, 72], sizes = [17, 8], strides = [1, 1]} : vector<17x96xf32> to vector<17x8xf32>
    %cst_93 = arith.constant dense<0.000000e+00> : vector<17x17xf32>
    %241 = tpu.matmul %238, %239, %cst_93 {dimension_numbers = #tpu.dot_dimension_numbers<[1], [1], [0], [0], [0, 0, 1, 0], [], []>} : vector<17x8xf32>, vector<17x8xf32>, vector<17x17xf32> -> vector<17x17xf32>
    %cst_94 = arith.constant dense<0xFF800000> : vector<17xf32>
    %242 = vector.multi_reduction <maximumf>, %241, %cst_94 [1] : vector<17x17xf32> to vector<17xf32>
    %243 = vector.shape_cast %242 : vector<17xf32> to vector<17x1xf32>
    %244 = vector.broadcast %243 : vector<17x1xf32> to vector<17x17xf32>
    %245 = arith.subf %241, %244 : vector<17x17xf32>
    %246 = math.exp %245 : vector<17x17xf32>
    %cst_95 = arith.constant dense<0.000000e+00> : vector<17xf32>
    %247 = vector.multi_reduction <add>, %246, %cst_95 [1] : vector<17x17xf32> to vector<17xf32>
    %248 = vector.shape_cast %247 : vector<17xf32> to vector<17x1xf32>
    %249 = tpu.reciprocal %248 {approx = true} : vector<17x1xf32> -> vector<17x1xf32>
    %250 = vector.broadcast %249 : vector<17x1xf32> to vector<17x17xf32>
    %251 = arith.mulf %246, %250 : vector<17x17xf32>
    %cst_96 = arith.constant dense<0.000000e+00> : vector<17x8xf32>
    %252 = tpu.matmul %251, %240, %cst_96 {dimension_numbers = #tpu.dot_dimension_numbers<[1], [0], [0], [1], [0, 0, 1, 1], [], []>} : vector<17x17xf32>, vector<17x8xf32>, vector<17x8xf32> -> vector<17x8xf32>
    %253 = vector.extract_strided_slice %222 {offsets = [0, 16], sizes = [17, 8], strides = [1, 1]} : vector<17x96xf32> to vector<17x8xf32>
    %254 = vector.extract_strided_slice %222 {offsets = [0, 48], sizes = [17, 8], strides = [1, 1]} : vector<17x96xf32> to vector<17x8xf32>
    %255 = vector.extract_strided_slice %222 {offsets = [0, 80], sizes = [17, 8], strides = [1, 1]} : vector<17x96xf32> to vector<17x8xf32>
    %cst_97 = arith.constant dense<0.000000e+00> : vector<17x17xf32>
    %256 = tpu.matmul %253, %254, %cst_97 {dimension_numbers = #tpu.dot_dimension_numbers<[1], [1], [0], [0], [0, 0, 1, 0], [], []>} : vector<17x8xf32>, vector<17x8xf32>, vector<17x17xf32> -> vector<17x17xf32>
    %cst_98 = arith.constant dense<0xFF800000> : vector<17xf32>
    %257 = vector.multi_reduction <maximumf>, %256, %cst_98 [1] : vector<17x17xf32> to vector<17xf32>
    %258 = vector.shape_cast %257 : vector<17xf32> to vector<17x1xf32>
    %259 = vector.broadcast %258 : vector<17x1xf32> to vector<17x17xf32>
    %260 = arith.subf %256, %259 : vector<17x17xf32>
    %261 = math.exp %260 : vector<17x17xf32>
    %cst_99 = arith.constant dense<0.000000e+00> : vector<17xf32>
    %262 = vector.multi_reduction <add>, %261, %cst_99 [1] : vector<17x17xf32> to vector<17xf32>
    %263 = vector.shape_cast %262 : vector<17xf32> to vector<17x1xf32>
    %264 = tpu.reciprocal %263 {approx = true} : vector<17x1xf32> -> vector<17x1xf32>
    %265 = vector.broadcast %264 : vector<17x1xf32> to vector<17x17xf32>
    %266 = arith.mulf %261, %265 : vector<17x17xf32>
    %cst_100 = arith.constant dense<0.000000e+00> : vector<17x8xf32>
    %267 = tpu.matmul %266, %255, %cst_100 {dimension_numbers = #tpu.dot_dimension_numbers<[1], [0], [0], [1], [0, 0, 1, 1], [], []>} : vector<17x17xf32>, vector<17x8xf32>, vector<17x8xf32> -> vector<17x8xf32>
    %268 = vector.extract_strided_slice %222 {offsets = [0, 24], sizes = [17, 8], strides = [1, 1]} : vector<17x96xf32> to vector<17x8xf32>
    %269 = vector.extract_strided_slice %222 {offsets = [0, 56], sizes = [17, 8], strides = [1, 1]} : vector<17x96xf32> to vector<17x8xf32>
    %270 = vector.extract_strided_slice %222 {offsets = [0, 88], sizes = [17, 8], strides = [1, 1]} : vector<17x96xf32> to vector<17x8xf32>
    %cst_101 = arith.constant dense<0.000000e+00> : vector<17x17xf32>
    %271 = tpu.matmul %268, %269, %cst_101 {dimension_numbers = #tpu.dot_dimension_numbers<[1], [1], [0], [0], [0, 0, 1, 0], [], []>} : vector<17x8xf32>, vector<17x8xf32>, vector<17x17xf32> -> vector<17x17xf32>
    %cst_102 = arith.constant dense<0xFF800000> : vector<17xf32>
    %272 = vector.multi_reduction <maximumf>, %271, %cst_102 [1] : vector<17x17xf32> to vector<17xf32>
    %273 = vector.shape_cast %272 : vector<17xf32> to vector<17x1xf32>
    %274 = vector.broadcast %273 : vector<17x1xf32> to vector<17x17xf32>
    %275 = arith.subf %271, %274 : vector<17x17xf32>
    %276 = math.exp %275 : vector<17x17xf32>
    %cst_103 = arith.constant dense<0.000000e+00> : vector<17xf32>
    %277 = vector.multi_reduction <add>, %276, %cst_103 [1] : vector<17x17xf32> to vector<17xf32>
    %278 = vector.shape_cast %277 : vector<17xf32> to vector<17x1xf32>
    %279 = tpu.reciprocal %278 {approx = true} : vector<17x1xf32> -> vector<17x1xf32>
    %280 = vector.broadcast %279 : vector<17x1xf32> to vector<17x17xf32>
    %281 = arith.mulf %276, %280 : vector<17x17xf32>
    %cst_104 = arith.constant dense<0.000000e+00> : vector<17x8xf32>
    %282 = tpu.matmul %281, %270, %cst_104 {dimension_numbers = #tpu.dot_dimension_numbers<[1], [0], [0], [1], [0, 0, 1, 1], [], []>} : vector<17x17xf32>, vector<17x8xf32>, vector<17x8xf32> -> vector<17x8xf32>
    %283 = tpu.concatenate %237, %252, %267, %282 in 1 : vector<17x8xf32>, vector<17x8xf32>, vector<17x8xf32>, vector<17x8xf32> -> vector<17x32xf32>
    %284 = arith.truncf %283 : vector<17x32xf32> to vector<17x32xbf16>
    %cst_105 = arith.constant dense<0.000000e+00> : vector<17x32xf32>
    %285 = tpu.matmul %284, %182, %cst_105 {dimension_numbers = #tpu.dot_dimension_numbers<[1], [0], [0], [1], [0, 0, 1, 1], [], []>} : vector<17x32xbf16>, vector<32x32xbf16>, vector<17x32xf32> -> vector<17x32xf32>
    %286 = arith.addf %178, %285 : vector<17x32xf32>
    %287 = vector.broadcast %193 : vector<1x32xf32> to vector<17x32xf32>
    %288 = arith.addf %286, %287 : vector<17x32xf32>
    %cst_106 = arith.constant dense<0.000000e+00> : vector<17xf32>
    %289 = vector.multi_reduction <add>, %288, %cst_106 [1] : vector<17x32xf32> to vector<17xf32>
    %290 = vector.shape_cast %289 : vector<17xf32> to vector<17x1xf32>
    %cst_107 = arith.constant 3.200000e+01 : f32
    %291 = vector.broadcast %cst_107 : f32 to vector<17x1xf32>
    %292 = arith.divf %290, %291 : vector<17x1xf32>
    %293 = vector.broadcast %292 : vector<17x1xf32> to vector<17x32xf32>
    %294 = arith.subf %288, %293 : vector<17x32xf32>
    %295 = arith.mulf %294, %294 : vector<17x32xf32>
    %cst_108 = arith.constant dense<0.000000e+00> : vector<17xf32>
    %296 = vector.multi_reduction <add>, %295, %cst_108 [1] : vector<17x32xf32> to vector<17xf32>
    %297 = vector.shape_cast %296 : vector<17xf32> to vector<17x1xf32>
    %cst_109 = arith.constant 3.200000e+01 : f32
    %298 = vector.broadcast %cst_109 : f32 to vector<17x1xf32>
    %299 = arith.divf %297, %298 : vector<17x1xf32>
    %300 = vector.broadcast %292 : vector<17x1xf32> to vector<17x32xf32>
    %301 = arith.subf %288, %300 : vector<17x32xf32>
    %cst_110 = arith.constant 9.99999974E-6 : f32
    %302 = vector.broadcast %cst_110 : f32 to vector<17x1xf32>
    %303 = arith.addf %299, %302 : vector<17x1xf32>
    %304 = math.rsqrt %303 : vector<17x1xf32>
    %305 = vector.broadcast %304 : vector<17x1xf32> to vector<17x32xf32>
    %306 = arith.mulf %301, %305 : vector<17x32xf32>
    %307 = vector.broadcast %191 : vector<1x32xf32> to vector<17x32xf32>
    %308 = arith.mulf %306, %307 : vector<17x32xf32>
    %309 = vector.broadcast %192 : vector<1x32xf32> to vector<17x32xf32>
    %310 = arith.addf %308, %309 : vector<17x32xf32>
    %311 = arith.truncf %310 : vector<17x32xf32> to vector<17x32xbf16>
    %cst_111 = arith.constant dense<0.000000e+00> : vector<17x128xf32>
    %312 = tpu.matmul %311, %184, %cst_111 {dimension_numbers = #tpu.dot_dimension_numbers<[1], [0], [0], [1], [0, 0, 1, 1], [], []>} : vector<17x32xbf16>, vector<32x128xbf16>, vector<17x128xf32> -> vector<17x128xf32>
    %313 = vector.broadcast %196 : vector<1x128xf32> to vector<17x128xf32>
    %314 = arith.addf %312, %313 : vector<17x128xf32>
    %315 = arith.mulf %314, %314 : vector<17x128xf32>
    %316 = arith.mulf %314, %315 : vector<17x128xf32>
    %cst_112 = arith.constant 4.471500e-02 : f32
    %317 = vector.broadcast %cst_112 : f32 to vector<17x128xf32>
    %318 = arith.mulf %317, %316 : vector<17x128xf32>
    %319 = arith.addf %314, %318 : vector<17x128xf32>
    %cst_113 = arith.constant 0.797884583 : f32
    %320 = vector.broadcast %cst_113 : f32 to vector<17x128xf32>
    %321 = arith.mulf %320, %319 : vector<17x128xf32>
    %322 = math.tanh %321 : vector<17x128xf32>
    %cst_114 = arith.constant 1.000000e+00 : f32
    %323 = vector.broadcast %cst_114 : f32 to vector<17x128xf32>
    %324 = arith.addf %323, %322 : vector<17x128xf32>
    %cst_115 = arith.constant 5.000000e-01 : f32
    %325 = vector.broadcast %cst_115 : f32 to vector<17x128xf32>
    %326 = arith.mulf %325, %324 : vector<17x128xf32>
    %327 = arith.mulf %314, %326 : vector<17x128xf32>
    %328 = arith.truncf %327 : vector<17x128xf32> to vector<17x128xbf16>
    %cst_116 = arith.constant dense<0.000000e+00> : vector<17x32xf32>
    %329 = tpu.matmul %328, %186, %cst_116 {dimension_numbers = #tpu.dot_dimension_numbers<[1], [0], [0], [1], [0, 0, 1, 1], [], []>} : vector<17x128xbf16>, vector<128x32xbf16>, vector<17x32xf32> -> vector<17x32xf32>
    %330 = vector.broadcast %194 : vector<1x32xf32> to vector<17x32xf32>
    %331 = arith.addf %329, %330 : vector<17x32xf32>
    %332 = arith.addf %288, %331 : vector<17x32xf32>
    %cst_117 = arith.constant dense<0.000000e+00> : vector<17xf32>
    %333 = vector.multi_reduction <add>, %332, %cst_117 [1] : vector<17x32xf32> to vector<17xf32>
    %334 = vector.shape_cast %333 : vector<17xf32> to vector<17x1xf32>
    %cst_118 = arith.constant 3.200000e+01 : f32
    %335 = vector.broadcast %cst_118 : f32 to vector<17x1xf32>
    %336 = arith.divf %334, %335 : vector<17x1xf32>
    %337 = vector.broadcast %336 : vector<17x1xf32> to vector<17x32xf32>
    %338 = arith.subf %332, %337 : vector<17x32xf32>
    %339 = arith.mulf %338, %338 : vector<17x32xf32>
    %cst_119 = arith.constant dense<0.000000e+00> : vector<17xf32>
    %340 = vector.multi_reduction <add>, %339, %cst_119 [1] : vector<17x32xf32> to vector<17xf32>
    %341 = vector.shape_cast %340 : vector<17xf32> to vector<17x1xf32>
    %cst_120 = arith.constant 3.200000e+01 : f32
    %342 = vector.broadcast %cst_120 : f32 to vector<17x1xf32>
    %343 = arith.divf %341, %342 : vector<17x1xf32>
    %344 = vector.broadcast %336 : vector<17x1xf32> to vector<17x32xf32>
    %345 = arith.subf %332, %344 : vector<17x32xf32>
    %cst_121 = arith.constant 9.99999974E-6 : f32
    %346 = vector.broadcast %cst_121 : f32 to vector<17x1xf32>
    %347 = arith.addf %343, %346 : vector<17x1xf32>
    %348 = math.rsqrt %347 : vector<17x1xf32>
    %349 = vector.broadcast %348 : vector<17x1xf32> to vector<17x32xf32>
    %350 = arith.mulf %345, %349 : vector<17x32xf32>
    %351 = vector.broadcast %5 : vector<1x32xf32> to vector<17x32xf32>
    %352 = arith.mulf %350, %351 : vector<17x32xf32>
    %353 = vector.broadcast %6 : vector<1x32xf32> to vector<17x32xf32>
    %354 = arith.addf %352, %353 : vector<17x32xf32>
    %c0_122 = arith.constant 0 : index
    %c0_123 = arith.constant 0 : index
    %c0_124 = arith.constant 0 : index
    %355 = vector.load %arg12[%c0_122, %c0_123, %c0_124] : memref<1x32x96xbf16, #tpu.memory_space<vmem>>, vector<1x32x96xbf16>
    %356 = vector.shape_cast %355 : vector<1x32x96xbf16> to vector<32x96xbf16>
    %c0_125 = arith.constant 0 : index
    %c0_126 = arith.constant 0 : index
    %c0_127 = arith.constant 0 : index
    %357 = vector.load %arg13[%c0_125, %c0_126, %c0_127] : memref<1x32x32xbf16, #tpu.memory_space<vmem>>, vector<1x32x32xbf16>
    %358 = vector.shape_cast %357 : vector<1x32x32xbf16> to vector<32x32xbf16>
    %c0_128 = arith.constant 0 : index
    %c0_129 = arith.constant 0 : index
    %c0_130 = arith.constant 0 : index
    %359 = vector.load %arg14[%c0_128, %c0_129, %c0_130] : memref<1x32x128xbf16, #tpu.memory_space<vmem>>, vector<1x32x128xbf16>
    %360 = vector.shape_cast %359 : vector<1x32x128xbf16> to vector<32x128xbf16>
    %c0_131 = arith.constant 0 : index
    %c0_132 = arith.constant 0 : index
    %c0_133 = arith.constant 0 : index
    %361 = vector.load %arg15[%c0_131, %c0_132, %c0_133] : memref<1x128x32xbf16, #tpu.memory_space<vmem>>, vector<1x128x32xbf16>
    %362 = vector.shape_cast %361 : vector<1x128x32xbf16> to vector<128x32xbf16>
    %c0_134 = arith.constant 0 : index
    %c0_135 = arith.constant 0 : index
    %c0_136 = arith.constant 0 : index
    %363 = vector.load %arg16[%c0_134, %c0_135, %c0_136] : memref<1x8x128xf32, #tpu.memory_space<vmem>>, vector<1x8x128xf32>
    %364 = vector.shape_cast %363 : vector<1x8x128xf32> to vector<8x128xf32>
    %365 = vector.extract_strided_slice %364 {offsets = [0, 0], sizes = [1, 32], strides = [1, 1]} : vector<8x128xf32> to vector<1x32xf32>
    %366 = vector.extract_strided_slice %364 {offsets = [1, 0], sizes = [1, 32], strides = [1, 1]} : vector<8x128xf32> to vector<1x32xf32>
    %367 = vector.extract_strided_slice %364 {offsets = [2, 0], sizes = [1, 32], strides = [1, 1]} : vector<8x128xf32> to vector<1x32xf32>
    %368 = vector.extract_strided_slice %364 {offsets = [3, 0], sizes = [1, 32], strides = [1, 1]} : vector<8x128xf32> to vector<1x32xf32>
    %369 = vector.extract_strided_slice %364 {offsets = [4, 0], sizes = [1, 32], strides = [1, 1]} : vector<8x128xf32> to vector<1x32xf32>
    %370 = vector.extract_strided_slice %364 {offsets = [5, 0], sizes = [1, 32], strides = [1, 1]} : vector<8x128xf32> to vector<1x32xf32>
    %371 = vector.extract_strided_slice %364 {offsets = [6, 0], sizes = [1, 96], strides = [1, 1]} : vector<8x128xf32> to vector<1x96xf32>
    %372 = vector.extract_strided_slice %364 {offsets = [7, 0], sizes = [1, 128], strides = [1, 1]} : vector<8x128xf32> to vector<1x128xf32>
    %cst_137 = arith.constant dense<0.000000e+00> : vector<17xf32>
    %373 = vector.multi_reduction <add>, %354, %cst_137 [1] : vector<17x32xf32> to vector<17xf32>
    %374 = vector.shape_cast %373 : vector<17xf32> to vector<17x1xf32>
    %cst_138 = arith.constant 3.200000e+01 : f32
    %375 = vector.broadcast %cst_138 : f32 to vector<17x1xf32>
    %376 = arith.divf %374, %375 : vector<17x1xf32>
    %377 = vector.broadcast %376 : vector<17x1xf32> to vector<17x32xf32>
    %378 = arith.subf %354, %377 : vector<17x32xf32>
    %379 = arith.mulf %378, %378 : vector<17x32xf32>
    %cst_139 = arith.constant dense<0.000000e+00> : vector<17xf32>
    %380 = vector.multi_reduction <add>, %379, %cst_139 [1] : vector<17x32xf32> to vector<17xf32>
    %381 = vector.shape_cast %380 : vector<17xf32> to vector<17x1xf32>
    %cst_140 = arith.constant 3.200000e+01 : f32
    %382 = vector.broadcast %cst_140 : f32 to vector<17x1xf32>
    %383 = arith.divf %381, %382 : vector<17x1xf32>
    %384 = vector.broadcast %376 : vector<17x1xf32> to vector<17x32xf32>
    %385 = arith.subf %354, %384 : vector<17x32xf32>
    %cst_141 = arith.constant 9.99999974E-6 : f32
    %386 = vector.broadcast %cst_141 : f32 to vector<17x1xf32>
    %387 = arith.addf %383, %386 : vector<17x1xf32>
    %388 = math.rsqrt %387 : vector<17x1xf32>
    %389 = vector.broadcast %388 : vector<17x1xf32> to vector<17x32xf32>
    %390 = arith.mulf %385, %389 : vector<17x32xf32>
    %391 = vector.broadcast %365 : vector<1x32xf32> to vector<17x32xf32>
    %392 = arith.mulf %390, %391 : vector<17x32xf32>
    %393 = vector.broadcast %366 : vector<1x32xf32> to vector<17x32xf32>
    %394 = arith.addf %392, %393 : vector<17x32xf32>
    %395 = arith.truncf %394 : vector<17x32xf32> to vector<17x32xbf16>
    %cst_142 = arith.constant dense<0.000000e+00> : vector<17x96xf32>
    %396 = tpu.matmul %395, %356, %cst_142 {dimension_numbers = #tpu.dot_dimension_numbers<[1], [0], [0], [1], [0, 0, 1, 1], [], []>} : vector<17x32xbf16>, vector<32x96xbf16>, vector<17x96xf32> -> vector<17x96xf32>
    %397 = vector.broadcast %371 : vector<1x96xf32> to vector<17x96xf32>
    %398 = arith.addf %396, %397 : vector<17x96xf32>
    %399 = vector.extract_strided_slice %398 {offsets = [0, 0], sizes = [17, 8], strides = [1, 1]} : vector<17x96xf32> to vector<17x8xf32>
    %400 = vector.extract_strided_slice %398 {offsets = [0, 32], sizes = [17, 8], strides = [1, 1]} : vector<17x96xf32> to vector<17x8xf32>
    %401 = vector.extract_strided_slice %398 {offsets = [0, 64], sizes = [17, 8], strides = [1, 1]} : vector<17x96xf32> to vector<17x8xf32>
    %cst_143 = arith.constant dense<0.000000e+00> : vector<17x17xf32>
    %402 = tpu.matmul %399, %400, %cst_143 {dimension_numbers = #tpu.dot_dimension_numbers<[1], [1], [0], [0], [0, 0, 1, 0], [], []>} : vector<17x8xf32>, vector<17x8xf32>, vector<17x17xf32> -> vector<17x17xf32>
    %cst_144 = arith.constant dense<0xFF800000> : vector<17xf32>
    %403 = vector.multi_reduction <maximumf>, %402, %cst_144 [1] : vector<17x17xf32> to vector<17xf32>
    %404 = vector.shape_cast %403 : vector<17xf32> to vector<17x1xf32>
    %405 = vector.broadcast %404 : vector<17x1xf32> to vector<17x17xf32>
    %406 = arith.subf %402, %405 : vector<17x17xf32>
    %407 = math.exp %406 : vector<17x17xf32>
    %cst_145 = arith.constant dense<0.000000e+00> : vector<17xf32>
    %408 = vector.multi_reduction <add>, %407, %cst_145 [1] : vector<17x17xf32> to vector<17xf32>
    %409 = vector.shape_cast %408 : vector<17xf32> to vector<17x1xf32>
    %410 = tpu.reciprocal %409 {approx = true} : vector<17x1xf32> -> vector<17x1xf32>
    %411 = vector.broadcast %410 : vector<17x1xf32> to vector<17x17xf32>
    %412 = arith.mulf %407, %411 : vector<17x17xf32>
    %cst_146 = arith.constant dense<0.000000e+00> : vector<17x8xf32>
    %413 = tpu.matmul %412, %401, %cst_146 {dimension_numbers = #tpu.dot_dimension_numbers<[1], [0], [0], [1], [0, 0, 1, 1], [], []>} : vector<17x17xf32>, vector<17x8xf32>, vector<17x8xf32> -> vector<17x8xf32>
    %414 = vector.extract_strided_slice %398 {offsets = [0, 8], sizes = [17, 8], strides = [1, 1]} : vector<17x96xf32> to vector<17x8xf32>
    %415 = vector.extract_strided_slice %398 {offsets = [0, 40], sizes = [17, 8], strides = [1, 1]} : vector<17x96xf32> to vector<17x8xf32>
    %416 = vector.extract_strided_slice %398 {offsets = [0, 72], sizes = [17, 8], strides = [1, 1]} : vector<17x96xf32> to vector<17x8xf32>
    %cst_147 = arith.constant dense<0.000000e+00> : vector<17x17xf32>
    %417 = tpu.matmul %414, %415, %cst_147 {dimension_numbers = #tpu.dot_dimension_numbers<[1], [1], [0], [0], [0, 0, 1, 0], [], []>} : vector<17x8xf32>, vector<17x8xf32>, vector<17x17xf32> -> vector<17x17xf32>
    %cst_148 = arith.constant dense<0xFF800000> : vector<17xf32>
    %418 = vector.multi_reduction <maximumf>, %417, %cst_148 [1] : vector<17x17xf32> to vector<17xf32>
    %419 = vector.shape_cast %418 : vector<17xf32> to vector<17x1xf32>
    %420 = vector.broadcast %419 : vector<17x1xf32> to vector<17x17xf32>
    %421 = arith.subf %417, %420 : vector<17x17xf32>
    %422 = math.exp %421 : vector<17x17xf32>
    %cst_149 = arith.constant dense<0.000000e+00> : vector<17xf32>
    %423 = vector.multi_reduction <add>, %422, %cst_149 [1] : vector<17x17xf32> to vector<17xf32>
    %424 = vector.shape_cast %423 : vector<17xf32> to vector<17x1xf32>
    %425 = tpu.reciprocal %424 {approx = true} : vector<17x1xf32> -> vector<17x1xf32>
    %426 = vector.broadcast %425 : vector<17x1xf32> to vector<17x17xf32>
    %427 = arith.mulf %422, %426 : vector<17x17xf32>
    %cst_150 = arith.constant dense<0.000000e+00> : vector<17x8xf32>
    %428 = tpu.matmul %427, %416, %cst_150 {dimension_numbers = #tpu.dot_dimension_numbers<[1], [0], [0], [1], [0, 0, 1, 1], [], []>} : vector<17x17xf32>, vector<17x8xf32>, vector<17x8xf32> -> vector<17x8xf32>
    %429 = vector.extract_strided_slice %398 {offsets = [0, 16], sizes = [17, 8], strides = [1, 1]} : vector<17x96xf32> to vector<17x8xf32>
    %430 = vector.extract_strided_slice %398 {offsets = [0, 48], sizes = [17, 8], strides = [1, 1]} : vector<17x96xf32> to vector<17x8xf32>
    %431 = vector.extract_strided_slice %398 {offsets = [0, 80], sizes = [17, 8], strides = [1, 1]} : vector<17x96xf32> to vector<17x8xf32>
    %cst_151 = arith.constant dense<0.000000e+00> : vector<17x17xf32>
    %432 = tpu.matmul %429, %430, %cst_151 {dimension_numbers = #tpu.dot_dimension_numbers<[1], [1], [0], [0], [0, 0, 1, 0], [], []>} : vector<17x8xf32>, vector<17x8xf32>, vector<17x17xf32> -> vector<17x17xf32>
    %cst_152 = arith.constant dense<0xFF800000> : vector<17xf32>
    %433 = vector.multi_reduction <maximumf>, %432, %cst_152 [1] : vector<17x17xf32> to vector<17xf32>
    %434 = vector.shape_cast %433 : vector<17xf32> to vector<17x1xf32>
    %435 = vector.broadcast %434 : vector<17x1xf32> to vector<17x17xf32>
    %436 = arith.subf %432, %435 : vector<17x17xf32>
    %437 = math.exp %436 : vector<17x17xf32>
    %cst_153 = arith.constant dense<0.000000e+00> : vector<17xf32>
    %438 = vector.multi_reduction <add>, %437, %cst_153 [1] : vector<17x17xf32> to vector<17xf32>
    %439 = vector.shape_cast %438 : vector<17xf32> to vector<17x1xf32>
    %440 = tpu.reciprocal %439 {approx = true} : vector<17x1xf32> -> vector<17x1xf32>
    %441 = vector.broadcast %440 : vector<17x1xf32> to vector<17x17xf32>
    %442 = arith.mulf %437, %441 : vector<17x17xf32>
    %cst_154 = arith.constant dense<0.000000e+00> : vector<17x8xf32>
    %443 = tpu.matmul %442, %431, %cst_154 {dimension_numbers = #tpu.dot_dimension_numbers<[1], [0], [0], [1], [0, 0, 1, 1], [], []>} : vector<17x17xf32>, vector<17x8xf32>, vector<17x8xf32> -> vector<17x8xf32>
    %444 = vector.extract_strided_slice %398 {offsets = [0, 24], sizes = [17, 8], strides = [1, 1]} : vector<17x96xf32> to vector<17x8xf32>
    %445 = vector.extract_strided_slice %398 {offsets = [0, 56], sizes = [17, 8], strides = [1, 1]} : vector<17x96xf32> to vector<17x8xf32>
    %446 = vector.extract_strided_slice %398 {offsets = [0, 88], sizes = [17, 8], strides = [1, 1]} : vector<17x96xf32> to vector<17x8xf32>
    %cst_155 = arith.constant dense<0.000000e+00> : vector<17x17xf32>
    %447 = tpu.matmul %444, %445, %cst_155 {dimension_numbers = #tpu.dot_dimension_numbers<[1], [1], [0], [0], [0, 0, 1, 0], [], []>} : vector<17x8xf32>, vector<17x8xf32>, vector<17x17xf32> -> vector<17x17xf32>
    %cst_156 = arith.constant dense<0xFF800000> : vector<17xf32>
    %448 = vector.multi_reduction <maximumf>, %447, %cst_156 [1] : vector<17x17xf32> to vector<17xf32>
    %449 = vector.shape_cast %448 : vector<17xf32> to vector<17x1xf32>
    %450 = vector.broadcast %449 : vector<17x1xf32> to vector<17x17xf32>
    %451 = arith.subf %447, %450 : vector<17x17xf32>
    %452 = math.exp %451 : vector<17x17xf32>
    %cst_157 = arith.constant dense<0.000000e+00> : vector<17xf32>
    %453 = vector.multi_reduction <add>, %452, %cst_157 [1] : vector<17x17xf32> to vector<17xf32>
    %454 = vector.shape_cast %453 : vector<17xf32> to vector<17x1xf32>
    %455 = tpu.reciprocal %454 {approx = true} : vector<17x1xf32> -> vector<17x1xf32>
    %456 = vector.broadcast %455 : vector<17x1xf32> to vector<17x17xf32>
    %457 = arith.mulf %452, %456 : vector<17x17xf32>
    %cst_158 = arith.constant dense<0.000000e+00> : vector<17x8xf32>
    %458 = tpu.matmul %457, %446, %cst_158 {dimension_numbers = #tpu.dot_dimension_numbers<[1], [0], [0], [1], [0, 0, 1, 1], [], []>} : vector<17x17xf32>, vector<17x8xf32>, vector<17x8xf32> -> vector<17x8xf32>
    %459 = tpu.concatenate %413, %428, %443, %458 in 1 : vector<17x8xf32>, vector<17x8xf32>, vector<17x8xf32>, vector<17x8xf32> -> vector<17x32xf32>
    %460 = arith.truncf %459 : vector<17x32xf32> to vector<17x32xbf16>
    %cst_159 = arith.constant dense<0.000000e+00> : vector<17x32xf32>
    %461 = tpu.matmul %460, %358, %cst_159 {dimension_numbers = #tpu.dot_dimension_numbers<[1], [0], [0], [1], [0, 0, 1, 1], [], []>} : vector<17x32xbf16>, vector<32x32xbf16>, vector<17x32xf32> -> vector<17x32xf32>
    %462 = arith.addf %354, %461 : vector<17x32xf32>
    %463 = vector.broadcast %369 : vector<1x32xf32> to vector<17x32xf32>
    %464 = arith.addf %462, %463 : vector<17x32xf32>
    %cst_160 = arith.constant dense<0.000000e+00> : vector<17xf32>
    %465 = vector.multi_reduction <add>, %464, %cst_160 [1] : vector<17x32xf32> to vector<17xf32>
    %466 = vector.shape_cast %465 : vector<17xf32> to vector<17x1xf32>
    %cst_161 = arith.constant 3.200000e+01 : f32
    %467 = vector.broadcast %cst_161 : f32 to vector<17x1xf32>
    %468 = arith.divf %466, %467 : vector<17x1xf32>
    %469 = vector.broadcast %468 : vector<17x1xf32> to vector<17x32xf32>
    %470 = arith.subf %464, %469 : vector<17x32xf32>
    %471 = arith.mulf %470, %470 : vector<17x32xf32>
    %cst_162 = arith.constant dense<0.000000e+00> : vector<17xf32>
    %472 = vector.multi_reduction <add>, %471, %cst_162 [1] : vector<17x32xf32> to vector<17xf32>
    %473 = vector.shape_cast %472 : vector<17xf32> to vector<17x1xf32>
    %cst_163 = arith.constant 3.200000e+01 : f32
    %474 = vector.broadcast %cst_163 : f32 to vector<17x1xf32>
    %475 = arith.divf %473, %474 : vector<17x1xf32>
    %476 = vector.broadcast %468 : vector<17x1xf32> to vector<17x32xf32>
    %477 = arith.subf %464, %476 : vector<17x32xf32>
    %cst_164 = arith.constant 9.99999974E-6 : f32
    %478 = vector.broadcast %cst_164 : f32 to vector<17x1xf32>
    %479 = arith.addf %475, %478 : vector<17x1xf32>
    %480 = math.rsqrt %479 : vector<17x1xf32>
    %481 = vector.broadcast %480 : vector<17x1xf32> to vector<17x32xf32>
    %482 = arith.mulf %477, %481 : vector<17x32xf32>
    %483 = vector.broadcast %367 : vector<1x32xf32> to vector<17x32xf32>
    %484 = arith.mulf %482, %483 : vector<17x32xf32>
    %485 = vector.broadcast %368 : vector<1x32xf32> to vector<17x32xf32>
    %486 = arith.addf %484, %485 : vector<17x32xf32>
    %487 = arith.truncf %486 : vector<17x32xf32> to vector<17x32xbf16>
    %cst_165 = arith.constant dense<0.000000e+00> : vector<17x128xf32>
    %488 = tpu.matmul %487, %360, %cst_165 {dimension_numbers = #tpu.dot_dimension_numbers<[1], [0], [0], [1], [0, 0, 1, 1], [], []>} : vector<17x32xbf16>, vector<32x128xbf16>, vector<17x128xf32> -> vector<17x128xf32>
    %489 = vector.broadcast %372 : vector<1x128xf32> to vector<17x128xf32>
    %490 = arith.addf %488, %489 : vector<17x128xf32>
    %491 = arith.mulf %490, %490 : vector<17x128xf32>
    %492 = arith.mulf %490, %491 : vector<17x128xf32>
    %cst_166 = arith.constant 4.471500e-02 : f32
    %493 = vector.broadcast %cst_166 : f32 to vector<17x128xf32>
    %494 = arith.mulf %493, %492 : vector<17x128xf32>
    %495 = arith.addf %490, %494 : vector<17x128xf32>
    %cst_167 = arith.constant 0.797884583 : f32
    %496 = vector.broadcast %cst_167 : f32 to vector<17x128xf32>
    %497 = arith.mulf %496, %495 : vector<17x128xf32>
    %498 = math.tanh %497 : vector<17x128xf32>
    %cst_168 = arith.constant 1.000000e+00 : f32
    %499 = vector.broadcast %cst_168 : f32 to vector<17x128xf32>
    %500 = arith.addf %499, %498 : vector<17x128xf32>
    %cst_169 = arith.constant 5.000000e-01 : f32
    %501 = vector.broadcast %cst_169 : f32 to vector<17x128xf32>
    %502 = arith.mulf %501, %500 : vector<17x128xf32>
    %503 = arith.mulf %490, %502 : vector<17x128xf32>
    %504 = arith.truncf %503 : vector<17x128xf32> to vector<17x128xbf16>
    %cst_170 = arith.constant dense<0.000000e+00> : vector<17x32xf32>
    %505 = tpu.matmul %504, %362, %cst_170 {dimension_numbers = #tpu.dot_dimension_numbers<[1], [0], [0], [1], [0, 0, 1, 1], [], []>} : vector<17x128xbf16>, vector<128x32xbf16>, vector<17x32xf32> -> vector<17x32xf32>
    %506 = vector.broadcast %370 : vector<1x32xf32> to vector<17x32xf32>
    %507 = arith.addf %505, %506 : vector<17x32xf32>
    %508 = arith.addf %464, %507 : vector<17x32xf32>
    %cst_171 = arith.constant dense<0.000000e+00> : vector<17xf32>
    %509 = vector.multi_reduction <add>, %508, %cst_171 [1] : vector<17x32xf32> to vector<17xf32>
    %510 = vector.shape_cast %509 : vector<17xf32> to vector<17x1xf32>
    %cst_172 = arith.constant 3.200000e+01 : f32
    %511 = vector.broadcast %cst_172 : f32 to vector<17x1xf32>
    %512 = arith.divf %510, %511 : vector<17x1xf32>
    %513 = vector.broadcast %512 : vector<17x1xf32> to vector<17x32xf32>
    %514 = arith.subf %508, %513 : vector<17x32xf32>
    %515 = arith.mulf %514, %514 : vector<17x32xf32>
    %cst_173 = arith.constant dense<0.000000e+00> : vector<17xf32>
    %516 = vector.multi_reduction <add>, %515, %cst_173 [1] : vector<17x32xf32> to vector<17xf32>
    %517 = vector.shape_cast %516 : vector<17xf32> to vector<17x1xf32>
    %cst_174 = arith.constant 3.200000e+01 : f32
    %518 = vector.broadcast %cst_174 : f32 to vector<17x1xf32>
    %519 = arith.divf %517, %518 : vector<17x1xf32>
    %520 = vector.broadcast %512 : vector<17x1xf32> to vector<17x32xf32>
    %521 = arith.subf %508, %520 : vector<17x32xf32>
    %cst_175 = arith.constant 9.99999974E-6 : f32
    %522 = vector.broadcast %cst_175 : f32 to vector<17x1xf32>
    %523 = arith.addf %519, %522 : vector<17x1xf32>
    %524 = math.rsqrt %523 : vector<17x1xf32>
    %525 = vector.broadcast %524 : vector<17x1xf32> to vector<17x32xf32>
    %526 = arith.mulf %521, %525 : vector<17x32xf32>
    %527 = vector.broadcast %7 : vector<1x32xf32> to vector<17x32xf32>
    %528 = arith.mulf %526, %527 : vector<17x32xf32>
    %529 = vector.broadcast %8 : vector<1x32xf32> to vector<17x32xf32>
    %530 = arith.addf %528, %529 : vector<17x32xf32>
    %531 = vector.extract_strided_slice %530 {offsets = [0, 0], sizes = [16, 32], strides = [1, 1]} : vector<17x32xf32> to vector<16x32xf32>
    %532 = arith.truncf %531 : vector<16x32xf32> to vector<16x32xbf16>
    %c0_176 = arith.constant 0 : index
    %c0_177 = arith.constant 0 : index
    %533 = vector.load %arg17[%c0_176, %c0_177] : memref<32x48xbf16, #tpu.memory_space<vmem>>, vector<32x48xbf16>
    %cst_178 = arith.constant dense<0.000000e+00> : vector<16x48xf32>
    %534 = tpu.matmul %532, %533, %cst_178 {dimension_numbers = #tpu.dot_dimension_numbers<[1], [0], [0], [1], [0, 0, 1, 1], [], []>} : vector<16x32xbf16>, vector<32x48xbf16>, vector<16x48xf32> -> vector<16x48xf32>
    %535 = vector.broadcast %9 : vector<1x48xf32> to vector<16x48xf32>
    %536 = arith.addf %534, %535 : vector<16x48xf32>
    %c0_179 = arith.constant 0 : index
    %c0_180 = arith.constant 0 : index
    %c0_181 = arith.constant 0 : index
    %537 = vector.load %arg18[%c0_179, %c0_180, %c0_181] : memref<1x16x48xf32, #tpu.memory_space<vmem>>, vector<1x16x48xf32>
    %538 = vector.shape_cast %537 : vector<1x16x48xf32> to vector<16x48xf32>
    %539 = vector.shape_cast %536 : vector<16x48xf32> to vector<1x16x48xf32>
    tpu.vector_store %arg18[%c0_179, %c0_180, %c0_181], %539 {strides = array<i32>} : memref<1x16x48xf32, #tpu.memory_space<vmem>>, vector<1x16x48xf32>,
    %540 = vector.extract_strided_slice %1 {offsets = [0, 0], sizes = [16, 48], strides = [1, 1]} : vector<17x48xf32> to vector<16x48xf32>
    %541 = arith.subf %536, %540 : vector<16x48xf32>
    %542 = arith.mulf %541, %541 : vector<16x48xf32>
    %cst_182 = arith.constant dense<0.000000e+00> : vector<16xf32>
    %543 = vector.multi_reduction <add>, %542, %cst_182 [1] : vector<16x48xf32> to vector<16xf32>
    %544 = vector.shape_cast %543 : vector<16xf32> to vector<16x1xf32>
    %cst_183 = arith.constant 4.800000e+01 : f32
    %545 = vector.broadcast %cst_183 : f32 to vector<16x1xf32>
    %546 = arith.divf %544, %545 : vector<16x1xf32>
    %547 = vector.extract_strided_slice %3 {offsets = [0, 0], sizes = [16, 1], strides = [1, 1]} : vector<17x1xf32> to vector<16x1xf32>
    %548 = arith.mulf %546, %547 : vector<16x1xf32>
    %549 = tpu.concatenate %548, %547 in 1 : vector<16x1xf32>, vector<16x1xf32> -> vector<16x2xf32>
    %cst_184 = arith.constant dense<0.000000e+00> : vector<2xf32>
    %550 = vector.multi_reduction <add>, %549, %cst_184 [0] : vector<16x2xf32> to vector<2xf32>
    %551 = vector.shape_cast %550 : vector<2xf32> to vector<1x2xf32>
    %c0_185 = arith.constant 0 : index
    %c0_186 = arith.constant 0 : index
    %c0_187 = arith.constant 0 : index
    %552 = vector.load %arg19[%c0_185, %c0_186, %c0_187] : memref<1x1x2xf32, #tpu.memory_space<vmem>>, vector<1x1x2xf32>
    %553 = vector.shape_cast %552 : vector<1x1x2xf32> to vector<1x2xf32>
    %554 = vector.shape_cast %551 : vector<1x2xf32> to vector<1x1x2xf32>
    tpu.vector_store %arg19[%c0_185, %c0_186, %c0_187], %554 {strides = array<i32>} : memref<1x1x2xf32, #tpu.memory_space<vmem>>, vector<1x1x2xf32>,
    return
  }
  func.func @transform_0(%arg0: i32) -> (i32, i32, i32) {
    %c0_i32 = arith.constant 0 : i32
    %c0_i32_0 = arith.constant 0 : i32
    %c0_i32_1 = arith.constant 0 : i32
    return %arg0, %c0_i32, %c0_i32_0 : i32, i32, i32
  }
  func.func @transform_1(%arg0: i32) -> (i32, i32, i32) {
    %c0_i32 = arith.constant 0 : i32
    %c0_i32_0 = arith.constant 0 : i32
    %c0_i32_1 = arith.constant 0 : i32
    return %arg0, %c0_i32, %c0_i32_0 : i32, i32, i32
  }
  func.func @transform_2(%arg0: i32) -> (i32, i32) {
    %c0_i32 = arith.constant 0 : i32
    %c0_i32_0 = arith.constant 0 : i32
    %c0_i32_1 = arith.constant 0 : i32
    return %c0_i32, %c0_i32_0 : i32, i32
  }
  func.func @transform_3(%arg0: i32) -> (i32, i32) {
    %c0_i32 = arith.constant 0 : i32
    %c0_i32_0 = arith.constant 0 : i32
    %c0_i32_1 = arith.constant 0 : i32
    return %c0_i32, %c0_i32_0 : i32, i32
  }
  func.func @transform_4(%arg0: i32) -> (i32, i32) {
    %c0_i32 = arith.constant 0 : i32
    %c0_i32_0 = arith.constant 0 : i32
    %c0_i32_1 = arith.constant 0 : i32
    return %c0_i32, %c0_i32_0 : i32, i32
  }
  func.func @transform_5(%arg0: i32) -> (i32, i32) {
    %c0_i32 = arith.constant 0 : i32
    %c0_i32_0 = arith.constant 0 : i32
    %c0_i32_1 = arith.constant 0 : i32
    return %c0_i32, %c0_i32_0 : i32, i32
  }
  func.func @transform_6(%arg0: i32) -> (i32, i32, i32) {
    %c0_i32 = arith.constant 0 : i32
    %c0_i32_0 = arith.constant 0 : i32
    %c0_i32_1 = arith.constant 0 : i32
    %c0_i32_2 = arith.constant 0 : i32
    return %c0_i32, %c0_i32_0, %c0_i32_1 : i32, i32, i32
  }
  func.func @transform_7(%arg0: i32) -> (i32, i32, i32) {
    %c0_i32 = arith.constant 0 : i32
    %c0_i32_0 = arith.constant 0 : i32
    %c0_i32_1 = arith.constant 0 : i32
    %c0_i32_2 = arith.constant 0 : i32
    return %c0_i32, %c0_i32_0, %c0_i32_1 : i32, i32, i32
  }
  func.func @transform_8(%arg0: i32) -> (i32, i32, i32) {
    %c0_i32 = arith.constant 0 : i32
    %c0_i32_0 = arith.constant 0 : i32
    %c0_i32_1 = arith.constant 0 : i32
    %c0_i32_2 = arith.constant 0 : i32
    return %c0_i32, %c0_i32_0, %c0_i32_1 : i32, i32, i32
  }
  func.func @transform_9(%arg0: i32) -> (i32, i32, i32) {
    %c0_i32 = arith.constant 0 : i32
    %c0_i32_0 = arith.constant 0 : i32
    %c0_i32_1 = arith.constant 0 : i32
    %c0_i32_2 = arith.constant 0 : i32
    return %c0_i32, %c0_i32_0, %c0_i32_1 : i32, i32, i32
  }
  func.func @transform_10(%arg0: i32) -> (i32, i32, i32) {
    %c0_i32 = arith.constant 0 : i32
    %c0_i32_0 = arith.constant 0 : i32
    %c0_i32_1 = arith.constant 0 : i32
    %c0_i32_2 = arith.constant 0 : i32
    return %c0_i32, %c0_i32_0, %c0_i32_1 : i32, i32, i32
  }
  func.func @transform_11(%arg0: i32) -> (i32, i32, i32) {
    %c0_i32 = arith.constant 0 : i32
    %c0_i32_0 = arith.constant 0 : i32
    %c0_i32_1 = arith.constant 0 : i32
    %c0_i32_2 = arith.constant 0 : i32
    return %c0_i32, %c0_i32_0, %c0_i32_1 : i32, i32, i32
  }
  func.func @transform_12(%arg0: i32) -> (i32, i32, i32) {
    %c0_i32 = arith.constant 0 : i32
    %c0_i32_0 = arith.constant 0 : i32
    %c0_i32_1 = arith.constant 0 : i32
    %c0_i32_2 = arith.constant 0 : i32
    return %c0_i32, %c0_i32_0, %c0_i32_1 : i32, i32, i32
  }
  func.func @transform_13(%arg0: i32) -> (i32, i32, i32) {
    %c0_i32 = arith.constant 0 : i32
    %c0_i32_0 = arith.constant 0 : i32
    %c0_i32_1 = arith.constant 0 : i32
    %c0_i32_2 = arith.constant 0 : i32
    return %c0_i32, %c0_i32_0, %c0_i32_1 : i32, i32, i32
  }
  func.func @transform_14(%arg0: i32) -> (i32, i32, i32) {
    %c0_i32 = arith.constant 0 : i32
    %c0_i32_0 = arith.constant 0 : i32
    %c0_i32_1 = arith.constant 0 : i32
    %c0_i32_2 = arith.constant 0 : i32
    return %c0_i32, %c0_i32_0, %c0_i32_1 : i32, i32, i32
  }
  func.func @transform_15(%arg0: i32) -> (i32, i32, i32) {
    %c0_i32 = arith.constant 0 : i32
    %c0_i32_0 = arith.constant 0 : i32
    %c0_i32_1 = arith.constant 0 : i32
    %c0_i32_2 = arith.constant 0 : i32
    return %c0_i32, %c0_i32_0, %c0_i32_1 : i32, i32, i32
  }
  func.func @transform_16(%arg0: i32) -> (i32, i32) {
    %c0_i32 = arith.constant 0 : i32
    %c0_i32_0 = arith.constant 0 : i32
    %c0_i32_1 = arith.constant 0 : i32
    return %c0_i32, %c0_i32_0 : i32, i32
  }
  func.func @transform_17(%arg0: i32) -> (i32, i32, i32) {
    %c0_i32 = arith.constant 0 : i32
    %c0_i32_0 = arith.constant 0 : i32
    %c0_i32_1 = arith.constant 0 : i32
    return %arg0, %c0_i32, %c0_i32_0 : i32, i32, i32
  }
  func.func @transform_18(%arg0: i32) -> (i32, i32, i32) {
    %c0_i32 = arith.constant 0 : i32
    %c0_i32_0 = arith.constant 0 : i32
    %c0_i32_1 = arith.constant 0 : i32
    return %arg0, %c0_i32, %c0_i32_0 : i32, i32, i32
  }
}

</mosaic_0001>

<llo_original>
// kernel: forward.1
$region0: #{forward.1}
  #allocation0 [shape = 'u32[]', space=smem, size = 0x4, offset = 0x4, fixed_abs, tag = 'smem constant byte address 0x4 - core index']
  #allocation1 [shape = 'u32[72,128]{1,0:T(1,128)}', space=vmem, size = 0x9000, scoped, tag = 'internal scratch']
  %s0 = inlined_call_operand.vmem [shape: f32[2,17,48], index: 0, kind: input, shape index: {}]
  %s1 = inlined_call_operand.vmem [shape: f32[2,17,1], index: 1, kind: input, shape index: {}]
  %s2 = inlined_call_operand.vmem [shape: bf16[48,32], index: 2, kind: input, shape index: {}]
  %s3 = inlined_call_operand.vmem [shape: f32[6,128], index: 3, kind: input, shape index: {}]
  %s4 = inlined_call_operand.vmem [shape: f32[17,32], index: 4, kind: input, shape index: {}]
  %s5 = inlined_call_operand.vmem [shape: f32[17,32], index: 5, kind: input, shape index: {}]
  %s6 = inlined_call_operand.vmem [shape: bf16[2,32,96], index: 6, kind: input, shape index: {}]
  %s7 = inlined_call_operand.vmem [shape: bf16[2,32,32], index: 7, kind: input, shape index: {}]
  %s8 = inlined_call_operand.vmem [shape: bf16[2,32,128], index: 8, kind: input, shape index: {}]
  %s9 = inlined_call_operand.vmem [shape: bf16[2,128,32], index: 9, kind: input, shape index: {}]
  %s10 = inlined_call_operand.vmem [shape: f32[2,8,128], index: 10, kind: input, shape index: {}]
  %s11 = inlined_call_operand.vmem [shape: bf16[1,32,96], index: 11, kind: input, shape index: {}]
  %s12 = inlined_call_operand.vmem [shape: bf16[1,32,32], index: 12, kind: input, shape index: {}]
  %s13 = inlined_call_operand.vmem [shape: bf16[1,32,128], index: 13, kind: input, shape index: {}]
  %s14 = inlined_call_operand.vmem [shape: bf16[1,128,32], index: 14, kind: input, shape index: {}]
  %s15 = inlined_call_operand.vmem [shape: f32[1,8,128], index: 15, kind: input, shape index: {}]
  %s16 = inlined_call_operand.vmem [shape: bf16[32,48], index: 16, kind: input, shape index: {}]
  %s17 = inlined_call_operand.hbm [shape: f32[2,16,48], index: 17, kind: output, shape index: {0}]
  %s18 = inlined_call_operand.vmem [shape: f32[2,1,2], index: 18, kind: output, shape index: {1}]
  %19 = xla_tuple %s17, %s18
  %s20 = sld [smem:[#allocation0]]
  $region109: #{forward.1} parent=0
    _
  %s22 = ssub.s32 1, %s20
  %s23 = scalar_select 0, %s22, %s20
  $region1: #{forward.1} parent=0
    #allocation2 [shape = 'u8[16384]{0}', space=vmem, size = 0x4000, scoped, tag = 'output window, operand 0']
    #allocation3 [shape = 's32[2]{0}', space=sflag, size = 0x8, scoped, tag = 'scoped memory for forward.1']
    %24 = vsyncpa [#allocation3], 0
    %s25 = scalar_lea.sflag [#allocation3], 1
    %26 = vsyncpa %s25, 0
    loop: start=0, step=1, limit=4
    $region2: #{forward.1} parent=1 // loop_pre_header
      _
    $region3: #{forward.1} parent=1 // loop_header
      %s28 = sphi 0, %s32
      %p29 = scmp.ge.s32.totalorder %s28, 4
      %s38 = sphi 0, %s40
      %s41 = sphi 0, %s38
      %s42 = sphi 0, %s41
      %s58 = sphi 0, %s42
      %s64 = sphi 0, %s66
      %s67 = sphi 0, %s64
      %s68 = sphi 0, %s67
      %s84 = sphi 0, %s68
      %s88 = sphi 0, %s88
      %s90 = sphi 0, %s88
      %s91 = sphi 0, %s90
      %s105 = sphi 0, %s91
      %s109 = sphi 0, %s109
      %s111 = sphi 0, %s109
      %s112 = sphi 0, %s111
      %s126 = sphi 0, %s112
      %s130 = sphi 0, %s130
      %s132 = sphi 0, %s130
      %s133 = sphi 0, %s132
      %s147 = sphi 0, %s133
      %s151 = sphi 0, %s151
      %s153 = sphi 0, %s151
      %s154 = sphi 0, %s153
      %s168 = sphi 0, %s154
      %s172 = sphi 0, %s172
      %s174 = sphi 0, %s172
      %s175 = sphi 0, %s174
      %s189 = sphi 0, %s175
      %s193 = sphi 0, %s193
      %s195 = sphi 0, %s193
      %s196 = sphi 0, %s195
      %s210 = sphi 0, %s196
      %s214 = sphi 0, %s214
      %s216 = sphi 0, %s214
      %s217 = sphi 0, %s216
      %s231 = sphi 0, %s217
      %s235 = sphi 0, %s235
      %s237 = sphi 0, %s235
      %s238 = sphi 0, %s237
      %s252 = sphi 0, %s238
      %s256 = sphi 0, %s256
      %s258 = sphi 0, %s256
      %s259 = sphi 0, %s258
      %s273 = sphi 0, %s259
      %s277 = sphi 0, %s277
      %s279 = sphi 0, %s277
      %s280 = sphi 0, %s279
      %s294 = sphi 0, %s280
      %s298 = sphi 0, %s298
      %s300 = sphi 0, %s298
      %s301 = sphi 0, %s300
      %s315 = sphi 0, %s301
      %s319 = sphi 0, %s319
      %s321 = sphi 0, %s319
      %s322 = sphi 0, %s321
      %s336 = sphi 0, %s322
      %s340 = sphi 0, %s340
      %s342 = sphi 0, %s340
      %s343 = sphi 0, %s342
      %s357 = sphi 0, %s343
      %s361 = sphi 0, %s361
      %s363 = sphi 0, %s361
      %s364 = sphi 0, %s363
      %s378 = sphi 0, %s364
      %s382 = sphi 0, %s382
      %s384 = sphi 0, %s382
      %s385 = sphi 0, %s384
      %s399 = sphi 0, %s385
      %s405 = sphi 0, %s407
      %s408 = sphi 0, %s405
      %s409 = sphi 0, %s408
      %s425 = sphi 0, %s409
      %s431 = sphi 0, %s433
      %s434 = sphi 0, %s431
      %s435 = sphi 0, %s434
      %s451 = sphi 0, %s435
    $region4: #{forward.1} parent=1 // loop_header_branch
      %31 = sbr.rel (%p29) target = $region8
    $region5: #{forward.1} parent=1 // loop_body
      %s33 = ssub.s32 %s28, 1
      %s34 = ssub.s32 %s28, 2
      %s35 = sadd.s32 %s28, 1
      %s36 = ssub.s32 %s28, %s35
      %p37 = scmp.eq.s32.totalorder %s36, 0
      %s39 = sadd.s32 %s38, 1
      %s40 = scalar_select %p37, %s38, %s39
      %p43 = pneg %p37
      %p44 = scmp.eq.s32.totalorder %s28, 1
      %p45 = por %p43, %p44
      %p46 = scmp.ne.s32.totalorder %s38, %s41
      %p47 = scmp.eq.s32.totalorder %s28, 0
      %p48 = por %p46, %p47
      %p49 = scmp.ne.s32.totalorder %s38, %s41
      %p50 = scmp.eq.s32.totalorder %s33, 1
      %p51 = por %p49, %p50
      %p52 = scmp.ne.s32.totalorder %s41, %s42
      %p53 = scmp.eq.s32.totalorder %s33, 0
      %p54 = por %p52, %p53
      %p55 = scmp.ne.s32.totalorder %s41, %s42
      %p56 = scmp.eq.s32.totalorder %s34, 1
      %p57 = por %p55, %p56
      %p59 = scmp.ne.s32.totalorder %s42, %s58
      %p60 = scmp.eq.s32.totalorder %s34, 0
      %p61 = por %p59, %p60
      %s62 = ssub.s32 %s28, %s35
      %p63 = scmp.eq.s32.totalorder %s62, 0
      %s65 = sadd.s32 %s64, 1
      %s66 = scalar_select %p63, %s64, %s65
      %p69 = pneg %p63
      %p70 = scmp.eq.s32.totalorder %s28, 1
      %p71 = por %p69, %p70
      %p72 = scmp.ne.s32.totalorder %s64, %s67
      %p73 = scmp.eq.s32.totalorder %s28, 0
      %p74 = por %p72, %p73
      %p75 = scmp.ne.s32.totalorder %s64, %s67
      %p76 = scmp.eq.s32.totalorder %s33, 1
      %p77 = por %p75, %p76
      %p78 = scmp.ne.s32.totalorder %s67, %s68
      %p79 = scmp.eq.s32.totalorder %s33, 0
      %p80 = por %p78, %p79
      %p81 = scmp.ne.s32.totalorder %s67, %s68
      %p82 = scmp.eq.s32.totalorder %s34, 1
      %p83 = por %p81, %p82
      %p85 = scmp.ne.s32.totalorder %s68, %s84
      %p86 = scmp.eq.s32.totalorder %s34, 0
      %p87 = por %p85, %p86
      %s89 = sadd.s32 %s88, 1
      %p92 = scmp.eq.s32.totalorder %s28, 1
      %p93 = scmp.ne.s32.totalorder %s88, %s90
      %p94 = scmp.eq.s32.totalorder %s28, 0
      %p95 = por %p93, %p94
      %p96 = scmp.ne.s32.totalorder %s88, %s90
      %p97 = scmp.eq.s32.totalorder %s33, 1
      %p98 = por %p96, %p97
      %p99 = scmp.ne.s32.totalorder %s90, %s91
      %p100 = scmp.eq.s32.totalorder %s33, 0
      %p101 = por %p99, %p100
      %p102 = scmp.ne.s32.totalorder %s90, %s91
      %p103 = scmp.eq.s32.totalorder %s34, 1
      %p104 = por %p102, %p103
      %p106 = scmp.ne.s32.totalorder %s91, %s105
      %p107 = scmp.eq.s32.totalorder %s34, 0
      %p108 = por %p106, %p107
      %s110 = sadd.s32 %s109, 1
      %p113 = scmp.eq.s32.totalorder %s28, 1
      %p114 = scmp.ne.s32.totalorder %s109, %s111
      %p115 = scmp.eq.s32.totalorder %s28, 0
      %p116 = por %p114, %p115
      %p117 = scmp.ne.s32.totalorder %s109, %s111
      %p118 = scmp.eq.s32.totalorder %s33, 1
      %p119 = por %p117, %p118
      %p120 = scmp.ne.s32.totalorder %s111, %s112
      %p121 = scmp.eq.s32.totalorder %s33, 0
      %p122 = por %p120, %p121
      %p123 = scmp.ne.s32.totalorder %s111, %s112
      %p124 = scmp.eq.s32.totalorder %s34, 1
      %p125 = por %p123, %p124
      %p127 = scmp.ne.s32.totalorder %s112, %s126
      %p128 = scmp.eq.s32.totalorder %s34, 0
      %p129 = por %p127, %p128
      %s131 = sadd.s32 %s130, 1
      %p134 = scmp.eq.s32.totalorder %s28, 1
      %p135 = scmp.ne.s32.totalorder %s130, %s132
      %p136 = scmp.eq.s32.totalorder %s28, 0
      %p137 = por %p135, %p136
      %p138 = scmp.ne.s32.totalorder %s130, %s132
      %p139 = scmp.eq.s32.totalorder %s33, 1
      %p140 = por %p138, %p139
      %p141 = scmp.ne.s32.totalorder %s132, %s133
      %p142 = scmp.eq.s32.totalorder %s33, 0
      %p143 = por %p141, %p142
      %p144 = scmp.ne.s32.totalorder %s132, %s133
      %p145 = scmp.eq.s32.totalorder %s34, 1
      %p146 = por %p144, %p145
      %p148 = scmp.ne.s32.totalorder %s133, %s147
      %p149 = scmp.eq.s32.totalorder %s34, 0
      %p150 = por %p148, %p149
      %s152 = sadd.s32 %s151, 1
      %p155 = scmp.eq.s32.totalorder %s28, 1
      %p156 = scmp.ne.s32.totalorder %s151, %s153
      %p157 = scmp.eq.s32.totalorder %s28, 0
      %p158 = por %p156, %p157
      %p159 = scmp.ne.s32.totalorder %s151, %s153
      %p160 = scmp.eq.s32.totalorder %s33, 1
      %p161 = por %p159, %p160
      %p162 = scmp.ne.s32.totalorder %s153, %s154
      %p163 = scmp.eq.s32.totalorder %s33, 0
      %p164 = por %p162, %p163
      %p165 = scmp.ne.s32.totalorder %s153, %s154
      %p166 = scmp.eq.s32.totalorder %s34, 1
      %p167 = por %p165, %p166
      %p169 = scmp.ne.s32.totalorder %s154, %s168
      %p170 = scmp.eq.s32.totalorder %s34, 0
      %p171 = por %p169, %p170
      %s173 = sadd.s32 %s172, 1
      %p176 = scmp.eq.s32.totalorder %s28, 1
      %p177 = scmp.ne.s32.totalorder %s172, %s174
      %p178 = scmp.eq.s32.totalorder %s28, 0
      %p179 = por %p177, %p178
      %p180 = scmp.ne.s32.totalorder %s172, %s174
      %p181 = scmp.eq.s32.totalorder %s33, 1
      %p182 = por %p180, %p181
      %p183 = scmp.ne.s32.totalorder %s174, %s175
      %p184 = scmp.eq.s32.totalorder %s33, 0
      %p185 = por %p183, %p184
      %p186 = scmp.ne.s32.totalorder %s174, %s175
      %p187 = scmp.eq.s32.totalorder %s34, 1
      %p188 = por %p186, %p187
      %p190 = scmp.ne.s32.totalorder %s175, %s189
      %p191 = scmp.eq.s32.totalorder %s34, 0
      %p192 = por %p190, %p191
      %s194 = sadd.s32 %s193, 1
      %p197 = scmp.eq.s32.totalorder %s28, 1
      %p198 = scmp.ne.s32.totalorder %s193, %s195
      %p199 = scmp.eq.s32.totalorder %s28, 0
      %p200 = por %p198, %p199
      %p201 = scmp.ne.s32.totalorder %s193, %s195
      %p202 = scmp.eq.s32.totalorder %s33, 1
      %p203 = por %p201, %p202
      %p204 = scmp.ne.s32.totalorder %s195, %s196
      %p205 = scmp.eq.s32.totalorder %s33, 0
      %p206 = por %p204, %p205
      %p207 = scmp.ne.s32.totalorder %s195, %s196
      %p208 = scmp.eq.s32.totalorder %s34, 1
      %p209 = por %p207, %p208
      %p211 = scmp.ne.s32.totalorder %s196, %s210
      %p212 = scmp.eq.s32.totalorder %s34, 0
      %p213 = por %p211, %p212
      %s215 = sadd.s32 %s214, 1
      %p218 = scmp.eq.s32.totalorder %s28, 1
      %p219 = scmp.ne.s32.totalorder %s214, %s216
      %p220 = scmp.eq.s32.totalorder %s28, 0
      %p221 = por %p219, %p220
      %p222 = scmp.ne.s32.totalorder %s214, %s216
      %p223 = scmp.eq.s32.totalorder %s33, 1
      %p224 = por %p222, %p223
      %p225 = scmp.ne.s32.totalorder %s216, %s217
      %p226 = scmp.eq.s32.totalorder %s33, 0
      %p227 = por %p225, %p226
      %p228 = scmp.ne.s32.totalorder %s216, %s217
      %p229 = scmp.eq.s32.totalorder %s34, 1
      %p230 = por %p228, %p229
      %p232 = scmp.ne.s32.totalorder %s217, %s231
      %p233 = scmp.eq.s32.totalorder %s34, 0
      %p234 = por %p232, %p233
      %s236 = sadd.s32 %s235, 1
      %p239 = scmp.eq.s32.totalorder %s28, 1
      %p240 = scmp.ne.s32.totalorder %s235, %s237
      %p241 = scmp.eq.s32.totalorder %s28, 0
      %p242 = por %p240, %p241
      %p243 = scmp.ne.s32.totalorder %s235, %s237
      %p244 = scmp.eq.s32.totalorder %s33, 1
      %p245 = por %p243, %p244
      %p246 = scmp.ne.s32.totalorder %s237, %s238
      %p247 = scmp.eq.s32.totalorder %s33, 0
      %p248 = por %p246, %p247
      %p249 = scmp.ne.s32.totalorder %s237, %s238
      %p250 = scmp.eq.s32.totalorder %s34, 1
      %p251 = por %p249, %p250
      %p253 = scmp.ne.s32.totalorder %s238, %s252
      %p254 = scmp.eq.s32.totalorder %s34, 0
      %p255 = por %p253, %p254
      %s257 = sadd.s32 %s256, 1
      %p260 = scmp.eq.s32.totalorder %s28, 1
      %p261 = scmp.ne.s32.totalorder %s256, %s258
      %p262 = scmp.eq.s32.totalorder %s28, 0
      %p263 = por %p261, %p262
      %p264 = scmp.ne.s32.totalorder %s256, %s258
      %p265 = scmp.eq.s32.totalorder %s33, 1
      %p266 = por %p264, %p265
      %p267 = scmp.ne.s32.totalorder %s258, %s259
      %p268 = scmp.eq.s32.totalorder %s33, 0
      %p269 = por %p267, %p268
      %p270 = scmp.ne.s32.totalorder %s258, %s259
      %p271 = scmp.eq.s32.totalorder %s34, 1
      %p272 = por %p270, %p271
      %p274 = scmp.ne.s32.totalorder %s259, %s273
      %p275 = scmp.eq.s32.totalorder %s34, 0
      %p276 = por %p274, %p275
      %s278 = sadd.s32 %s277, 1
      %p281 = scmp.eq.s32.totalorder %s28, 1
      %p282 = scmp.ne.s32.totalorder %s277, %s279
      %p283 = scmp.eq.s32.totalorder %s28, 0
      %p284 = por %p282, %p283
      %p285 = scmp.ne.s32.totalorder %s277, %s279
      %p286 = scmp.eq.s32.totalorder %s33, 1
      %p287 = por %p285, %p286
      %p288 = scmp.ne.s32.totalorder %s279, %s280
      %p289 = scmp.eq.s32.totalorder %s33, 0
      %p290 = por %p288, %p289
      %p291 = scmp.ne.s32.totalorder %s279, %s280
      %p292 = scmp.eq.s32.totalorder %s34, 1
      %p293 = por %p291, %p292
      %p295 = scmp.ne.s32.totalorder %s280, %s294
      %p296 = scmp.eq.s32.totalorder %s34, 0
      %p297 = por %p295, %p296
      %s299 = sadd.s32 %s298, 1
      %p302 = scmp.eq.s32.totalorder %s28, 1
      %p303 = scmp.ne.s32.totalorder %s298, %s300
      %p304 = scmp.eq.s32.totalorder %s28, 0
      %p305 = por %p303, %p304
      %p306 = scmp.ne.s32.totalorder %s298, %s300
      %p307 = scmp.eq.s32.totalorder %s33, 1
      %p308 = por %p306, %p307
      %p309 = scmp.ne.s32.totalorder %s300, %s301
      %p310 = scmp.eq.s32.totalorder %s33, 0
      %p311 = por %p309, %p310
      %p312 = scmp.ne.s32.totalorder %s300, %s301
      %p313 = scmp.eq.s32.totalorder %s34, 1
      %p314 = por %p312, %p313
      %p316 = scmp.ne.s32.totalorder %s301, %s315
      %p317 = scmp.eq.s32.totalorder %s34, 0
      %p318 = por %p316, %p317
      %s320 = sadd.s32 %s319, 1
      %p323 = scmp.eq.s32.totalorder %s28, 1
      %p324 = scmp.ne.s32.totalorder %s319, %s321
      %p325 = scmp.eq.s32.totalorder %s28, 0
      %p326 = por %p324, %p325
      %p327 = scmp.ne.s32.totalorder %s319, %s321
      %p328 = scmp.eq.s32.totalorder %s33, 1
      %p329 = por %p327, %p328
      %p330 = scmp.ne.s32.totalorder %s321, %s322
      %p331 = scmp.eq.s32.totalorder %s33, 0
      %p332 = por %p330, %p331
      %p333 = scmp.ne.s32.totalorder %s321, %s322
      %p334 = scmp.eq.s32.totalorder %s34, 1
      %p335 = por %p333, %p334
      %p337 = scmp.ne.s32.totalorder %s322, %s336
      %p338 = scmp.eq.s32.totalorder %s34, 0
      %p339 = por %p337, %p338
      %s341 = sadd.s32 %s340, 1
      %p344 = scmp.eq.s32.totalorder %s28, 1
      %p345 = scmp.ne.s32.totalorder %s340, %s342
      %p346 = scmp.eq.s32.totalorder %s28, 0
      %p347 = por %p345, %p346
      %p348 = scmp.ne.s32.totalorder %s340, %s342
      %p349 = scmp.eq.s32.totalorder %s33, 1
      %p350 = por %p348, %p349
      %p351 = scmp.ne.s32.totalorder %s342, %s343
      %p352 = scmp.eq.s32.totalorder %s33, 0
      %p353 = por %p351, %p352
      %p354 = scmp.ne.s32.totalorder %s342, %s343
      %p355 = scmp.eq.s32.totalorder %s34, 1
      %p356 = por %p354, %p355
      %p358 = scmp.ne.s32.totalorder %s343, %s357
      %p359 = scmp.eq.s32.totalorder %s34, 0
      %p360 = por %p358, %p359
      %s362 = sadd.s32 %s361, 1
      %p365 = scmp.eq.s32.totalorder %s28, 1
      %p366 = scmp.ne.s32.totalorder %s361, %s363
      %p367 = scmp.eq.s32.totalorder %s28, 0
      %p368 = por %p366, %p367
      %p369 = scmp.ne.s32.totalorder %s361, %s363
      %p370 = scmp.eq.s32.totalorder %s33, 1
      %p371 = por %p369, %p370
      %p372 = scmp.ne.s32.totalorder %s363, %s364
      %p373 = scmp.eq.s32.totalorder %s33, 0
      %p374 = por %p372, %p373
      %p375 = scmp.ne.s32.totalorder %s363, %s364
      %p376 = scmp.eq.s32.totalorder %s34, 1
      %p377 = por %p375, %p376
      %p379 = scmp.ne.s32.totalorder %s364, %s378
      %p380 = scmp.eq.s32.totalorder %s34, 0
      %p381 = por %p379, %p380
      %s383 = sadd.s32 %s382, 1
      %p386 = scmp.eq.s32.totalorder %s28, 1
      %p387 = scmp.ne.s32.totalorder %s382, %s384
      %p388 = scmp.eq.s32.totalorder %s28, 0
      %p389 = por %p387, %p388
      %p390 = scmp.ne.s32.totalorder %s382, %s384
      %p391 = scmp.eq.s32.totalorder %s33, 1
      %p392 = por %p390, %p391
      %p393 = scmp.ne.s32.totalorder %s384, %s385
      %p394 = scmp.eq.s32.totalorder %s33, 0
      %p395 = por %p393, %p394
      %p396 = scmp.ne.s32.totalorder %s384, %s385
      %p397 = scmp.eq.s32.totalorder %s34, 1
      %p398 = por %p396, %p397
      %p400 = scmp.ne.s32.totalorder %s385, %s399
      %p401 = scmp.eq.s32.totalorder %s34, 0
      %p402 = por %p400, %p401
      %s403 = ssub.s32 %s28, %s35
      %p404 = scmp.eq.s32.totalorder %s403, 0
      %s406 = sadd.s32 %s405, 1
      %s407 = scalar_select %p404, %s405, %s406
      %p410 = pneg %p404
      %p411 = scmp.eq.s32.totalorder %s28, 1
      %p412 = por %p410, %p411
      %p413 = scmp.ne.s32.totalorder %s405, %s408
      %p414 = scmp.eq.s32.totalorder %s28, 0
      %p415 = por %p413, %p414
      %p416 = scmp.ne.s32.totalorder %s405, %s408
      %p417 = scmp.eq.s32.totalorder %s33, 1
      %p418 = por %p416, %p417
      %p419 = scmp.ne.s32.totalorder %s408, %s409
      %p420 = scmp.eq.s32.totalorder %s33, 0
      %p421 = por %p419, %p420
      %p422 = scmp.ne.s32.totalorder %s408, %s409
      %p423 = scmp.eq.s32.totalorder %s34, 1
      %p424 = por %p422, %p423
      %p426 = scmp.ne.s32.totalorder %s409, %s425
      %p427 = scmp.eq.s32.totalorder %s34, 0
      %p428 = por %p426, %p427
      %s429 = ssub.s32 %s28, %s35
      %p430 = scmp.eq.s32.totalorder %s429, 0
      %s432 = sadd.s32 %s431, 1
      %s433 = scalar_select %p430, %s431, %s432
      %p436 = pneg %p430
      %p437 = scmp.eq.s32.totalorder %s28, 1
      %p438 = por %p436, %p437
      %p439 = scmp.ne.s32.totalorder %s431, %s434
      %p440 = scmp.eq.s32.totalorder %s28, 0
      %p441 = por %p439, %p440
      %p442 = scmp.ne.s32.totalorder %s431, %s434
      %p443 = scmp.eq.s32.totalorder %s33, 1
      %p444 = por %p442, %p443
      %p445 = scmp.ne.s32.totalorder %s434, %s435
      %p446 = scmp.eq.s32.totalorder %s33, 0
      %p447 = por %p445, %p446
      %p448 = scmp.ne.s32.totalorder %s434, %s435
      %p449 = scmp.eq.s32.totalorder %s34, 1
      %p450 = por %p448, %p449
      %p452 = scmp.ne.s32.totalorder %s435, %s451
      %p453 = scmp.eq.s32.totalorder %s34, 0
      %p454 = por %p452, %p453
      %p455 = scmp.le.s32.totalorder 1, %s28
      %p456 = scmp.lt.s32.totalorder %s28, 3
      %p457 = pnand %p455, %p456
      %p458 = pneg %p457
      // Predicated region
      $region9: #{forward.1} parent=5 // pred_check
        _
      $region10: #{forward.1} parent=5 // pred_check_branch
        %460 = sbr.rel (%p457) target = $region12
      $region11: #{forward.1} parent=5 // pred_region
        %s461 = ssub.s32 %s28, 1
        // Predicated region
        $region13: #{forward.1} parent=11 // pred_check
          %p462 = pneg %p101
        $region14: #{forward.1} parent=11 // pred_check_branch
          %464 = sbr.rel (%p462) target = $region16
        $region15: #{forward.1} parent=11 // pred_region
          _
        $region16: #{forward.1} parent=11 // pred_fallthru
          _
        // Predicated region
        $region17: #{forward.1} parent=11 // pred_check
          %p465 = pneg %p122
        $region18: #{forward.1} parent=11 // pred_check_branch
          %467 = sbr.rel (%p465) target = $region20
        $region19: #{forward.1} parent=11 // pred_region
          _
        $region20: #{forward.1} parent=11 // pred_fallthru
          _
        // Predicated region
        $region21: #{forward.1} parent=11 // pred_check
          %p468 = pneg %p143
        $region22: #{forward.1} parent=11 // pred_check_branch
          %470 = sbr.rel (%p468) target = $region24
        $region23: #{forward.1} parent=11 // pred_region
          _
        $region24: #{forward.1} parent=11 // pred_fallthru
          _
        // Predicated region
        $region25: #{forward.1} parent=11 // pred_check
          %p471 = pneg %p164
        $region26: #{forward.1} parent=11 // pred_check_branch
          %473 = sbr.rel (%p471) target = $region28
        $region27: #{forward.1} parent=11 // pred_region
          _
        $region28: #{forward.1} parent=11 // pred_fallthru
          _
        // Predicated region
        $region29: #{forward.1} parent=11 // pred_check
          %p474 = pneg %p185
        $region30: #{forward.1} parent=11 // pred_check_branch
          %476 = sbr.rel (%p474) target = $region32
        $region31: #{forward.1} parent=11 // pred_region
          _
        $region32: #{forward.1} parent=11 // pred_fallthru
          _
        // Predicated region
        $region33: #{forward.1} parent=11 // pred_check
          %p477 = pneg %p206
        $region34: #{forward.1} parent=11 // pred_check_branch
          %479 = sbr.rel (%p477) target = $region36
        $region35: #{forward.1} parent=11 // pred_region
          _
        $region36: #{forward.1} parent=11 // pred_fallthru
          _
        // Predicated region
        $region37: #{forward.1} parent=11 // pred_check
          %p480 = pneg %p227
        $region38: #{forward.1} parent=11 // pred_check_branch
          %482 = sbr.rel (%p480) target = $region40
        $region39: #{forward.1} parent=11 // pred_region
          _
        $region40: #{forward.1} parent=11 // pred_fallthru
          _
        // Predicated region
        $region41: #{forward.1} parent=11 // pred_check
          %p483 = pneg %p248
        $region42: #{forward.1} parent=11 // pred_check_branch
          %485 = sbr.rel (%p483) target = $region44
        $region43: #{forward.1} parent=11 // pred_region
          _
        $region44: #{forward.1} parent=11 // pred_fallthru
          _
        // Predicated region
        $region45: #{forward.1} parent=11 // pred_check
          %p486 = pneg %p269
        $region46: #{forward.1} parent=11 // pred_check_branch
          %488 = sbr.rel (%p486) target = $region48
        $region47: #{forward.1} parent=11 // pred_region
          _
        $region48: #{forward.1} parent=11 // pred_fallthru
          _
        // Predicated region
        $region49: #{forward.1} parent=11 // pred_check
          %p489 = pneg %p290
        $region50: #{forward.1} parent=11 // pred_check_branch
          %491 = sbr.rel (%p489) target = $region52
        $region51: #{forward.1} parent=11 // pred_region
          _
        $region52: #{forward.1} parent=11 // pred_fallthru
          _
        // Predicated region
        $region53: #{forward.1} parent=11 // pred_check
          %p492 = pneg %p311
        $region54: #{forward.1} parent=11 // pred_check_branch
          %494 = sbr.rel (%p492) target = $region56
        $region55: #{forward.1} parent=11 // pred_region
          _
        $region56: #{forward.1} parent=11 // pred_fallthru
          _
        // Predicated region
        $region57: #{forward.1} parent=11 // pred_check
          %p495 = pneg %p332
        $region58: #{forward.1} parent=11 // pred_check_branch
          %497 = sbr.rel (%p495) target = $region60
        $region59: #{forward.1} parent=11 // pred_region
          _
        $region60: #{forward.1} parent=11 // pred_fallthru
          _
        // Predicated region
        $region61: #{forward.1} parent=11 // pred_check
          %p498 = pneg %p353
        $region62: #{forward.1} parent=11 // pred_check_branch
          %500 = sbr.rel (%p498) target = $region64
        $region63: #{forward.1} parent=11 // pred_region
          _
        $region64: #{forward.1} parent=11 // pred_fallthru
          _
        // Predicated region
        $region65: #{forward.1} parent=11 // pred_check
          %p501 = pneg %p374
        $region66: #{forward.1} parent=11 // pred_check_branch
          %503 = sbr.rel (%p501) target = $region68
        $region67: #{forward.1} parent=11 // pred_region
          _
        $region68: #{forward.1} parent=11 // pred_fallthru
          _
        // Predicated region
        $region69: #{forward.1} parent=11 // pred_check
          %p504 = pneg %p395
        $region70: #{forward.1} parent=11 // pred_check_branch
          %506 = sbr.rel (%p504) target = $region72
        $region71: #{forward.1} parent=11 // pred_region
          _
        $region72: #{forward.1} parent=11 // pred_fallthru
          _
      $region12: #{forward.1} parent=5 // pred_fallthru
        _
      %p507 = scmp.lt.s32.totalorder %s28, 2
      // Predicated region
      $region73: #{forward.1} parent=5 // pred_check
        %p508 = pneg %p507
      $region74: #{forward.1} parent=5 // pred_check_branch
        %510 = sbr.rel (%p508) target = $region76
      $region75: #{forward.1} parent=5 // pred_region
        // Predicated region
        $region77: #{forward.1} parent=75 // pred_check
          %p511 = pneg %p48
        $region78: #{forward.1} parent=75 // pred_check_branch
          %513 = sbr.rel (%p511) target = $region80
        $region79: #{forward.1} parent=75 // pred_region
          %p514 = scmp.lt.s32.totalorder %s28, 1
          %s515 = scalar_select %p514, %s28, 1
          %s516 = smul.addr %s515, 3
          %s517 = smul.addr %s516, 8
          %s518 = scalar_lea.vmem %s0, %s517
        $region80: #{forward.1} parent=75 // pred_fallthru
          _
        // Predicated region
        $region81: #{forward.1} parent=75 // pred_check
          %p519 = pneg %p74
        $region82: #{forward.1} parent=75 // pred_check_branch
          %521 = sbr.rel (%p519) target = $region84
        $region83: #{forward.1} parent=75 // pred_region
          %p522 = scmp.lt.s32.totalorder %s28, 1
          %s523 = scalar_select %p522, %s28, 1
          %s524 = smul.addr %s523, 3
          %s525 = smul.addr %s524, 8
          %s526 = scalar_lea.vmem %s1, %s525
        $region84: #{forward.1} parent=75 // pred_fallthru
          _
      $region76: #{forward.1} parent=5 // pred_fallthru
        _
      %p527 = scmp.le.s32.totalorder 1, %s28
      %p528 = scmp.lt.s32.totalorder %s28, 3
      %p529 = pnand %p527, %p528
      %p530 = pneg %p529
      // Predicated region
      $region85: #{forward.1} parent=5 // pred_check
        _
      $region86: #{forward.1} parent=5 // pred_check_branch
        %532 = sbr.rel (%p529) target = $region88
      $region87: #{forward.1} parent=5 // pred_region
        %s533 = ssub.s32 %s28, 1
        %p534 = scmp.lt.s32.totalorder %s33, 1
        %s535 = scalar_select %p534, %s33, 1
        %s536 = smul.addr %s535, 3
        %s537 = smul.addr %s536, 8
        %s538 = scalar_lea.vmem %s0, %s537
        %p539 = pneg %p54
        %p540 = pneg %p51
        %p541 = scmp.lt.s32.totalorder %s33, 1
        %s542 = scalar_select %p541, %s33, 1
        %s543 = smul.addr %s542, 3
        %s544 = smul.addr %s543, 8
        %s545 = scalar_lea.vmem %s1, %s544
        %p546 = pneg %p80
        %p547 = pneg %p77
        %p548 = pneg %p101
        %p549 = pneg %p98
        %p550 = pneg %p122
        %p551 = pneg %p119
        %p552 = pneg %p143
        %p553 = pneg %p140
        %p554 = pneg %p164
        %p555 = pneg %p161
        %p556 = pneg %p185
        %p557 = pneg %p182
        %p558 = pneg %p206
        %p559 = pneg %p203
        %p560 = pneg %p227
        %p561 = pneg %p224
        %p562 = pneg %p248
        %p563 = pneg %p245
        %p564 = pneg %p269
        %p565 = pneg %p266
        %p566 = pneg %p290
        %p567 = pneg %p287
        %p568 = pneg %p311
        %p569 = pneg %p308
        %p570 = pneg %p332
        %p571 = pneg %p329
        %p572 = pneg %p353
        %p573 = pneg %p350
        %p574 = pneg %p374
        %p575 = pneg %p371
        %p576 = pneg %p395
        %p577 = pneg %p392
        %p578 = pneg %p421
        %p579 = pneg %p418
        %s580 = sand.u32 %s408, 1
        %s581 = scalar_lea.sflag [#allocation3], %s580
        %s582 = sand.u32 %s408, 1
        %s583 = smul.addr %s582, 16
        %s584 = scalar_lea.vmem [#allocation2], %s583
        %p585 = pneg %p447
        %p586 = pneg %p444
        %p587 = scmp.lt.s32.totalorder %s33, 1
        %s588 = scalar_select %p587, %s33, 1
        %s589 = scalar_lea.vmem %s18, %s588
        %p590 = scmp.lt.s32.totalorder %s33, 1
        %s591 = scalar_select %p590, %s33, 1
        %s592 = smul.addr %s591, 3
        %s593 = smul.addr %s592, 8
        %s594 = scalar_lea.vmem %s0, %s593
        %p595 = scmp.lt.s32.totalorder %s33, 1
        %s596 = scalar_select %p595, %s33, 1
        %s597 = smul.addr %s596, 3
        %s598 = smul.addr %s597, 8
        %s599 = scalar_lea.vmem %s1, %s598
        %p600 = scmp.lt.s32.totalorder %s33, 1
        %s601 = scalar_select %p600, %s33, 1
        %s602 = scalar_lea.vmem %s18, %s601
        %v604 = vld [vmem:[%s594] sm:$0xff]
        %v605 = vld [vmem:[%s594 + $0x8] sm:$0xff]
        %v606 = vld [vmem:[%s594 + $0x10] sm:$0x1]
        %v607 = vld [vmem:[%s599] sm:$0xff]
        %v608 = vld [vmem:[%s599 + $0x8] sm:$0xff]
        %v609 = vld [vmem:[%s599 + $0x10] sm:$0x1]
        %v610 = vld [vmem:[%s3] sm:$0x1]
        %v611 = vld [vmem:[%s3 + $0x1] sm:$0x1]
        %v612 = vld [vmem:[%s3 + $0x2] sm:$0x1]
        %v613 = vld [vmem:[%s3 + $0x3] sm:$0x1]
        %v614 = vld [vmem:[%s3 + $0x4] sm:$0x1]
        %v615 = vld [vmem:[%s3 + $0x5] sm:$0x1]
        %v616 = vpack.c.bf16 %v605, %v604
        %v617 = vpack.c.bf16 %v606, %v606
        %v618 = vld [vmem:[%s2] sm:$0xf]
        %v619 = vld [vmem:[%s2 + $0x4] sm:$0xf]
        %v620 = vld [vmem:[%s2 + $0x8] sm:$0xf]
        %v621 = vld [vmem:[%s2 + $0xc] sm:$0xf]
        %v622 = vld [vmem:[%s2 + $0x10] sm:$0xf]
        %v623 = vld [vmem:[%s2 + $0x14] sm:$0xf]
        %v624 = vperm.slane %v610, 0
        %v631 = vunpack.c.l.b16 %v618
        %v632 = vunpack.c.l.b16 %v619
        %v633 = vunpack.c.l.b16 %v620
        %v634 = vunpack.c.l.b16 %v621
        %v635 = vunpack.c.l.b16 %v622
        %v636 = vunpack.c.l.b16 %v623
        %v637 = vpack.c.b16 %v632, %v631
        %v638 = vpack.c.b16 %v634, %v633
        %v639 = vpack.c.b16 %v636, %v635
        %vm643 = vcmask 392192
        %v645 = vsel %vm643, %v616, 0
        %v648 = vsel %vm643, %v617, 0
        %650 = vmatpush.bf16.msra.mxu0 0
        %651 = vmatpush.bf16.msra.mxu0 0
        %652 = vmatpush.bf16.msra.mxu0 0
        %653 = vmatpush.bf16.msra.mxu0 0
        %654 = vmatpush.bf16.msra.mxu0 0
        %655 = vmatpush.bf16.msra.mxu0 %v639
        %656 = vmatpush.bf16.msra.mxu0 %v638
        %657 = vmatpush.bf16.msra.mxu0 %v637
        %658 = vmatmul.bf16.gmra.mxu0 %v645
        %v659 = vpop.f32.mrf.mxu0
        %v660 = vadd.f32 %v624, %v659
        %v661 = vpop.f32.mrf.mxu0
        %v662 = vadd.f32 %v624, %v661
        %663 = vmatmul.bf16.gmra.mxu0 %v648
        %v664 = vpop.f32.mrf.mxu0
        %v665 = vadd.f32 %v624, %v664
        %v666 = vpop.f32.mrf.mxu0
        %667 = vdwg.mxu0
        %v668 = vsub.f32 1.0, %v607
        %v669 = vsub.f32 1.0, %v608
        %v670 = vsub.f32 1.0, %v609
        %672 = vset.pattern.permute.xlu0 0
        %673 = vperm.xlu0 %672, %v668
        %v674 = vpop.permute.xlu0 %673
        %677 = vset.pattern.permute.xlu0 0
        %678 = vperm.xlu0 %677, %v669
        %v679 = vpop.permute.xlu0 %678
        %682 = vset.pattern.permute.xlu0 0
        %683 = vperm.xlu0 %682, %v670
        %v684 = vpop.permute.xlu0 %683
        %v686 = vmul.f32 %v660, %v674
        %v687 = vmul.f32 %v662, %v679
        %v688 = vmul.f32 %v665, %v684
        %v689 = vld [vmem:[%s4] sm:$0xff]
        %v690 = vld [vmem:[%s4 + $0x8] sm:$0xff]
        %v691 = vld [vmem:[%s4 + $0x10] sm:$0x1]
        %693 = vset.pattern.permute.xlu0 0
        %694 = vperm.xlu0 %693, %v607
        %v695 = vpop.permute.xlu0 %694
        %698 = vset.pattern.permute.xlu0 0
        %699 = vperm.xlu0 %698, %v608
        %v700 = vpop.permute.xlu0 %699
        %703 = vset.pattern.permute.xlu0 0
        %704 = vperm.xlu0 %703, %v609
        %v705 = vpop.permute.xlu0 %704
        %v707 = vmul.f32 %v689, %v695
        %v708 = vmul.f32 %v690, %v700
        %v709 = vmul.f32 %v691, %v705
        %v710 = vadd.f32 %v686, %v707
        %v711 = vadd.f32 %v687, %v708
        %v712 = vadd.f32 %v688, %v709
        %v713 = vld [vmem:[%s5] sm:$0xff]
        %v714 = vld [vmem:[%s5 + $0x8] sm:$0xff]
        %v715 = vld [vmem:[%s5 + $0x10] sm:$0x1]
        %v716 = vadd.f32 %v710, %v713
        %v717 = vadd.f32 %v711, %v714
        %v718 = vadd.f32 %v712, %v715
        %v719 = vld [vmem:[%s6] sm:$0xf]
        %v720 = vld [vmem:[%s6 + $0x4] sm:$0xf]
        %v721 = vld [vmem:[%s6 + $0x8] sm:$0xf]
        %v722 = vld [vmem:[%s6 + $0xc] sm:$0xf]
        %v723 = vld [vmem:[%s7] sm:$0xf]
        %v724 = vld [vmem:[%s7 + $0x4] sm:$0xf]
        %v725 = vld [vmem:[%s7 + $0x8] sm:$0xf]
        %v726 = vld [vmem:[%s7 + $0xc] sm:$0xf]
        %v727 = vld [vmem:[%s8] sm:$0xf]
        %v728 = vld [vmem:[%s8 + $0x4] sm:$0xf]
        %v729 = vld [vmem:[%s8 + $0x8] sm:$0xf]
        %v730 = vld [vmem:[%s8 + $0xc] sm:$0xf]
        %v731 = vld [vmem:[%s9] sm:$0xf]
        %v732 = vld [vmem:[%s9 + $0x4] sm:$0xf]
        %v733 = vld [vmem:[%s9 + $0x8] sm:$0xf]
        %v734 = vld [vmem:[%s9 + $0xc] sm:$0xf]
        %v735 = vld [vmem:[%s9 + $0x10] sm:$0xf]
        %v736 = vld [vmem:[%s9 + $0x14] sm:$0xf]
        %v737 = vld [vmem:[%s9 + $0x18] sm:$0xf]
        %v738 = vld [vmem:[%s9 + $0x1c] sm:$0xf]
        %v739 = vld [vmem:[%s9 + $0x20] sm:$0xf]
        %v740 = vld [vmem:[%s9 + $0x24] sm:$0xf]
        %v741 = vld [vmem:[%s9 + $0x28] sm:$0xf]
        %v742 = vld [vmem:[%s9 + $0x2c] sm:$0xf]
        %v743 = vld [vmem:[%s9 + $0x30] sm:$0xf]
        %v744 = vld [vmem:[%s9 + $0x34] sm:$0xf]
        %v745 = vld [vmem:[%s9 + $0x38] sm:$0xf]
        %v746 = vld [vmem:[%s9 + $0x3c] sm:$0xf]
        %v747 = vld [vmem:[%s10] sm:$0xff]
        %vm748 = vcmask 261120
        %v749 = vsel %vm748, %v716, 0.0
        %750 = vadd.xlane.f32.xlu0 %v749
        %v751 = vpop.xlane.xlu0 %750
        %v752 = vsel %vm748, %v717, 0.0
        %753 = vadd.xlane.f32.xlu0 %v752
        %v754 = vpop.xlane.xlu0 %753
        %vm755 = vcmask 253952
        %v756 = vsel %vm755, %v718, 0.0
        %757 = vadd.xlane.f32.xlu0 %v756
        %v758 = vpop.xlane.xlu0 %757
        %v759 = vrcp.pop 32.0
        %v760 = vmul.f32 32.0, %v759
        %v761 = vsub.f32 1.0, %v760
        %v762 = vmul.f32 %v759, %v761
        %v763 = vadd.f32 %v759, %v762
        %vm764 = vweird.f32 %v759
        %v765 = vsel %vm764, %v759, %v763
        %v766 = vmul.f32 %v751, %v765
        %v767 = vmul.f32 %v754, %v765
        %v768 = vmul.f32 %v758, %v765
        %v769 = vsub.f32 %v716, %v766
        %v770 = vsub.f32 %v717, %v767
        %v771 = vsub.f32 %v718, %v768
        %v772 = vmul.f32 %v769, %v769
        %v773 = vmul.f32 %v770, %v770
        %v774 = vmul.f32 %v771, %v771
        %v775 = vsel %vm748, %v772, 0.0
        %776 = vadd.xlane.f32.xlu0 %v775
        %v777 = vpop.xlane.xlu0 %776
        %v778 = vsel %vm748, %v773, 0.0
        %779 = vadd.xlane.f32.xlu0 %v778
        %v780 = vpop.xlane.xlu0 %779
        %v781 = vsel %vm755, %v774, 0.0
        %782 = vadd.xlane.f32.xlu0 %v781
        %v783 = vpop.xlane.xlu0 %782
        %v784 = vmul.f32 %v777, %v765
        %v785 = vmul.f32 %v780, %v765
        %v786 = vmul.f32 %v783, %v765
        %v787 = vadd.f32 %v784, 1e-05
        %v788 = vadd.f32 %v785, 1e-05
        %v789 = vadd.f32 %v786, 1e-05
        %v790 = vrsqrt.pop %v787
        %v791 = vmul.f32 %v790, %v787
        %v792 = vmul.f32 %v791, %v790
        %v793 = vmul.f32 0.5, %v792
        %v794 = vsub.f32 1.5, %v793
        %v795 = vmul.f32 %v790, %v794
        %vm796 = vweird.f32 %v787
        %vm797 = vweird.f32 %v790
        %vm798 = vmor %vm796, %vm797
        %v799 = vsel %vm798, %v790, %v795
        %v800 = vrsqrt.pop %v788
        %v801 = vmul.f32 %v800, %v788
        %v802 = vmul.f32 %v801, %v800
        %v803 = vmul.f32 0.5, %v802
        %v804 = vsub.f32 1.5, %v803
        %v805 = vmul.f32 %v800, %v804
        %vm806 = vweird.f32 %v788
        %vm807 = vweird.f32 %v800
        %vm808 = vmor %vm806, %vm807
        %v809 = vsel %vm808, %v800, %v805
        %v810 = vrsqrt.pop %v789
        %v811 = vmul.f32 %v810, %v789
        %v812 = vmul.f32 %v811, %v810
        %v813 = vmul.f32 0.5, %v812
        %v814 = vsub.f32 1.5, %v813
        %v815 = vmul.f32 %v810, %v814
        %vm816 = vweird.f32 %v789
        %vm817 = vweird.f32 %v810
        %vm818 = vmor %vm816, %vm817
        %v819 = vsel %vm818, %v810, %v815
        %v820 = vmul.f32 %v769, %v799
        %v821 = vmul.f32 %v770, %v809
        %v822 = vmul.f32 %v771, %v819
        %v823 = vperm.slane %v747, 0
        %v824 = vmul.f32 %v820, %v823
        %v825 = vmul.f32 %v821, %v823
        %v826 = vmul.f32 %v822, %v823
        %v827 = vperm.slane %v747, 1
        %v828 = vadd.f32 %v824, %v827
        %v829 = vadd.f32 %v825, %v827
        %v830 = vadd.f32 %v826, %v827
        %v831 = vpack.c.bf16 %v829, %v828
        %v832 = vpack.c.bf16 %v830, %v830
        %v833 = vperm.slane %v747, 6
        %v838 = vunpack.c.l.b16 %v719
        %v839 = vunpack.c.l.b16 %v720
        %v840 = vunpack.c.l.b16 %v721
        %v841 = vunpack.c.l.b16 %v722
        %v842 = vpack.c.b16 %v839, %v838
        %v843 = vpack.c.b16 %v841, %v840
        %v847 = vsel %vm748, %v831, 0
        %v850 = vsel %vm748, %v832, 0
        %852 = vmatpush.bf16.msra.mxu0 0
        %853 = vmatpush.bf16.msra.mxu0 0
        %854 = vmatpush.bf16.msra.mxu0 0
        %855 = vmatpush.bf16.msra.mxu0 0
        %856 = vmatpush.bf16.msra.mxu0 0
        %857 = vmatpush.bf16.msra.mxu0 0
        %858 = vmatpush.bf16.msra.mxu0 %v843
        %859 = vmatpush.bf16.msra.mxu0 %v842
        %860 = vmatmul.bf16.gmra.mxu0 %v847
        %v861 = vpop.f32.mrf.mxu0
        %v862 = vadd.f32 %v833, %v861
        %v863 = vpop.f32.mrf.mxu0
        %v864 = vadd.f32 %v833, %v863
        %865 = vmatmul.bf16.gmra.mxu0 %v850
        %v866 = vpop.f32.mrf.mxu0
        %v867 = vadd.f32 %v833, %v866
        %v868 = vpop.f32.mrf.mxu0
        %869 = vdwg.mxu0
        %873 = vrot.lane.b32.xlu0 %v862, 96
        %v874 = vpop.permute.xlu0 %873
        %875 = vrot.lane.b32.xlu0 %v864, 96
        %v876 = vpop.permute.xlu0 %875
        %877 = vrot.lane.b32.xlu0 %v867, 96
        %v878 = vpop.permute.xlu0 %877
        %vm879 = vcmask 64512
        %v880 = vsel %vm879, %v862, 0
        %v882 = vsel %vm879, %v864, 0
        %v884 = vsel %vm879, %v867, 0
        %v886 = vsel %vm879, %v874, 0
        %v888 = vsel %vm879, %v876, 0
        %v890 = vsel %vm879, %v878, 0
        %892 = vmatpush.xpose.msra.mxu0 0.0
        %893 = vmatpush.xpose.msra.mxu0 0.0
        %894 = vmatpush.xpose.msra.mxu0 0.0
        %895 = vmatpush.xpose.msra.mxu0 0.0
        %896 = vmatpush.xpose.msra.mxu0 0.0
        %897 = vmatpush.xpose.msra.mxu0 0.0
        %898 = vmatpush.xpose.msra.mxu0 0.0
        %899 = vmatpush.xpose.msra.mxu0 0.0
        %900 = vmatpush.xpose.msra.mxu0 0.0
        %901 = vmatpush.xpose.msra.mxu0 0.0
        %902 = vmatpush.xpose.msra.mxu0 0.0
        %903 = vmatpush.xpose.msra.mxu0 0.0
        %904 = vmatpush.xpose.msra.mxu0 0.0
        %905 = vmatpush.xpose.msra.mxu0 %v890
        %906 = vmatpush.xpose.msra.mxu0 %v888
        %907 = vmatpush.xpose.msra.mxu0 %v886
        %908 = vmatmul.f32.gmra.mxu0 %v880
        %v909 = vpop.f32.mrf.mxu0
        %v910 = vadd.f32 0.0, %v909
        %911 = vmatmul.f32.gmra.mxu0 %v882
        %v912 = vpop.f32.mrf.mxu0
        %v913 = vadd.f32 0.0, %v912
        %914 = vmatmul.f32.gmra.mxu0 %v884
        %v915 = vpop.f32.mrf.mxu0
        %v916 = vadd.f32 0.0, %v915
        %917 = vdwg.mxu0
        %vm918 = vcmask 138240
        %v919 = vsel %vm918, %v910, -inf
        %920 = vmax.xlane.f32.xlu0 %v919
        %v921 = vpop.xlane.xlu0 %920
        %v922 = vsel %vm918, %v913, -inf
        %923 = vmax.xlane.f32.xlu0 %v922
        %v924 = vpop.xlane.xlu0 %923
        %vm925 = vcmask 131072
        %v926 = vsel %vm925, %v916, -inf
        %927 = vmax.xlane.f32.xlu0 %v926
        %v928 = vpop.xlane.xlu0 %927
        %v929 = vsub.f32 %v910, %v921
        %v930 = vsub.f32 %v913, %v924
        %v931 = vsub.f32 %v916, %v928
        %v932 = vmul.f32 %v929, 1.442695
        %v933 = vpow.pop %v932
        %v934 = vmul.f32 %v930, 1.442695
        %v935 = vpow.pop %v934
        %v936 = vmul.f32 %v931, 1.442695
        %v937 = vpow.pop %v936
        %v938 = vsel %vm918, %v933, 0.0
        %939 = vadd.xlane.f32.xlu0 %v938
        %v940 = vpop.xlane.xlu0 %939
        %v941 = vsel %vm918, %v935, 0.0
        %942 = vadd.xlane.f32.xlu0 %v941
        %v943 = vpop.xlane.xlu0 %942
        %v944 = vsel %vm925, %v937, 0.0
        %945 = vadd.xlane.f32.xlu0 %v944
        %v946 = vpop.xlane.xlu0 %945
        %v947 = vrcp.pop %v940
        %v948 = vrcp.pop %v943
        %v949 = vrcp.pop %v946
        %v950 = vmul.f32 %v933, %v947
        %v951 = vmul.f32 %v935, %v948
        %v952 = vmul.f32 %v937, %v949
        %953 = vrot.lane.b32.xlu0 %v862, 64
        %v954 = vpop.permute.xlu0 %953
        %955 = vrot.lane.b32.xlu0 %v864, 64
        %v956 = vpop.permute.xlu0 %955
        %957 = vrot.lane.b32.xlu0 %v867, 64
        %v958 = vpop.permute.xlu0 %957
        %v962 = vsel %vm918, %v950, 0
        %v965 = vsel %vm918, %v951, 0
        %v968 = vsel %vm918, %v952, 0
        %vm970 = vcmask 1040384
        %v971 = vsel %vm970, %v958, 0
        %973 = vmatpush.msra.mxu0 0.0
        %974 = vmatpush.msra.mxu0 0.0
        %975 = vmatpush.msra.mxu0 0.0
        %976 = vmatpush.msra.mxu0 0.0
        %977 = vmatpush.msra.mxu0 0.0
        %978 = vmatpush.msra.mxu0 0.0
        %979 = vmatpush.msra.mxu0 0.0
        %980 = vmatpush.msra.mxu0 0.0
        %981 = vmatpush.msra.mxu0 0.0
        %982 = vmatpush.msra.mxu0 0.0
        %983 = vmatpush.msra.mxu0 0.0
        %984 = vmatpush.msra.mxu0 0.0
        %985 = vmatpush.msra.mxu0 0.0
        %986 = vmatpush.msra.mxu0 %v971
        %987 = vmatpush.msra.mxu0 %v956
        %988 = vmatpush.msra.mxu0 %v954
        %989 = vmatmul.f32.gmra.mxu0 %v962
        %v990 = vpop.f32.mrf.mxu0
        %v991 = vadd.f32 0.0, %v990
        %992 = vmatmul.f32.gmra.mxu0 %v965
        %v993 = vpop.f32.mrf.mxu0
        %v994 = vadd.f32 0.0, %v993
        %995 = vmatmul.f32.gmra.mxu0 %v968
        %v996 = vpop.f32.mrf.mxu0
        %v997 = vadd.f32 0.0, %v996
        %998 = vdwg.mxu0
        %999 = vrot.lane.b32.xlu0 %v862, 120
        %v1000 = vpop.permute.xlu0 %999
        %1001 = vrot.lane.b32.xlu0 %v864, 120
        %v1002 = vpop.permute.xlu0 %1001
        %1003 = vrot.lane.b32.xlu0 %v867, 120
        %v1004 = vpop.permute.xlu0 %1003
        %1005 = vrot.lane.b32.xlu0 %v862, 88
        %v1006 = vpop.permute.xlu0 %1005
        %1007 = vrot.lane.b32.xlu0 %v864, 88
        %v1008 = vpop.permute.xlu0 %1007
        %1009 = vrot.lane.b32.xlu0 %v867, 88
        %v1010 = vpop.permute.xlu0 %1009
        %v1011 = vsel %vm879, %v1000, 0
        %v1013 = vsel %vm879, %v1002, 0
        %v1015 = vsel %vm879, %v1004, 0
        %v1017 = vsel %vm879, %v1006, 0
        %v1019 = vsel %vm879, %v1008, 0
        %v1021 = vsel %vm879, %v1010, 0
        %1023 = vmatpush.xpose.msra.mxu0 0.0
        %1024 = vmatpush.xpose.msra.mxu0 0.0
        %1025 = vmatpush.xpose.msra.mxu0 0.0
        %1026 = vmatpush.xpose.msra.mxu0 0.0
        %1027 = vmatpush.xpose.msra.mxu0 0.0
        %1028 = vmatpush.xpose.msra.mxu0 0.0
        %1029 = vmatpush.xpose.msra.mxu0 0.0
        %1030 = vmatpush.xpose.msra.mxu0 0.0
        %1031 = vmatpush.xpose.msra.mxu0 0.0
        %1032 = vmatpush.xpose.msra.mxu0 0.0
        %1033 = vmatpush.xpose.msra.mxu0 0.0
        %1034 = vmatpush.xpose.msra.mxu0 0.0
        %1035 = vmatpush.xpose.msra.mxu0 0.0
        %1036 = vmatpush.xpose.msra.mxu0 %v1021
        %1037 = vmatpush.xpose.msra.mxu0 %v1019
        %1038 = vmatpush.xpose.msra.mxu0 %v1017
        %1039 = vmatmul.f32.gmra.mxu0 %v1011
        %v1040 = vpop.f32.mrf.mxu0
        %v1041 = vadd.f32 0.0, %v1040
        %1042 = vmatmul.f32.gmra.mxu0 %v1013
        %v1043 = vpop.f32.mrf.mxu0
        %v1044 = vadd.f32 0.0, %v1043
        %1045 = vmatmul.f32.gmra.mxu0 %v1015
        %v1046 = vpop.f32.mrf.mxu0
        %v1047 = vadd.f32 0.0, %v1046
        %1048 = vdwg.mxu0
        %v1049 = vsel %vm918, %v1041, -inf
        %1050 = vmax.xlane.f32.xlu0 %v1049
        %v1051 = vpop.xlane.xlu0 %1050
        %v1052 = vsel %vm918, %v1044, -inf
        %1053 = vmax.xlane.f32.xlu0 %v1052
        %v1054 = vpop.xlane.xlu0 %1053
        %v1055 = vsel %vm925, %v1047, -inf
        %1056 = vmax.xlane.f32.xlu0 %v1055
        %v1057 = vpop.xlane.xlu0 %1056
        %v1058 = vsub.f32 %v1041, %v1051
        %v1059 = vsub.f32 %v1044, %v1054
        %v1060 = vsub.f32 %v1047, %v1057
        %v1061 = vmul.f32 %v1058, 1.442695
        %v1062 = vpow.pop %v1061
        %v1063 = vmul.f32 %v1059, 1.442695
        %v1064 = vpow.pop %v1063
        %v1065 = vmul.f32 %v1060, 1.442695
        %v1066 = vpow.pop %v1065
        %v1067 = vsel %vm918, %v1062, 0.0
        %1068 = vadd.xlane.f32.xlu0 %v1067
        %v1069 = vpop.xlane.xlu0 %1068
        %v1070 = vsel %vm918, %v1064, 0.0
        %1071 = vadd.xlane.f32.xlu0 %v1070
        %v1072 = vpop.xlane.xlu0 %1071
        %v1073 = vsel %vm925, %v1066, 0.0
        %1074 = vadd.xlane.f32.xlu0 %v1073
        %v1075 = vpop.xlane.xlu0 %1074
        %v1076 = vrcp.pop %v1069
        %v1077 = vrcp.pop %v1072
        %v1078 = vrcp.pop %v1075
        %v1079 = vmul.f32 %v1062, %v1076
        %v1080 = vmul.f32 %v1064, %v1077
        %v1081 = vmul.f32 %v1066, %v1078
        %1082 = vrot.lane.b32.xlu0 %v862, 56
        %v1083 = vpop.permute.xlu0 %1082
        %1084 = vrot.lane.b32.xlu0 %v864, 56
        %v1085 = vpop.permute.xlu0 %1084
        %1086 = vrot.lane.b32.xlu0 %v867, 56
        %v1087 = vpop.permute.xlu0 %1086
        %v1091 = vsel %vm918, %v1079, 0
        %v1094 = vsel %vm918, %v1080, 0
        %v1097 = vsel %vm918, %v1081, 0
        %v1099 = vsel %vm970, %v1087, 0
        %1101 = vmatpush.msra.mxu0 0.0
        %1102 = vmatpush.msra.mxu0 0.0
        %1103 = vmatpush.msra.mxu0 0.0
        %1104 = vmatpush.msra.mxu0 0.0
        %1105 = vmatpush.msra.mxu0 0.0
        %1106 = vmatpush.msra.mxu0 0.0
        %1107 = vmatpush.msra.mxu0 0.0
        %1108 = vmatpush.msra.mxu0 0.0
        %1109 = vmatpush.msra.mxu0 0.0
        %1110 = vmatpush.msra.mxu0 0.0
        %1111 = vmatpush.msra.mxu0 0.0
        %1112 = vmatpush.msra.mxu0 0.0
        %1113 = vmatpush.msra.mxu0 0.0
        %1114 = vmatpush.msra.mxu0 %v1099
        %1115 = vmatpush.msra.mxu0 %v1085
        %1116 = vmatpush.msra.mxu0 %v1083
        %1117 = vmatmul.f32.gmra.mxu0 %v1091
        %v1118 = vpop.f32.mrf.mxu0
        %v1119 = vadd.f32 0.0, %v1118
        %1120 = vmatmul.f32.gmra.mxu0 %v1094
        %v1121 = vpop.f32.mrf.mxu0
        %v1122 = vadd.f32 0.0, %v1121
        %1123 = vmatmul.f32.gmra.mxu0 %v1097
        %v1124 = vpop.f32.mrf.mxu0
        %v1125 = vadd.f32 0.0, %v1124
        %1126 = vdwg.mxu0
        %1127 = vrot.lane.b32.xlu0 %v862, 112
        %v1128 = vpop.permute.xlu0 %1127
        %1129 = vrot.lane.b32.xlu0 %v864, 112
        %v1130 = vpop.permute.xlu0 %1129
        %1131 = vrot.lane.b32.xlu0 %v867, 112
        %v1132 = vpop.permute.xlu0 %1131
        %1133 = vrot.lane.b32.xlu0 %v862, 80
        %v1134 = vpop.permute.xlu0 %1133
        %1135 = vrot.lane.b32.xlu0 %v864, 80
        %v1136 = vpop.permute.xlu0 %1135
        %1137 = vrot.lane.b32.xlu0 %v867, 80
        %v1138 = vpop.permute.xlu0 %1137
        %v1139 = vsel %vm879, %v1128, 0
        %v1141 = vsel %vm879, %v1130, 0
        %v1143 = vsel %vm879, %v1132, 0
        %v1145 = vsel %vm879, %v1134, 0
        %v1147 = vsel %vm879, %v1136, 0
        %v1149 = vsel %vm879, %v1138, 0
        %1151 = vmatpush.xpose.msra.mxu0 0.0
        %1152 = vmatpush.xpose.msra.mxu0 0.0
        %1153 = vmatpush.xpose.msra.mxu0 0.0
        %1154 = vmatpush.xpose.msra.mxu0 0.0
        %1155 = vmatpush.xpose.msra.mxu0 0.0
        %1156 = vmatpush.xpose.msra.mxu0 0.0
        %1157 = vmatpush.xpose.msra.mxu0 0.0
        %1158 = vmatpush.xpose.msra.mxu0 0.0
        %1159 = vmatpush.xpose.msra.mxu0 0.0
        %1160 = vmatpush.xpose.msra.mxu0 0.0
        %1161 = vmatpush.xpose.msra.mxu0 0.0
        %1162 = vmatpush.xpose.msra.mxu0 0.0
        %1163 = vmatpush.xpose.msra.mxu0 0.0
        %1164 = vmatpush.xpose.msra.mxu0 %v1149
        %1165 = vmatpush.xpose.msra.mxu0 %v1147
        %1166 = vmatpush.xpose.msra.mxu0 %v1145
        %1167 = vmatmul.f32.gmra.mxu0 %v1139
        %v1168 = vpop.f32.mrf.mxu0
        %v1169 = vadd.f32 0.0, %v1168
        %1170 = vmatmul.f32.gmra.mxu0 %v1141
        %v1171 = vpop.f32.mrf.mxu0
        %v1172 = vadd.f32 0.0, %v1171
        %1173 = vmatmul.f32.gmra.mxu0 %v1143
        %v1174 = vpop.f32.mrf.mxu0
        %v1175 = vadd.f32 0.0, %v1174
        %1176 = vdwg.mxu0
        %v1177 = vsel %vm918, %v1169, -inf
        %1178 = vmax.xlane.f32.xlu0 %v1177
        %v1179 = vpop.xlane.xlu0 %1178
        %v1180 = vsel %vm918, %v1172, -inf
        %1181 = vmax.xlane.f32.xlu0 %v1180
        %v1182 = vpop.xlane.xlu0 %1181
        %v1183 = vsel %vm925, %v1175, -inf
        %1184 = vmax.xlane.f32.xlu0 %v1183
        %v1185 = vpop.xlane.xlu0 %1184
        %v1186 = vsub.f32 %v1169, %v1179
        %v1187 = vsub.f32 %v1172, %v1182
        %v1188 = vsub.f32 %v1175, %v1185
        %v1189 = vmul.f32 %v1186, 1.442695
        %v1190 = vpow.pop %v1189
        %v1191 = vmul.f32 %v1187, 1.442695
        %v1192 = vpow.pop %v1191
        %v1193 = vmul.f32 %v1188, 1.442695
        %v1194 = vpow.pop %v1193
        %v1195 = vsel %vm918, %v1190, 0.0
        %1196 = vadd.xlane.f32.xlu0 %v1195
        %v1197 = vpop.xlane.xlu0 %1196
        %v1198 = vsel %vm918, %v1192, 0.0
        %1199 = vadd.xlane.f32.xlu0 %v1198
        %v1200 = vpop.xlane.xlu0 %1199
        %v1201 = vsel %vm925, %v1194, 0.0
        %1202 = vadd.xlane.f32.xlu0 %v1201
        %v1203 = vpop.xlane.xlu0 %1202
        %v1204 = vrcp.pop %v1197
        %v1205 = vrcp.pop %v1200
        %v1206 = vrcp.pop %v1203
        %v1207 = vmul.f32 %v1190, %v1204
        %v1208 = vmul.f32 %v1192, %v1205
        %v1209 = vmul.f32 %v1194, %v1206
        %1210 = vrot.lane.b32.xlu0 %v862, 48
        %v1211 = vpop.permute.xlu0 %1210
        %1212 = vrot.lane.b32.xlu0 %v864, 48
        %v1213 = vpop.permute.xlu0 %1212
        %1214 = vrot.lane.b32.xlu0 %v867, 48
        %v1215 = vpop.permute.xlu0 %1214
        %v1219 = vsel %vm918, %v1207, 0
        %v1222 = vsel %vm918, %v1208, 0
        %v1225 = vsel %vm918, %v1209, 0
        %v1227 = vsel %vm970, %v1215, 0
        %1229 = vmatpush.msra.mxu0 0.0
        %1230 = vmatpush.msra.mxu0 0.0
        %1231 = vmatpush.msra.mxu0 0.0
        %1232 = vmatpush.msra.mxu0 0.0
        %1233 = vmatpush.msra.mxu0 0.0
        %1234 = vmatpush.msra.mxu0 0.0
        %1235 = vmatpush.msra.mxu0 0.0
        %1236 = vmatpush.msra.mxu0 0.0
        %1237 = vmatpush.msra.mxu0 0.0
        %1238 = vmatpush.msra.mxu0 0.0
        %1239 = vmatpush.msra.mxu0 0.0
        %1240 = vmatpush.msra.mxu0 0.0
        %1241 = vmatpush.msra.mxu0 0.0
        %1242 = vmatpush.msra.mxu0 %v1227
        %1243 = vmatpush.msra.mxu0 %v1213
        %1244 = vmatpush.msra.mxu0 %v1211
        %1245 = vmatmul.f32.gmra.mxu0 %v1219
        %v1246 = vpop.f32.mrf.mxu0
        %v1247 = vadd.f32 0.0, %v1246
        %1248 = vmatmul.f32.gmra.mxu0 %v1222
        %v1249 = vpop.f32.mrf.mxu0
        %v1250 = vadd.f32 0.0, %v1249
        %1251 = vmatmul.f32.gmra.mxu0 %v1225
        %v1252 = vpop.f32.mrf.mxu0
        %v1253 = vadd.f32 0.0, %v1252
        %1254 = vdwg.mxu0
        %1255 = vrot.lane.b32.xlu0 %v862, 104
        %v1256 = vpop.permute.xlu0 %1255
        %1257 = vrot.lane.b32.xlu0 %v864, 104
        %v1258 = vpop.permute.xlu0 %1257
        %1259 = vrot.lane.b32.xlu0 %v867, 104
        %v1260 = vpop.permute.xlu0 %1259
        %1261 = vrot.lane.b32.xlu0 %v862, 72
        %v1262 = vpop.permute.xlu0 %1261
        %1263 = vrot.lane.b32.xlu0 %v864, 72
        %v1264 = vpop.permute.xlu0 %1263
        %1265 = vrot.lane.b32.xlu0 %v867, 72
        %v1266 = vpop.permute.xlu0 %1265
        %v1267 = vsel %vm879, %v1256, 0
        %v1269 = vsel %vm879, %v1258, 0
        %v1271 = vsel %vm879, %v1260, 0
        %v1273 = vsel %vm879, %v1262, 0
        %v1275 = vsel %vm879, %v1264, 0
        %v1277 = vsel %vm879, %v1266, 0
        %1279 = vmatpush.xpose.msra.mxu0 0.0
        %1280 = vmatpush.xpose.msra.mxu0 0.0
        %1281 = vmatpush.xpose.msra.mxu0 0.0
        %1282 = vmatpush.xpose.msra.mxu0 0.0
        %1283 = vmatpush.xpose.msra.mxu0 0.0
        %1284 = vmatpush.xpose.msra.mxu0 0.0
        %1285 = vmatpush.xpose.msra.mxu0 0.0
        %1286 = vmatpush.xpose.msra.mxu0 0.0
        %1287 = vmatpush.xpose.msra.mxu0 0.0
        %1288 = vmatpush.xpose.msra.mxu0 0.0
        %1289 = vmatpush.xpose.msra.mxu0 0.0
        %1290 = vmatpush.xpose.msra.mxu0 0.0
        %1291 = vmatpush.xpose.msra.mxu0 0.0
        %1292 = vmatpush.xpose.msra.mxu0 %v1277
        %1293 = vmatpush.xpose.msra.mxu0 %v1275
        %1294 = vmatpush.xpose.msra.mxu0 %v1273
        %1295 = vmatmul.f32.gmra.mxu0 %v1267
        %v1296 = vpop.f32.mrf.mxu0
        %v1297 = vadd.f32 0.0, %v1296
        %1298 = vmatmul.f32.gmra.mxu0 %v1269
        %v1299 = vpop.f32.mrf.mxu0
        %v1300 = vadd.f32 0.0, %v1299
        %1301 = vmatmul.f32.gmra.mxu0 %v1271
        %v1302 = vpop.f32.mrf.mxu0
        %v1303 = vadd.f32 0.0, %v1302
        %1304 = vdwg.mxu0
        %v1305 = vsel %vm918, %v1297, -inf
        %1306 = vmax.xlane.f32.xlu0 %v1305
        %v1307 = vpop.xlane.xlu0 %1306
        %v1308 = vsel %vm918, %v1300, -inf
        %1309 = vmax.xlane.f32.xlu0 %v1308
        %v1310 = vpop.xlane.xlu0 %1309
        %v1311 = vsel %vm925, %v1303, -inf
        %1312 = vmax.xlane.f32.xlu0 %v1311
        %v1313 = vpop.xlane.xlu0 %1312
        %v1314 = vsub.f32 %v1297, %v1307
        %v1315 = vsub.f32 %v1300, %v1310
        %v1316 = vsub.f32 %v1303, %v1313
        %v1317 = vmul.f32 %v1314, 1.442695
        %v1318 = vpow.pop %v1317
        %v1319 = vmul.f32 %v1315, 1.442695
        %v1320 = vpow.pop %v1319
        %v1321 = vmul.f32 %v1316, 1.442695
        %v1322 = vpow.pop %v1321
        %v1323 = vsel %vm918, %v1318, 0.0
        %1324 = vadd.xlane.f32.xlu0 %v1323
        %v1325 = vpop.xlane.xlu0 %1324
        %v1326 = vsel %vm918, %v1320, 0.0
        %1327 = vadd.xlane.f32.xlu0 %v1326
        %v1328 = vpop.xlane.xlu0 %1327
        %v1329 = vsel %vm925, %v1322, 0.0
        %1330 = vadd.xlane.f32.xlu0 %v1329
        %v1331 = vpop.xlane.xlu0 %1330
        %v1332 = vrcp.pop %v1325
        %v1333 = vrcp.pop %v1328
        %v1334 = vrcp.pop %v1331
        %v1335 = vmul.f32 %v1318, %v1332
        %v1336 = vmul.f32 %v1320, %v1333
        %v1337 = vmul.f32 %v1322, %v1334
        %1338 = vrot.lane.b32.xlu0 %v862, 40
        %v1339 = vpop.permute.xlu0 %1338
        %1340 = vrot.lane.b32.xlu0 %v864, 40
        %v1341 = vpop.permute.xlu0 %1340
        %1342 = vrot.lane.b32.xlu0 %v867, 40
        %v1343 = vpop.permute.xlu0 %1342
        %v1347 = vsel %vm918, %v1335, 0
        %v1350 = vsel %vm918, %v1336, 0
        %v1353 = vsel %vm918, %v1337, 0
        %v1355 = vsel %vm970, %v1343, 0
        %1357 = vmatpush.msra.mxu0 0.0
        %1358 = vmatpush.msra.mxu0 0.0
        %1359 = vmatpush.msra.mxu0 0.0
        %1360 = vmatpush.msra.mxu0 0.0
        %1361 = vmatpush.msra.mxu0 0.0
        %1362 = vmatpush.msra.mxu0 0.0
        %1363 = vmatpush.msra.mxu0 0.0
        %1364 = vmatpush.msra.mxu0 0.0
        %1365 = vmatpush.msra.mxu0 0.0
        %1366 = vmatpush.msra.mxu0 0.0
        %1367 = vmatpush.msra.mxu0 0.0
        %1368 = vmatpush.msra.mxu0 0.0
        %1369 = vmatpush.msra.mxu0 0.0
        %1370 = vmatpush.msra.mxu0 %v1355
        %1371 = vmatpush.msra.mxu0 %v1341
        %1372 = vmatpush.msra.mxu0 %v1339
        %1373 = vmatmul.f32.gmra.mxu0 %v1347
        %v1374 = vpop.f32.mrf.mxu0
        %v1375 = vadd.f32 0.0, %v1374
        %1376 = vmatmul.f32.gmra.mxu0 %v1350
        %v1377 = vpop.f32.mrf.mxu0
        %v1378 = vadd.f32 0.0, %v1377
        %1379 = vmatmul.f32.gmra.mxu0 %v1353
        %v1380 = vpop.f32.mrf.mxu0
        %v1381 = vadd.f32 0.0, %v1380
        %1382 = vdwg.mxu0
        %1386 = vrot.lane.b32.xlu0 %v1119, 8
        %v1387 = vpop.permute.xlu0 %1386
        %1388 = vrot.lane.b32.xlu0 %v1122, 8
        %v1389 = vpop.permute.xlu0 %1388
        %1390 = vrot.lane.b32.xlu0 %v1125, 8
        %v1391 = vpop.permute.xlu0 %1390
        %1398 = vrot.lane.b32.xlu0 %v1247, 16
        %v1399 = vpop.permute.xlu0 %1398
        %1400 = vrot.lane.b32.xlu0 %v1250, 16
        %v1401 = vpop.permute.xlu0 %1400
        %1402 = vrot.lane.b32.xlu0 %v1253, 16
        %v1403 = vpop.permute.xlu0 %1402
        %1410 = vrot.lane.b32.xlu0 %v1375, 24
        %v1411 = vpop.permute.xlu0 %1410
        %1412 = vrot.lane.b32.xlu0 %v1378, 24
        %v1413 = vpop.permute.xlu0 %1412
        %1414 = vrot.lane.b32.xlu0 %v1381, 24
        %v1415 = vpop.permute.xlu0 %1414
        %v1419 = vsel %vm879, %v991, %v1387
        %v1420 = vsel %vm879, %v994, %v1389
        %v1421 = vsel %vm879, %v997, %v1391
        %vm1422 = vcmask 130048
        %v1423 = vsel %vm1422, %v1419, %v1399
        %v1424 = vsel %vm1422, %v1420, %v1401
        %v1425 = vsel %vm1422, %v1421, %v1403
        %vm1426 = vcmask 195584
        %v1427 = vsel %vm1426, %v1423, %v1411
        %v1428 = vsel %vm1426, %v1424, %v1413
        %v1429 = vsel %vm1426, %v1425, %v1415
        %v1430 = vpack.c.bf16 %v1428, %v1427
        %v1431 = vpack.c.bf16 %v1429, %v1429
        %v1436 = vunpack.c.l.b16 %v723
        %v1437 = vunpack.c.l.b16 %v724
        %v1438 = vunpack.c.l.b16 %v725
        %v1439 = vunpack.c.l.b16 %v726
        %v1440 = vpack.c.b16 %v1437, %v1436
        %v1441 = vpack.c.b16 %v1439, %v1438
        %v1445 = vsel %vm748, %v1430, 0
        %v1448 = vsel %vm748, %v1431, 0
        %1450 = vmatpush.bf16.msra.mxu0 0
        %1451 = vmatpush.bf16.msra.mxu0 0
        %1452 = vmatpush.bf16.msra.mxu0 0
        %1453 = vmatpush.bf16.msra.mxu0 0
        %1454 = vmatpush.bf16.msra.mxu0 0
        %1455 = vmatpush.bf16.msra.mxu0 0
        %1456 = vmatpush.bf16.msra.mxu0 %v1441
        %1457 = vmatpush.bf16.msra.mxu0 %v1440
        %1458 = vmatmul.bf16.gmra.mxu0 %v1445
        %v1459 = vpop.f32.mrf.mxu0
        %v1460 = vadd.f32 0.0, %v1459
        %v1461 = vpop.f32.mrf.mxu0
        %v1462 = vadd.f32 0.0, %v1461
        %1463 = vmatmul.bf16.gmra.mxu0 %v1448
        %v1464 = vpop.f32.mrf.mxu0
        %v1465 = vadd.f32 0.0, %v1464
        %v1466 = vpop.f32.mrf.mxu0
        %1467 = vdwg.mxu0
        %v1468 = vadd.f32 %v716, %v1460
        %v1469 = vadd.f32 %v717, %v1462
        %v1470 = vadd.f32 %v718, %v1465
        %v1471 = vperm.slane %v747, 4
        %v1472 = vadd.f32 %v1468, %v1471
        %v1473 = vadd.f32 %v1469, %v1471
        %v1474 = vadd.f32 %v1470, %v1471
        %v1475 = vsel %vm748, %v1472, 0.0
        %1476 = vadd.xlane.f32.xlu0 %v1475
        %v1477 = vpop.xlane.xlu0 %1476
        %v1478 = vsel %vm748, %v1473, 0.0
        %1479 = vadd.xlane.f32.xlu0 %v1478
        %v1480 = vpop.xlane.xlu0 %1479
        %v1481 = vsel %vm755, %v1474, 0.0
        %1482 = vadd.xlane.f32.xlu0 %v1481
        %v1483 = vpop.xlane.xlu0 %1482
        %v1484 = vmul.f32 %v1477, %v765
        %v1485 = vmul.f32 %v1480, %v765
        %v1486 = vmul.f32 %v1483, %v765
        %v1487 = vsub.f32 %v1472, %v1484
        %v1488 = vsub.f32 %v1473, %v1485
        %v1489 = vsub.f32 %v1474, %v1486
        %v1490 = vmul.f32 %v1487, %v1487
        %v1491 = vmul.f32 %v1488, %v1488
        %v1492 = vmul.f32 %v1489, %v1489
        %v1493 = vsel %vm748, %v1490, 0.0
        %1494 = vadd.xlane.f32.xlu0 %v1493
        %v1495 = vpop.xlane.xlu0 %1494
        %v1496 = vsel %vm748, %v1491, 0.0
        %1497 = vadd.xlane.f32.xlu0 %v1496
        %v1498 = vpop.xlane.xlu0 %1497
        %v1499 = vsel %vm755, %v1492, 0.0
        %1500 = vadd.xlane.f32.xlu0 %v1499
        %v1501 = vpop.xlane.xlu0 %1500
        %v1502 = vmul.f32 %v1495, %v765
        %v1503 = vmul.f32 %v1498, %v765
        %v1504 = vmul.f32 %v1501, %v765
        %v1505 = vadd.f32 %v1502, 1e-05
        %v1506 = vadd.f32 %v1503, 1e-05
        %v1507 = vadd.f32 %v1504, 1e-05
        %v1508 = vrsqrt.pop %v1505
        %v1509 = vmul.f32 %v1508, %v1505
        %v1510 = vmul.f32 %v1509, %v1508
        %v1511 = vmul.f32 0.5, %v1510
        %v1512 = vsub.f32 1.5, %v1511
        %v1513 = vmul.f32 %v1508, %v1512
        %vm1514 = vweird.f32 %v1505
        %vm1515 = vweird.f32 %v1508
        %vm1516 = vmor %vm1514, %vm1515
        %v1517 = vsel %vm1516, %v1508, %v1513
        %v1518 = vrsqrt.pop %v1506
        %v1519 = vmul.f32 %v1518, %v1506
        %v1520 = vmul.f32 %v1519, %v1518
        %v1521 = vmul.f32 0.5, %v1520
        %v1522 = vsub.f32 1.5, %v1521
        %v1523 = vmul.f32 %v1518, %v1522
        %vm1524 = vweird.f32 %v1506
        %vm1525 = vweird.f32 %v1518
        %vm1526 = vmor %vm1524, %vm1525
        %v1527 = vsel %vm1526, %v1518, %v1523
        %v1528 = vrsqrt.pop %v1507
        %v1529 = vmul.f32 %v1528, %v1507
        %v1530 = vmul.f32 %v1529, %v1528
        %v1531 = vmul.f32 0.5, %v1530
        %v1532 = vsub.f32 1.5, %v1531
        %v1533 = vmul.f32 %v1528, %v1532
        %vm1534 = vweird.f32 %v1507
        %vm1535 = vweird.f32 %v1528
        %vm1536 = vmor %vm1534, %vm1535
        %v1537 = vsel %vm1536, %v1528, %v1533
        %v1538 = vmul.f32 %v1487, %v1517
        %v1539 = vmul.f32 %v1488, %v1527
        %v1540 = vmul.f32 %v1489, %v1537
        %v1541 = vperm.slane %v747, 2
        %v1542 = vmul.f32 %v1538, %v1541
        %v1543 = vmul.f32 %v1539, %v1541
        %v1544 = vmul.f32 %v1540, %v1541
        %v1545 = vperm.slane %v747, 3
        %v1546 = vadd.f32 %v1542, %v1545
        %v1547 = vadd.f32 %v1543, %v1545
        %v1548 = vadd.f32 %v1544, %v1545
        %v1549 = vpack.c.bf16 %v1547, %v1546
        %v1550 = vpack.c.bf16 %v1548, %v1548
        %v1551 = vperm.slane %v747, 7
        %v1556 = vunpack.c.l.b16 %v727
        %v1557 = vunpack.c.l.b16 %v728
        %v1558 = vunpack.c.l.b16 %v729
        %v1559 = vunpack.c.l.b16 %v730
        %v1560 = vpack.c.b16 %v1557, %v1556
        %v1561 = vpack.c.b16 %v1559, %v1558
        %v1565 = vsel %vm748, %v1549, 0
        %v1568 = vsel %vm748, %v1550, 0
        %1570 = vmatpush.bf16.msra.mxu0 0
        %1571 = vmatpush.bf16.msra.mxu0 0
        %1572 = vmatpush.bf16.msra.mxu0 0
        %1573 = vmatpush.bf16.msra.mxu0 0
        %1574 = vmatpush.bf16.msra.mxu0 0
        %1575 = vmatpush.bf16.msra.mxu0 0
        %1576 = vmatpush.bf16.msra.mxu0 %v1561
        %1577 = vmatpush.bf16.msra.mxu0 %v1560
        %1578 = vmatmul.bf16.gmra.mxu0 %v1565
        %v1579 = vpop.f32.mrf.mxu0
        %v1580 = vadd.f32 %v1551, %v1579
        %v1581 = vpop.f32.mrf.mxu0
        %v1582 = vadd.f32 %v1551, %v1581
        %1583 = vmatmul.bf16.gmra.mxu0 %v1568
        %v1584 = vpop.f32.mrf.mxu0
        %v1585 = vadd.f32 %v1551, %v1584
        %v1586 = vpop.f32.mrf.mxu0
        %1587 = vdwg.mxu0
        %v1588 = vmul.f32 %v1580, %v1580
        %v1589 = vmul.f32 %v1582, %v1582
        %v1590 = vmul.f32 %v1585, %v1585
        %v1591 = vmul.f32 %v1580, %v1588
        %v1592 = vmul.f32 %v1582, %v1589
        %v1593 = vmul.f32 %v1585, %v1590
        %v1594 = vmul.f32 %v1591, 0.044715
        %v1595 = vmul.f32 %v1592, 0.044715
        %v1596 = vmul.f32 %v1593, 0.044715
        %v1597 = vadd.f32 %v1580, %v1594
        %v1598 = vadd.f32 %v1582, %v1595
        %v1599 = vadd.f32 %v1585, %v1596
        %v1600 = vmul.f32 %v1597, 0.7978846
        %v1601 = vmul.f32 %v1598, 0.7978846
        %v1602 = vmul.f32 %v1599, 0.7978846
        %v1603 = vtanh.pop %v1600
        %v1604 = vtanh.pop %v1601
        %v1605 = vtanh.pop %v1602
        %v1606 = vadd.f32 %v1603, 1.0
        %v1607 = vadd.f32 %v1604, 1.0
        %v1608 = vadd.f32 %v1605, 1.0
        %v1609 = vmul.f32 %v1606, 0.5
        %v1610 = vmul.f32 %v1607, 0.5
        %v1611 = vmul.f32 %v1608, 0.5
        %v1612 = vmul.f32 %v1580, %v1609
        %v1613 = vmul.f32 %v1582, %v1610
        %v1614 = vmul.f32 %v1585, %v1611
        %v1615 = vpack.c.bf16 %v1613, %v1612
        %v1616 = vpack.c.bf16 %v1614, %v1614
        %v1617 = vperm.slane %v747, 5
        %v1634 = vunpack.c.l.b16 %v731
        %v1635 = vunpack.c.l.b16 %v732
        %v1636 = vunpack.c.l.b16 %v733
        %v1637 = vunpack.c.l.b16 %v734
        %v1638 = vunpack.c.l.b16 %v735
        %v1639 = vunpack.c.l.b16 %v736
        %v1640 = vunpack.c.l.b16 %v737
        %v1641 = vunpack.c.l.b16 %v738
        %v1642 = vunpack.c.l.b16 %v739
        %v1643 = vunpack.c.l.b16 %v740
        %v1644 = vunpack.c.l.b16 %v741
        %v1645 = vunpack.c.l.b16 %v742
        %v1646 = vunpack.c.l.b16 %v743
        %v1647 = vunpack.c.l.b16 %v744
        %v1648 = vunpack.c.l.b16 %v745
        %v1649 = vunpack.c.l.b16 %v746
        %v1650 = vpack.c.b16 %v1635, %v1634
        %v1651 = vpack.c.b16 %v1637, %v1636
        %v1652 = vpack.c.b16 %v1639, %v1638
        %v1653 = vpack.c.b16 %v1641, %v1640
        %v1654 = vpack.c.b16 %v1643, %v1642
        %v1655 = vpack.c.b16 %v1645, %v1644
        %v1656 = vpack.c.b16 %v1647, %v1646
        %v1657 = vpack.c.b16 %v1649, %v1648
        %1666 = vmatpush.bf16.msra.mxu0 %v1657
        %1667 = vmatpush.bf16.msra.mxu0 %v1656
        %1668 = vmatpush.bf16.msra.mxu0 %v1655
        %1669 = vmatpush.bf16.msra.mxu0 %v1654
        %1670 = vmatpush.bf16.msra.mxu0 %v1653
        %1671 = vmatpush.bf16.msra.mxu0 %v1652
        %1672 = vmatpush.bf16.msra.mxu0 %v1651
        %1673 = vmatpush.bf16.msra.mxu0 %v1650
        %1674 = vmatmul.bf16.gmra.mxu0 %v1615
        %v1675 = vpop.f32.mrf.mxu0
        %v1676 = vadd.f32 %v1617, %v1675
        %v1677 = vpop.f32.mrf.mxu0
        %v1678 = vadd.f32 %v1617, %v1677
        %1679 = vmatmul.bf16.gmra.mxu0 %v1616
        %v1680 = vpop.f32.mrf.mxu0
        %v1681 = vadd.f32 %v1617, %v1680
        %v1682 = vpop.f32.mrf.mxu0
        %1683 = vdwg.mxu0
        %v1684 = vadd.f32 %v1472, %v1676
        %v1685 = vadd.f32 %v1473, %v1678
        %v1686 = vadd.f32 %v1474, %v1681
        %s1687 = scalar_lea.vmem %s6, 16
        %v1688 = vld [vmem:[%s1687] sm:$0xf]
        %v1689 = vld [vmem:[%s1687 + $0x4] sm:$0xf]
        %v1690 = vld [vmem:[%s1687 + $0x8] sm:$0xf]
        %v1691 = vld [vmem:[%s1687 + $0xc] sm:$0xf]
        %s1692 = scalar_lea.vmem %s7, 16
        %v1693 = vld [vmem:[%s1692] sm:$0xf]
        %v1694 = vld [vmem:[%s1692 + $0x4] sm:$0xf]
        %v1695 = vld [vmem:[%s1692 + $0x8] sm:$0xf]
        %v1696 = vld [vmem:[%s1692 + $0xc] sm:$0xf]
        %s1697 = scalar_lea.vmem %s8, 16
        %v1698 = vld [vmem:[%s1697] sm:$0xf]
        %v1699 = vld [vmem:[%s1697 + $0x4] sm:$0xf]
        %v1700 = vld [vmem:[%s1697 + $0x8] sm:$0xf]
        %v1701 = vld [vmem:[%s1697 + $0xc] sm:$0xf]
        %s1702 = scalar_lea.vmem %s9, 64
        %v1703 = vld [vmem:[%s1702] sm:$0xf]
        %v1704 = vld [vmem:[%s1702 + $0x4] sm:$0xf]
        %v1705 = vld [vmem:[%s1702 + $0x8] sm:$0xf]
        %v1706 = vld [vmem:[%s1702 + $0xc] sm:$0xf]
        %v1707 = vld [vmem:[%s1702 + $0x10] sm:$0xf]
        %v1708 = vld [vmem:[%s1702 + $0x14] sm:$0xf]
        %v1709 = vld [vmem:[%s1702 + $0x18] sm:$0xf]
        %v1710 = vld [vmem:[%s1702 + $0x1c] sm:$0xf]
        %v1711 = vld [vmem:[%s1702 + $0x20] sm:$0xf]
        %v1712 = vld [vmem:[%s1702 + $0x24] sm:$0xf]
        %v1713 = vld [vmem:[%s1702 + $0x28] sm:$0xf]
        %v1714 = vld [vmem:[%s1702 + $0x2c] sm:$0xf]
        %v1715 = vld [vmem:[%s1702 + $0x30] sm:$0xf]
        %v1716 = vld [vmem:[%s1702 + $0x34] sm:$0xf]
        %v1717 = vld [vmem:[%s1702 + $0x38] sm:$0xf]
        %v1718 = vld [vmem:[%s1702 + $0x3c] sm:$0xf]
        %s1719 = scalar_lea.vmem %s10, 8
        %v1720 = vld [vmem:[%s1719] sm:$0xff]
        %v1721 = vsel %vm748, %v1684, 0.0
        %1722 = vadd.xlane.f32.xlu0 %v1721
        %v1723 = vpop.xlane.xlu0 %1722
        %v1724 = vsel %vm748, %v1685, 0.0
        %1725 = vadd.xlane.f32.xlu0 %v1724
        %v1726 = vpop.xlane.xlu0 %1725
        %v1727 = vsel %vm755, %v1686, 0.0
        %1728 = vadd.xlane.f32.xlu0 %v1727
        %v1729 = vpop.xlane.xlu0 %1728
        %v1730 = vmul.f32 %v1723, %v765
        %v1731 = vmul.f32 %v1726, %v765
        %v1732 = vmul.f32 %v1729, %v765
        %v1733 = vsub.f32 %v1684, %v1730
        %v1734 = vsub.f32 %v1685, %v1731
        %v1735 = vsub.f32 %v1686, %v1732
        %v1736 = vmul.f32 %v1733, %v1733
        %v1737 = vmul.f32 %v1734, %v1734
        %v1738 = vmul.f32 %v1735, %v1735
        %v1739 = vsel %vm748, %v1736, 0.0
        %1740 = vadd.xlane.f32.xlu0 %v1739
        %v1741 = vpop.xlane.xlu0 %1740
        %v1742 = vsel %vm748, %v1737, 0.0
        %1743 = vadd.xlane.f32.xlu0 %v1742
        %v1744 = vpop.xlane.xlu0 %1743
        %v1745 = vsel %vm755, %v1738, 0.0
        %1746 = vadd.xlane.f32.xlu0 %v1745
        %v1747 = vpop.xlane.xlu0 %1746
        %v1748 = vmul.f32 %v1741, %v765
        %v1749 = vmul.f32 %v1744, %v765
        %v1750 = vmul.f32 %v1747, %v765
        %v1751 = vadd.f32 %v1748, 1e-05
        %v1752 = vadd.f32 %v1749, 1e-05
        %v1753 = vadd.f32 %v1750, 1e-05
        %v1754 = vrsqrt.pop %v1751
        %v1755 = vmul.f32 %v1754, %v1751
        %v1756 = vmul.f32 %v1755, %v1754
        %v1757 = vmul.f32 0.5, %v1756
        %v1758 = vsub.f32 1.5, %v1757
        %v1759 = vmul.f32 %v1754, %v1758
        %vm1760 = vweird.f32 %v1751
        %vm1761 = vweird.f32 %v1754
        %vm1762 = vmor %vm1760, %vm1761
        %v1763 = vsel %vm1762, %v1754, %v1759
        %v1764 = vrsqrt.pop %v1752
        %v1765 = vmul.f32 %v1764, %v1752
        %v1766 = vmul.f32 %v1765, %v1764
        %v1767 = vmul.f32 0.5, %v1766
        %v1768 = vsub.f32 1.5, %v1767
        %v1769 = vmul.f32 %v1764, %v1768
        %vm1770 = vweird.f32 %v1752
        %vm1771 = vweird.f32 %v1764
        %vm1772 = vmor %vm1770, %vm1771
        %v1773 = vsel %vm1772, %v1764, %v1769
        %v1774 = vrsqrt.pop %v1753
        %v1775 = vmul.f32 %v1774, %v1753
        %v1776 = vmul.f32 %v1775, %v1774
        %v1777 = vmul.f32 0.5, %v1776
        %v1778 = vsub.f32 1.5, %v1777
        %v1779 = vmul.f32 %v1774, %v1778
        %vm1780 = vweird.f32 %v1753
        %vm1781 = vweird.f32 %v1774
        %vm1782 = vmor %vm1780, %vm1781
        %v1783 = vsel %vm1782, %v1774, %v1779
        %v1784 = vmul.f32 %v1733, %v1763
        %v1785 = vmul.f32 %v1734, %v1773
        %v1786 = vmul.f32 %v1735, %v1783
        %v1787 = vperm.slane %v1720, 0
        %v1788 = vmul.f32 %v1784, %v1787
        %v1789 = vmul.f32 %v1785, %v1787
        %v1790 = vmul.f32 %v1786, %v1787
        %v1791 = vperm.slane %v1720, 1
        %v1792 = vadd.f32 %v1788, %v1791
        %v1793 = vadd.f32 %v1789, %v1791
        %v1794 = vadd.f32 %v1790, %v1791
        %v1795 = vpack.c.bf16 %v1793, %v1792
        %v1796 = vpack.c.bf16 %v1794, %v1794
        %v1797 = vperm.slane %v1720, 6
        %v1802 = vunpack.c.l.b16 %v1688
        %v1803 = vunpack.c.l.b16 %v1689
        %v1804 = vunpack.c.l.b16 %v1690
        %v1805 = vunpack.c.l.b16 %v1691
        %v1806 = vpack.c.b16 %v1803, %v1802
        %v1807 = vpack.c.b16 %v1805, %v1804
        %v1811 = vsel %vm748, %v1795, 0
        %v1814 = vsel %vm748, %v1796, 0
        %1816 = vmatpush.bf16.msra.mxu0 0
        %1817 = vmatpush.bf16.msra.mxu0 0
        %1818 = vmatpush.bf16.msra.mxu0 0
        %1819 = vmatpush.bf16.msra.mxu0 0
        %1820 = vmatpush.bf16.msra.mxu0 0
        %1821 = vmatpush.bf16.msra.mxu0 0
        %1822 = vmatpush.bf16.msra.mxu0 %v1807
        %1823 = vmatpush.bf16.msra.mxu0 %v1806
        %1824 = vmatmul.bf16.gmra.mxu0 %v1811
        %v1825 = vpop.f32.mrf.mxu0
        %v1826 = vadd.f32 %v1797, %v1825
        %v1827 = vpop.f32.mrf.mxu0
        %v1828 = vadd.f32 %v1797, %v1827
        %1829 = vmatmul.bf16.gmra.mxu0 %v1814
        %v1830 = vpop.f32.mrf.mxu0
        %v1831 = vadd.f32 %v1797, %v1830
        %v1832 = vpop.f32.mrf.mxu0
        %1833 = vdwg.mxu0
        %1837 = vrot.lane.b32.xlu0 %v1826, 96
        %v1838 = vpop.permute.xlu0 %1837
        %1839 = vrot.lane.b32.xlu0 %v1828, 96
        %v1840 = vpop.permute.xlu0 %1839
        %1841 = vrot.lane.b32.xlu0 %v1831, 96
        %v1842 = vpop.permute.xlu0 %1841
        %v1843 = vsel %vm879, %v1826, 0
        %v1845 = vsel %vm879, %v1828, 0
        %v1847 = vsel %vm879, %v1831, 0
        %v1849 = vsel %vm879, %v1838, 0
        %v1851 = vsel %vm879, %v1840, 0
        %v1853 = vsel %vm879, %v1842, 0
        %1855 = vmatpush.xpose.msra.mxu0 0.0
        %1856 = vmatpush.xpose.msra.mxu0 0.0
        %1857 = vmatpush.xpose.msra.mxu0 0.0
        %1858 = vmatpush.xpose.msra.mxu0 0.0
        %1859 = vmatpush.xpose.msra.mxu0 0.0
        %1860 = vmatpush.xpose.msra.mxu0 0.0
        %1861 = vmatpush.xpose.msra.mxu0 0.0
        %1862 = vmatpush.xpose.msra.mxu0 0.0
        %1863 = vmatpush.xpose.msra.mxu0 0.0
        %1864 = vmatpush.xpose.msra.mxu0 0.0
        %1865 = vmatpush.xpose.msra.mxu0 0.0
        %1866 = vmatpush.xpose.msra.mxu0 0.0
        %1867 = vmatpush.xpose.msra.mxu0 0.0
        %1868 = vmatpush.xpose.msra.mxu0 %v1853
        %1869 = vmatpush.xpose.msra.mxu0 %v1851
        %1870 = vmatpush.xpose.msra.mxu0 %v1849
        %1871 = vmatmul.f32.gmra.mxu0 %v1843
        %v1872 = vpop.f32.mrf.mxu0
        %v1873 = vadd.f32 0.0, %v1872
        %1874 = vmatmul.f32.gmra.mxu0 %v1845
        %v1875 = vpop.f32.mrf.mxu0
        %v1876 = vadd.f32 0.0, %v1875
        %1877 = vmatmul.f32.gmra.mxu0 %v1847
        %v1878 = vpop.f32.mrf.mxu0
        %v1879 = vadd.f32 0.0, %v1878
        %1880 = vdwg.mxu0
        %v1881 = vsel %vm918, %v1873, -inf
        %1882 = vmax.xlane.f32.xlu0 %v1881
        %v1883 = vpop.xlane.xlu0 %1882
        %v1884 = vsel %vm918, %v1876, -inf
        %1885 = vmax.xlane.f32.xlu0 %v1884
        %v1886 = vpop.xlane.xlu0 %1885
        %v1887 = vsel %vm925, %v1879, -inf
        %1888 = vmax.xlane.f32.xlu0 %v1887
        %v1889 = vpop.xlane.xlu0 %1888
        %v1890 = vsub.f32 %v1873, %v1883
        %v1891 = vsub.f32 %v1876, %v1886
        %v1892 = vsub.f32 %v1879, %v1889
        %v1893 = vmul.f32 %v1890, 1.442695
        %v1894 = vpow.pop %v1893
        %v1895 = vmul.f32 %v1891, 1.442695
        %v1896 = vpow.pop %v1895
        %v1897 = vmul.f32 %v1892, 1.442695
        %v1898 = vpow.pop %v1897
        %v1899 = vsel %vm918, %v1894, 0.0
        %1900 = vadd.xlane.f32.xlu0 %v1899
        %v1901 = vpop.xlane.xlu0 %1900
        %v1902 = vsel %vm918, %v1896, 0.0
        %1903 = vadd.xlane.f32.xlu0 %v1902
        %v1904 = vpop.xlane.xlu0 %1903
        %v1905 = vsel %vm925, %v1898, 0.0
        %1906 = vadd.xlane.f32.xlu0 %v1905
        %v1907 = vpop.xlane.xlu0 %1906
        %v1908 = vrcp.pop %v1901
        %v1909 = vrcp.pop %v1904
        %v1910 = vrcp.pop %v1907
        %v1911 = vmul.f32 %v1894, %v1908
        %v1912 = vmul.f32 %v1896, %v1909
        %v1913 = vmul.f32 %v1898, %v1910
        %1914 = vrot.lane.b32.xlu0 %v1826, 64
        %v1915 = vpop.permute.xlu0 %1914
        %1916 = vrot.lane.b32.xlu0 %v1828, 64
        %v1917 = vpop.permute.xlu0 %1916
        %1918 = vrot.lane.b32.xlu0 %v1831, 64
        %v1919 = vpop.permute.xlu0 %1918
        %v1923 = vsel %vm918, %v1911, 0
        %v1926 = vsel %vm918, %v1912, 0
        %v1929 = vsel %vm918, %v1913, 0
        %v1931 = vsel %vm970, %v1919, 0
        %1933 = vmatpush.msra.mxu0 0.0
        %1934 = vmatpush.msra.mxu0 0.0
        %1935 = vmatpush.msra.mxu0 0.0
        %1936 = vmatpush.msra.mxu0 0.0
        %1937 = vmatpush.msra.mxu0 0.0
        %1938 = vmatpush.msra.mxu0 0.0
        %1939 = vmatpush.msra.mxu0 0.0
        %1940 = vmatpush.msra.mxu0 0.0
        %1941 = vmatpush.msra.mxu0 0.0
        %1942 = vmatpush.msra.mxu0 0.0
        %1943 = vmatpush.msra.mxu0 0.0
        %1944 = vmatpush.msra.mxu0 0.0
        %1945 = vmatpush.msra.mxu0 0.0
        %1946 = vmatpush.msra.mxu0 %v1931
        %1947 = vmatpush.msra.mxu0 %v1917
        %1948 = vmatpush.msra.mxu0 %v1915
        %1949 = vmatmul.f32.gmra.mxu0 %v1923
        %v1950 = vpop.f32.mrf.mxu0
        %v1951 = vadd.f32 0.0, %v1950
        %1952 = vmatmul.f32.gmra.mxu0 %v1926
        %v1953 = vpop.f32.mrf.mxu0
        %v1954 = vadd.f32 0.0, %v1953
        %1955 = vmatmul.f32.gmra.mxu0 %v1929
        %v1956 = vpop.f32.mrf.mxu0
        %v1957 = vadd.f32 0.0, %v1956
        %1958 = vdwg.mxu0
        %1959 = vrot.lane.b32.xlu0 %v1826, 120
        %v1960 = vpop.permute.xlu0 %1959
        %1961 = vrot.lane.b32.xlu0 %v1828, 120
        %v1962 = vpop.permute.xlu0 %1961
        %1963 = vrot.lane.b32.xlu0 %v1831, 120
        %v1964 = vpop.permute.xlu0 %1963
        %1965 = vrot.lane.b32.xlu0 %v1826, 88
        %v1966 = vpop.permute.xlu0 %1965
        %1967 = vrot.lane.b32.xlu0 %v1828, 88
        %v1968 = vpop.permute.xlu0 %1967
        %1969 = vrot.lane.b32.xlu0 %v1831, 88
        %v1970 = vpop.permute.xlu0 %1969
        %v1971 = vsel %vm879, %v1960, 0
        %v1973 = vsel %vm879, %v1962, 0
        %v1975 = vsel %vm879, %v1964, 0
        %v1977 = vsel %vm879, %v1966, 0
        %v1979 = vsel %vm879, %v1968, 0
        %v1981 = vsel %vm879, %v1970, 0
        %1983 = vmatpush.xpose.msra.mxu0 0.0
        %1984 = vmatpush.xpose.msra.mxu0 0.0
        %1985 = vmatpush.xpose.msra.mxu0 0.0
        %1986 = vmatpush.xpose.msra.mxu0 0.0
        %1987 = vmatpush.xpose.msra.mxu0 0.0
        %1988 = vmatpush.xpose.msra.mxu0 0.0
        %1989 = vmatpush.xpose.msra.mxu0 0.0
        %1990 = vmatpush.xpose.msra.mxu0 0.0
        %1991 = vmatpush.xpose.msra.mxu0 0.0
        %1992 = vmatpush.xpose.msra.mxu0 0.0
        %1993 = vmatpush.xpose.msra.mxu0 0.0
        %1994 = vmatpush.xpose.msra.mxu0 0.0
        %1995 = vmatpush.xpose.msra.mxu0 0.0
        %1996 = vmatpush.xpose.msra.mxu0 %v1981
        %1997 = vmatpush.xpose.msra.mxu0 %v1979
        %1998 = vmatpush.xpose.msra.mxu0 %v1977
        %1999 = vmatmul.f32.gmra.mxu0 %v1971
        %v2000 = vpop.f32.mrf.mxu0
        %v2001 = vadd.f32 0.0, %v2000
        %2002 = vmatmul.f32.gmra.mxu0 %v1973
        %v2003 = vpop.f32.mrf.mxu0
        %v2004 = vadd.f32 0.0, %v2003
        %2005 = vmatmul.f32.gmra.mxu0 %v1975
        %v2006 = vpop.f32.mrf.mxu0
        %v2007 = vadd.f32 0.0, %v2006
        %2008 = vdwg.mxu0
        %v2009 = vsel %vm918, %v2001, -inf
        %2010 = vmax.xlane.f32.xlu0 %v2009
        %v2011 = vpop.xlane.xlu0 %2010
        %v2012 = vsel %vm918, %v2004, -inf
        %2013 = vmax.xlane.f32.xlu0 %v2012
        %v2014 = vpop.xlane.xlu0 %2013
        %v2015 = vsel %vm925, %v2007, -inf
        %2016 = vmax.xlane.f32.xlu0 %v2015
        %v2017 = vpop.xlane.xlu0 %2016
        %v2018 = vsub.f32 %v2001, %v2011
        %v2019 = vsub.f32 %v2004, %v2014
        %v2020 = vsub.f32 %v2007, %v2017
        %v2021 = vmul.f32 %v2018, 1.442695
        %v2022 = vpow.pop %v2021
        %v2023 = vmul.f32 %v2019, 1.442695
        %v2024 = vpow.pop %v2023
        %v2025 = vmul.f32 %v2020, 1.442695
        %v2026 = vpow.pop %v2025
        %v2027 = vsel %vm918, %v2022, 0.0
        %2028 = vadd.xlane.f32.xlu0 %v2027
        %v2029 = vpop.xlane.xlu0 %2028
        %v2030 = vsel %vm918, %v2024, 0.0
        %2031 = vadd.xlane.f32.xlu0 %v2030
        %v2032 = vpop.xlane.xlu0 %2031
        %v2033 = vsel %vm925, %v2026, 0.0
        %2034 = vadd.xlane.f32.xlu0 %v2033
        %v2035 = vpop.xlane.xlu0 %2034
        %v2036 = vrcp.pop %v2029
        %v2037 = vrcp.pop %v2032
        %v2038 = vrcp.pop %v2035
        %v2039 = vmul.f32 %v2022, %v2036
        %v2040 = vmul.f32 %v2024, %v2037
        %v2041 = vmul.f32 %v2026, %v2038
        %2042 = vrot.lane.b32.xlu0 %v1826, 56
        %v2043 = vpop.permute.xlu0 %2042
        %2044 = vrot.lane.b32.xlu0 %v1828, 56
        %v2045 = vpop.permute.xlu0 %2044
        %2046 = vrot.lane.b32.xlu0 %v1831, 56
        %v2047 = vpop.permute.xlu0 %2046
        %v2051 = vsel %vm918, %v2039, 0
        %v2054 = vsel %vm918, %v2040, 0
        %v2057 = vsel %vm918, %v2041, 0
        %v2059 = vsel %vm970, %v2047, 0
        %2061 = vmatpush.msra.mxu0 0.0
        %2062 = vmatpush.msra.mxu0 0.0
        %2063 = vmatpush.msra.mxu0 0.0
        %2064 = vmatpush.msra.mxu0 0.0
        %2065 = vmatpush.msra.mxu0 0.0
        %2066 = vmatpush.msra.mxu0 0.0
        %2067 = vmatpush.msra.mxu0 0.0
        %2068 = vmatpush.msra.mxu0 0.0
        %2069 = vmatpush.msra.mxu0 0.0
        %2070 = vmatpush.msra.mxu0 0.0
        %2071 = vmatpush.msra.mxu0 0.0
        %2072 = vmatpush.msra.mxu0 0.0
        %2073 = vmatpush.msra.mxu0 0.0
        %2074 = vmatpush.msra.mxu0 %v2059
        %2075 = vmatpush.msra.mxu0 %v2045
        %2076 = vmatpush.msra.mxu0 %v2043
        %2077 = vmatmul.f32.gmra.mxu0 %v2051
        %v2078 = vpop.f32.mrf.mxu0
        %v2079 = vadd.f32 0.0, %v2078
        %2080 = vmatmul.f32.gmra.mxu0 %v2054
        %v2081 = vpop.f32.mrf.mxu0
        %v2082 = vadd.f32 0.0, %v2081
        %2083 = vmatmul.f32.gmra.mxu0 %v2057
        %v2084 = vpop.f32.mrf.mxu0
        %v2085 = vadd.f32 0.0, %v2084
        %2086 = vdwg.mxu0
        %2087 = vrot.lane.b32.xlu0 %v1826, 112
        %v2088 = vpop.permute.xlu0 %2087
        %2089 = vrot.lane.b32.xlu0 %v1828, 112
        %v2090 = vpop.permute.xlu0 %2089
        %2091 = vrot.lane.b32.xlu0 %v1831, 112
        %v2092 = vpop.permute.xlu0 %2091
        %2093 = vrot.lane.b32.xlu0 %v1826, 80
        %v2094 = vpop.permute.xlu0 %2093
        %2095 = vrot.lane.b32.xlu0 %v1828, 80
        %v2096 = vpop.permute.xlu0 %2095
        %2097 = vrot.lane.b32.xlu0 %v1831, 80
        %v2098 = vpop.permute.xlu0 %2097
        %v2099 = vsel %vm879, %v2088, 0
        %v2101 = vsel %vm879, %v2090, 0
        %v2103 = vsel %vm879, %v2092, 0
        %v2105 = vsel %vm879, %v2094, 0
        %v2107 = vsel %vm879, %v2096, 0
        %v2109 = vsel %vm879, %v2098, 0
        %2111 = vmatpush.xpose.msra.mxu0 0.0
        %2112 = vmatpush.xpose.msra.mxu0 0.0
        %2113 = vmatpush.xpose.msra.mxu0 0.0
        %2114 = vmatpush.xpose.msra.mxu0 0.0
        %2115 = vmatpush.xpose.msra.mxu0 0.0
        %2116 = vmatpush.xpose.msra.mxu0 0.0
        %2117 = vmatpush.xpose.msra.mxu0 0.0
        %2118 = vmatpush.xpose.msra.mxu0 0.0
        %2119 = vmatpush.xpose.msra.mxu0 0.0
        %2120 = vmatpush.xpose.msra.mxu0 0.0
        %2121 = vmatpush.xpose.msra.mxu0 0.0
        %2122 = vmatpush.xpose.msra.mxu0 0.0
        %2123 = vmatpush.xpose.msra.mxu0 0.0
        %2124 = vmatpush.xpose.msra.mxu0 %v2109
        %2125 = vmatpush.xpose.msra.mxu0 %v2107
        %2126 = vmatpush.xpose.msra.mxu0 %v2105
        %2127 = vmatmul.f32.gmra.mxu0 %v2099
        %v2128 = vpop.f32.mrf.mxu0
        %v2129 = vadd.f32 0.0, %v2128
        %2130 = vmatmul.f32.gmra.mxu0 %v2101
        %v2131 = vpop.f32.mrf.mxu0
        %v2132 = vadd.f32 0.0, %v2131
        %2133 = vmatmul.f32.gmra.mxu0 %v2103
        %v2134 = vpop.f32.mrf.mxu0
        %v2135 = vadd.f32 0.0, %v2134
        %2136 = vdwg.mxu0
        %v2137 = vsel %vm918, %v2129, -inf
        %2138 = vmax.xlane.f32.xlu0 %v2137
        %v2139 = vpop.xlane.xlu0 %2138
        %v2140 = vsel %vm918, %v2132, -inf
        %2141 = vmax.xlane.f32.xlu0 %v2140
        %v2142 = vpop.xlane.xlu0 %2141
        %v2143 = vsel %vm925, %v2135, -inf
        %2144 = vmax.xlane.f32.xlu0 %v2143
        %v2145 = vpop.xlane.xlu0 %2144
        %v2146 = vsub.f32 %v2129, %v2139
        %v2147 = vsub.f32 %v2132, %v2142
        %v2148 = vsub.f32 %v2135, %v2145
        %v2149 = vmul.f32 %v2146, 1.442695
        %v2150 = vpow.pop %v2149
        %v2151 = vmul.f32 %v2147, 1.442695
        %v2152 = vpow.pop %v2151
        %v2153 = vmul.f32 %v2148, 1.442695
        %v2154 = vpow.pop %v2153
        %v2155 = vsel %vm918, %v2150, 0.0
        %2156 = vadd.xlane.f32.xlu0 %v2155
        %v2157 = vpop.xlane.xlu0 %2156
        %v2158 = vsel %vm918, %v2152, 0.0
        %2159 = vadd.xlane.f32.xlu0 %v2158
        %v2160 = vpop.xlane.xlu0 %2159
        %v2161 = vsel %vm925, %v2154, 0.0
        %2162 = vadd.xlane.f32.xlu0 %v2161
        %v2163 = vpop.xlane.xlu0 %2162
        %v2164 = vrcp.pop %v2157
        %v2165 = vrcp.pop %v2160
        %v2166 = vrcp.pop %v2163
        %v2167 = vmul.f32 %v2150, %v2164
        %v2168 = vmul.f32 %v2152, %v2165
        %v2169 = vmul.f32 %v2154, %v2166
        %2170 = vrot.lane.b32.xlu0 %v1826, 48
        %v2171 = vpop.permute.xlu0 %2170
        %2172 = vrot.lane.b32.xlu0 %v1828, 48
        %v2173 = vpop.permute.xlu0 %2172
        %2174 = vrot.lane.b32.xlu0 %v1831, 48
        %v2175 = vpop.permute.xlu0 %2174
        %v2179 = vsel %vm918, %v2167, 0
        %v2182 = vsel %vm918, %v2168, 0
        %v2185 = vsel %vm918, %v2169, 0
        %v2187 = vsel %vm970, %v2175, 0
        %2189 = vmatpush.msra.mxu0 0.0
        %2190 = vmatpush.msra.mxu0 0.0
        %2191 = vmatpush.msra.mxu0 0.0
        %2192 = vmatpush.msra.mxu0 0.0
        %2193 = vmatpush.msra.mxu0 0.0
        %2194 = vmatpush.msra.mxu0 0.0
        %2195 = vmatpush.msra.mxu0 0.0
        %2196 = vmatpush.msra.mxu0 0.0
        %2197 = vmatpush.msra.mxu0 0.0
        %2198 = vmatpush.msra.mxu0 0.0
        %2199 = vmatpush.msra.mxu0 0.0
        %2200 = vmatpush.msra.mxu0 0.0
        %2201 = vmatpush.msra.mxu0 0.0
        %2202 = vmatpush.msra.mxu0 %v2187
        %2203 = vmatpush.msra.mxu0 %v2173
        %2204 = vmatpush.msra.mxu0 %v2171
        %2205 = vmatmul.f32.gmra.mxu0 %v2179
        %v2206 = vpop.f32.mrf.mxu0
        %v2207 = vadd.f32 0.0, %v2206
        %2208 = vmatmul.f32.gmra.mxu0 %v2182
        %v2209 = vpop.f32.mrf.mxu0
        %v2210 = vadd.f32 0.0, %v2209
        %2211 = vmatmul.f32.gmra.mxu0 %v2185
        %v2212 = vpop.f32.mrf.mxu0
        %v2213 = vadd.f32 0.0, %v2212
        %2214 = vdwg.mxu0
        %2215 = vrot.lane.b32.xlu0 %v1826, 104
        %v2216 = vpop.permute.xlu0 %2215
        %2217 = vrot.lane.b32.xlu0 %v1828, 104
        %v2218 = vpop.permute.xlu0 %2217
        %2219 = vrot.lane.b32.xlu0 %v1831, 104
        %v2220 = vpop.permute.xlu0 %2219
        %2221 = vrot.lane.b32.xlu0 %v1826, 72
        %v2222 = vpop.permute.xlu0 %2221
        %2223 = vrot.lane.b32.xlu0 %v1828, 72
        %v2224 = vpop.permute.xlu0 %2223
        %2225 = vrot.lane.b32.xlu0 %v1831, 72
        %v2226 = vpop.permute.xlu0 %2225
        %v2227 = vsel %vm879, %v2216, 0
        %v2229 = vsel %vm879, %v2218, 0
        %v2231 = vsel %vm879, %v2220, 0
        %v2233 = vsel %vm879, %v2222, 0
        %v2235 = vsel %vm879, %v2224, 0
        %v2237 = vsel %vm879, %v2226, 0
        %2239 = vmatpush.xpose.msra.mxu0 0.0
        %2240 = vmatpush.xpose.msra.mxu0 0.0
        %2241 = vmatpush.xpose.msra.mxu0 0.0
        %2242 = vmatpush.xpose.msra.mxu0 0.0
        %2243 = vmatpush.xpose.msra.mxu0 0.0
        %2244 = vmatpush.xpose.msra.mxu0 0.0
        %2245 = vmatpush.xpose.msra.mxu0 0.0
        %2246 = vmatpush.xpose.msra.mxu0 0.0
        %2247 = vmatpush.xpose.msra.mxu0 0.0
        %2248 = vmatpush.xpose.msra.mxu0 0.0
        %2249 = vmatpush.xpose.msra.mxu0 0.0
        %2250 = vmatpush.xpose.msra.mxu0 0.0
        %2251 = vmatpush.xpose.msra.mxu0 0.0
        %2252 = vmatpush.xpose.msra.mxu0 %v2237
        %2253 = vmatpush.xpose.msra.mxu0 %v2235
        %2254 = vmatpush.xpose.msra.mxu0 %v2233
        %2255 = vmatmul.f32.gmra.mxu0 %v2227
        %v2256 = vpop.f32.mrf.mxu0
        %v2257 = vadd.f32 0.0, %v2256
        %2258 = vmatmul.f32.gmra.mxu0 %v2229
        %v2259 = vpop.f32.mrf.mxu0
        %v2260 = vadd.f32 0.0, %v2259
        %2261 = vmatmul.f32.gmra.mxu0 %v2231
        %v2262 = vpop.f32.mrf.mxu0
        %v2263 = vadd.f32 0.0, %v2262
        %2264 = vdwg.mxu0
        %v2265 = vsel %vm918, %v2257, -inf
        %2266 = vmax.xlane.f32.xlu0 %v2265
        %v2267 = vpop.xlane.xlu0 %2266
        %v2268 = vsel %vm918, %v2260, -inf
        %2269 = vmax.xlane.f32.xlu0 %v2268
        %v2270 = vpop.xlane.xlu0 %2269
        %v2271 = vsel %vm925, %v2263, -inf
        %2272 = vmax.xlane.f32.xlu0 %v2271
        %v2273 = vpop.xlane.xlu0 %2272
        %v2274 = vsub.f32 %v2257, %v2267
        %v2275 = vsub.f32 %v2260, %v2270
        %v2276 = vsub.f32 %v2263, %v2273
        %v2277 = vmul.f32 %v2274, 1.442695
        %v2278 = vpow.pop %v2277
        %v2279 = vmul.f32 %v2275, 1.442695
        %v2280 = vpow.pop %v2279
        %v2281 = vmul.f32 %v2276, 1.442695
        %v2282 = vpow.pop %v2281
        %v2283 = vsel %vm918, %v2278, 0.0
        %2284 = vadd.xlane.f32.xlu0 %v2283
        %v2285 = vpop.xlane.xlu0 %2284
        %v2286 = vsel %vm918, %v2280, 0.0
        %2287 = vadd.xlane.f32.xlu0 %v2286
        %v2288 = vpop.xlane.xlu0 %2287
        %v2289 = vsel %vm925, %v2282, 0.0
        %2290 = vadd.xlane.f32.xlu0 %v2289
        %v2291 = vpop.xlane.xlu0 %2290
        %v2292 = vrcp.pop %v2285
        %v2293 = vrcp.pop %v2288
        %v2294 = vrcp.pop %v2291
        %v2295 = vmul.f32 %v2278, %v2292
        %v2296 = vmul.f32 %v2280, %v2293
        %v2297 = vmul.f32 %v2282, %v2294
        %2298 = vrot.lane.b32.xlu0 %v1826, 40
        %v2299 = vpop.permute.xlu0 %2298
        %2300 = vrot.lane.b32.xlu0 %v1828, 40
        %v2301 = vpop.permute.xlu0 %2300
        %2302 = vrot.lane.b32.xlu0 %v1831, 40
        %v2303 = vpop.permute.xlu0 %2302
        %v2307 = vsel %vm918, %v2295, 0
        %v2310 = vsel %vm918, %v2296, 0
        %v2313 = vsel %vm918, %v2297, 0
        %v2315 = vsel %vm970, %v2303, 0
        %2317 = vmatpush.msra.mxu0 0.0
        %2318 = vmatpush.msra.mxu0 0.0
        %2319 = vmatpush.msra.mxu0 0.0
        %2320 = vmatpush.msra.mxu0 0.0
        %2321 = vmatpush.msra.mxu0 0.0
        %2322 = vmatpush.msra.mxu0 0.0
        %2323 = vmatpush.msra.mxu0 0.0
        %2324 = vmatpush.msra.mxu0 0.0
        %2325 = vmatpush.msra.mxu0 0.0
        %2326 = vmatpush.msra.mxu0 0.0
        %2327 = vmatpush.msra.mxu0 0.0
        %2328 = vmatpush.msra.mxu0 0.0
        %2329 = vmatpush.msra.mxu0 0.0
        %2330 = vmatpush.msra.mxu0 %v2315
        %2331 = vmatpush.msra.mxu0 %v2301
        %2332 = vmatpush.msra.mxu0 %v2299
        %2333 = vmatmul.f32.gmra.mxu0 %v2307
        %v2334 = vpop.f32.mrf.mxu0
        %v2335 = vadd.f32 0.0, %v2334
        %2336 = vmatmul.f32.gmra.mxu0 %v2310
        %v2337 = vpop.f32.mrf.mxu0
        %v2338 = vadd.f32 0.0, %v2337
        %2339 = vmatmul.f32.gmra.mxu0 %v2313
        %v2340 = vpop.f32.mrf.mxu0
        %v2341 = vadd.f32 0.0, %v2340
        %2342 = vdwg.mxu0
        %2346 = vrot.lane.b32.xlu0 %v2079, 8
        %v2347 = vpop.permute.xlu0 %2346
        %2348 = vrot.lane.b32.xlu0 %v2082, 8
        %v2349 = vpop.permute.xlu0 %2348
        %2350 = vrot.lane.b32.xlu0 %v2085, 8
        %v2351 = vpop.permute.xlu0 %2350
        %2358 = vrot.lane.b32.xlu0 %v2207, 16
        %v2359 = vpop.permute.xlu0 %2358
        %2360 = vrot.lane.b32.xlu0 %v2210, 16
        %v2361 = vpop.permute.xlu0 %2360
        %2362 = vrot.lane.b32.xlu0 %v2213, 16
        %v2363 = vpop.permute.xlu0 %2362
        %2370 = vrot.lane.b32.xlu0 %v2335, 24
        %v2371 = vpop.permute.xlu0 %2370
        %2372 = vrot.lane.b32.xlu0 %v2338, 24
        %v2373 = vpop.permute.xlu0 %2372
        %2374 = vrot.lane.b32.xlu0 %v2341, 24
        %v2375 = vpop.permute.xlu0 %2374
        %v2379 = vsel %vm879, %v1951, %v2347
        %v2380 = vsel %vm879, %v1954, %v2349
        %v2381 = vsel %vm879, %v1957, %v2351
        %v2382 = vsel %vm1422, %v2379, %v2359
        %v2383 = vsel %vm1422, %v2380, %v2361
        %v2384 = vsel %vm1422, %v2381, %v2363
        %v2385 = vsel %vm1426, %v2382, %v2371
        %v2386 = vsel %vm1426, %v2383, %v2373
        %v2387 = vsel %vm1426, %v2384, %v2375
        %v2388 = vpack.c.bf16 %v2386, %v2385
        %v2389 = vpack.c.bf16 %v2387, %v2387
        %v2394 = vunpack.c.l.b16 %v1693
        %v2395 = vunpack.c.l.b16 %v1694
        %v2396 = vunpack.c.l.b16 %v1695
        %v2397 = vunpack.c.l.b16 %v1696
        %v2398 = vpack.c.b16 %v2395, %v2394
        %v2399 = vpack.c.b16 %v2397, %v2396
        %v2403 = vsel %vm748, %v2388, 0
        %v2406 = vsel %vm748, %v2389, 0
        %2408 = vmatpush.bf16.msra.mxu0 0
        %2409 = vmatpush.bf16.msra.mxu0 0
        %2410 = vmatpush.bf16.msra.mxu0 0
        %2411 = vmatpush.bf16.msra.mxu0 0
        %2412 = vmatpush.bf16.msra.mxu0 0
        %2413 = vmatpush.bf16.msra.mxu0 0
        %2414 = vmatpush.bf16.msra.mxu0 %v2399
        %2415 = vmatpush.bf16.msra.mxu0 %v2398
        %2416 = vmatmul.bf16.gmra.mxu0 %v2403
        %v2417 = vpop.f32.mrf.mxu0
        %v2418 = vadd.f32 0.0, %v2417
        %v2419 = vpop.f32.mrf.mxu0
        %v2420 = vadd.f32 0.0, %v2419
        %2421 = vmatmul.bf16.gmra.mxu0 %v2406
        %v2422 = vpop.f32.mrf.mxu0
        %v2423 = vadd.f32 0.0, %v2422
        %v2424 = vpop.f32.mrf.mxu0
        %2425 = vdwg.mxu0
        %v2426 = vadd.f32 %v1684, %v2418
        %v2427 = vadd.f32 %v1685, %v2420
        %v2428 = vadd.f32 %v1686, %v2423
        %v2429 = vperm.slane %v1720, 4
        %v2430 = vadd.f32 %v2426, %v2429
        %v2431 = vadd.f32 %v2427, %v2429
        %v2432 = vadd.f32 %v2428, %v2429
        %v2433 = vsel %vm748, %v2430, 0.0
        %2434 = vadd.xlane.f32.xlu0 %v2433
        %v2435 = vpop.xlane.xlu0 %2434
        %v2436 = vsel %vm748, %v2431, 0.0
        %2437 = vadd.xlane.f32.xlu0 %v2436
        %v2438 = vpop.xlane.xlu0 %2437
        %v2439 = vsel %vm755, %v2432, 0.0
        %2440 = vadd.xlane.f32.xlu0 %v2439
        %v2441 = vpop.xlane.xlu0 %2440
        %v2442 = vmul.f32 %v2435, %v765
        %v2443 = vmul.f32 %v2438, %v765
        %v2444 = vmul.f32 %v2441, %v765
        %v2445 = vsub.f32 %v2430, %v2442
        %v2446 = vsub.f32 %v2431, %v2443
        %v2447 = vsub.f32 %v2432, %v2444
        %v2448 = vmul.f32 %v2445, %v2445
        %v2449 = vmul.f32 %v2446, %v2446
        %v2450 = vmul.f32 %v2447, %v2447
        %v2451 = vsel %vm748, %v2448, 0.0
        %2452 = vadd.xlane.f32.xlu0 %v2451
        %v2453 = vpop.xlane.xlu0 %2452
        %v2454 = vsel %vm748, %v2449, 0.0
        %2455 = vadd.xlane.f32.xlu0 %v2454
        %v2456 = vpop.xlane.xlu0 %2455
        %v2457 = vsel %vm755, %v2450, 0.0
        %2458 = vadd.xlane.f32.xlu0 %v2457
        %v2459 = vpop.xlane.xlu0 %2458
        %v2460 = vmul.f32 %v2453, %v765
        %v2461 = vmul.f32 %v2456, %v765
        %v2462 = vmul.f32 %v2459, %v765
        %v2463 = vadd.f32 %v2460, 1e-05
        %v2464 = vadd.f32 %v2461, 1e-05
        %v2465 = vadd.f32 %v2462, 1e-05
        %v2466 = vrsqrt.pop %v2463
        %v2467 = vmul.f32 %v2466, %v2463
        %v2468 = vmul.f32 %v2467, %v2466
        %v2469 = vmul.f32 0.5, %v2468
        %v2470 = vsub.f32 1.5, %v2469
        %v2471 = vmul.f32 %v2466, %v2470
        %vm2472 = vweird.f32 %v2463
        %vm2473 = vweird.f32 %v2466
        %vm2474 = vmor %vm2472, %vm2473
        %v2475 = vsel %vm2474, %v2466, %v2471
        %v2476 = vrsqrt.pop %v2464
        %v2477 = vmul.f32 %v2476, %v2464
        %v2478 = vmul.f32 %v2477, %v2476
        %v2479 = vmul.f32 0.5, %v2478
        %v2480 = vsub.f32 1.5, %v2479
        %v2481 = vmul.f32 %v2476, %v2480
        %vm2482 = vweird.f32 %v2464
        %vm2483 = vweird.f32 %v2476
        %vm2484 = vmor %vm2482, %vm2483
        %v2485 = vsel %vm2484, %v2476, %v2481
        %v2486 = vrsqrt.pop %v2465
        %v2487 = vmul.f32 %v2486, %v2465
        %v2488 = vmul.f32 %v2487, %v2486
        %v2489 = vmul.f32 0.5, %v2488
        %v2490 = vsub.f32 1.5, %v2489
        %v2491 = vmul.f32 %v2486, %v2490
        %vm2492 = vweird.f32 %v2465
        %vm2493 = vweird.f32 %v2486
        %vm2494 = vmor %vm2492, %vm2493
        %v2495 = vsel %vm2494, %v2486, %v2491
        %v2496 = vmul.f32 %v2445, %v2475
        %v2497 = vmul.f32 %v2446, %v2485
        %v2498 = vmul.f32 %v2447, %v2495
        %v2499 = vperm.slane %v1720, 2
        %v2500 = vmul.f32 %v2496, %v2499
        %v2501 = vmul.f32 %v2497, %v2499
        %v2502 = vmul.f32 %v2498, %v2499
        %v2503 = vperm.slane %v1720, 3
        %v2504 = vadd.f32 %v2500, %v2503
        %v2505 = vadd.f32 %v2501, %v2503
        %v2506 = vadd.f32 %v2502, %v2503
        %v2507 = vpack.c.bf16 %v2505, %v2504
        %v2508 = vpack.c.bf16 %v2506, %v2506
        %v2509 = vperm.slane %v1720, 7
        %v2514 = vunpack.c.l.b16 %v1698
        %v2515 = vunpack.c.l.b16 %v1699
        %v2516 = vunpack.c.l.b16 %v1700
        %v2517 = vunpack.c.l.b16 %v1701
        %v2518 = vpack.c.b16 %v2515, %v2514
        %v2519 = vpack.c.b16 %v2517, %v2516
        %v2523 = vsel %vm748, %v2507, 0
        %v2526 = vsel %vm748, %v2508, 0
        %2528 = vmatpush.bf16.msra.mxu0 0
        %2529 = vmatpush.bf16.msra.mxu0 0
        %2530 = vmatpush.bf16.msra.mxu0 0
        %2531 = vmatpush.bf16.msra.mxu0 0
        %2532 = vmatpush.bf16.msra.mxu0 0
        %2533 = vmatpush.bf16.msra.mxu0 0
        %2534 = vmatpush.bf16.msra.mxu0 %v2519
        %2535 = vmatpush.bf16.msra.mxu0 %v2518
        %2536 = vmatmul.bf16.gmra.mxu0 %v2523
        %v2537 = vpop.f32.mrf.mxu0
        %v2538 = vadd.f32 %v2509, %v2537
        %v2539 = vpop.f32.mrf.mxu0
        %v2540 = vadd.f32 %v2509, %v2539
        %2541 = vmatmul.bf16.gmra.mxu0 %v2526
        %v2542 = vpop.f32.mrf.mxu0
        %v2543 = vadd.f32 %v2509, %v2542
        %v2544 = vpop.f32.mrf.mxu0
        %2545 = vdwg.mxu0
        %v2546 = vmul.f32 %v2538, %v2538
        %v2547 = vmul.f32 %v2540, %v2540
        %v2548 = vmul.f32 %v2543, %v2543
        %v2549 = vmul.f32 %v2538, %v2546
        %v2550 = vmul.f32 %v2540, %v2547
        %v2551 = vmul.f32 %v2543, %v2548
        %v2552 = vmul.f32 %v2549, 0.044715
        %v2553 = vmul.f32 %v2550, 0.044715
        %v2554 = vmul.f32 %v2551, 0.044715
        %v2555 = vadd.f32 %v2538, %v2552
        %v2556 = vadd.f32 %v2540, %v2553
        %v2557 = vadd.f32 %v2543, %v2554
        %v2558 = vmul.f32 %v2555, 0.7978846
        %v2559 = vmul.f32 %v2556, 0.7978846
        %v2560 = vmul.f32 %v2557, 0.7978846
        %v2561 = vtanh.pop %v2558
        %v2562 = vtanh.pop %v2559
        %v2563 = vtanh.pop %v2560
        %v2564 = vadd.f32 %v2561, 1.0
        %v2565 = vadd.f32 %v2562, 1.0
        %v2566 = vadd.f32 %v2563, 1.0
        %v2567 = vmul.f32 %v2564, 0.5
        %v2568 = vmul.f32 %v2565, 0.5
        %v2569 = vmul.f32 %v2566, 0.5
        %v2570 = vmul.f32 %v2538, %v2567
        %v2571 = vmul.f32 %v2540, %v2568
        %v2572 = vmul.f32 %v2543, %v2569
        %v2573 = vpack.c.bf16 %v2571, %v2570
        %v2574 = vpack.c.bf16 %v2572, %v2572
        %v2575 = vperm.slane %v1720, 5
        %v2592 = vunpack.c.l.b16 %v1703
        %v2593 = vunpack.c.l.b16 %v1704
        %v2594 = vunpack.c.l.b16 %v1705
        %v2595 = vunpack.c.l.b16 %v1706
        %v2596 = vunpack.c.l.b16 %v1707
        %v2597 = vunpack.c.l.b16 %v1708
        %v2598 = vunpack.c.l.b16 %v1709
        %v2599 = vunpack.c.l.b16 %v1710
        %v2600 = vunpack.c.l.b16 %v1711
        %v2601 = vunpack.c.l.b16 %v1712
        %v2602 = vunpack.c.l.b16 %v1713
        %v2603 = vunpack.c.l.b16 %v1714
        %v2604 = vunpack.c.l.b16 %v1715
        %v2605 = vunpack.c.l.b16 %v1716
        %v2606 = vunpack.c.l.b16 %v1717
        %v2607 = vunpack.c.l.b16 %v1718
        %v2608 = vpack.c.b16 %v2593, %v2592
        %v2609 = vpack.c.b16 %v2595, %v2594
        %v2610 = vpack.c.b16 %v2597, %v2596
        %v2611 = vpack.c.b16 %v2599, %v2598
        %v2612 = vpack.c.b16 %v2601, %v2600
        %v2613 = vpack.c.b16 %v2603, %v2602
        %v2614 = vpack.c.b16 %v2605, %v2604
        %v2615 = vpack.c.b16 %v2607, %v2606
        %2624 = vmatpush.bf16.msra.mxu0 %v2615
        %2625 = vmatpush.bf16.msra.mxu0 %v2614
        %2626 = vmatpush.bf16.msra.mxu0 %v2613
        %2627 = vmatpush.bf16.msra.mxu0 %v2612
        %2628 = vmatpush.bf16.msra.mxu0 %v2611
        %2629 = vmatpush.bf16.msra.mxu0 %v2610
        %2630 = vmatpush.bf16.msra.mxu0 %v2609
        %2631 = vmatpush.bf16.msra.mxu0 %v2608
        %2632 = vmatmul.bf16.gmra.mxu0 %v2573
        %v2633 = vpop.f32.mrf.mxu0
        %v2634 = vadd.f32 %v2575, %v2633
        %v2635 = vpop.f32.mrf.mxu0
        %v2636 = vadd.f32 %v2575, %v2635
        %2637 = vmatmul.bf16.gmra.mxu0 %v2574
        %v2638 = vpop.f32.mrf.mxu0
        %v2639 = vadd.f32 %v2575, %v2638
        %v2640 = vpop.f32.mrf.mxu0
        %2641 = vdwg.mxu0
        %v2642 = vadd.f32 %v2430, %v2634
        %v2643 = vadd.f32 %v2431, %v2636
        %v2644 = vadd.f32 %v2432, %v2639
        %v2645 = vsel %vm748, %v2642, 0.0
        %2646 = vadd.xlane.f32.xlu0 %v2645
        %v2647 = vpop.xlane.xlu0 %2646
        %v2648 = vsel %vm748, %v2643, 0.0
        %2649 = vadd.xlane.f32.xlu0 %v2648
        %v2650 = vpop.xlane.xlu0 %2649
        %v2651 = vsel %vm755, %v2644, 0.0
        %2652 = vadd.xlane.f32.xlu0 %v2651
        %v2653 = vpop.xlane.xlu0 %2652
        %v2654 = vmul.f32 %v2647, %v765
        %v2655 = vmul.f32 %v2650, %v765
        %v2656 = vmul.f32 %v2653, %v765
        %v2657 = vsub.f32 %v2642, %v2654
        %v2658 = vsub.f32 %v2643, %v2655
        %v2659 = vsub.f32 %v2644, %v2656
        %v2660 = vmul.f32 %v2657, %v2657
        %v2661 = vmul.f32 %v2658, %v2658
        %v2662 = vmul.f32 %v2659, %v2659
        %v2663 = vsel %vm748, %v2660, 0.0
        %2664 = vadd.xlane.f32.xlu0 %v2663
        %v2665 = vpop.xlane.xlu0 %2664
        %v2666 = vsel %vm748, %v2661, 0.0
        %2667 = vadd.xlane.f32.xlu0 %v2666
        %v2668 = vpop.xlane.xlu0 %2667
        %v2669 = vsel %vm755, %v2662, 0.0
        %2670 = vadd.xlane.f32.xlu0 %v2669
        %v2671 = vpop.xlane.xlu0 %2670
        %v2672 = vmul.f32 %v2665, %v765
        %v2673 = vmul.f32 %v2668, %v765
        %v2674 = vmul.f32 %v2671, %v765
        %v2675 = vadd.f32 %v2672, 1e-05
        %v2676 = vadd.f32 %v2673, 1e-05
        %v2677 = vadd.f32 %v2674, 1e-05
        %v2678 = vrsqrt.pop %v2675
        %v2679 = vmul.f32 %v2678, %v2675
        %v2680 = vmul.f32 %v2679, %v2678
        %v2681 = vmul.f32 0.5, %v2680
        %v2682 = vsub.f32 1.5, %v2681
        %v2683 = vmul.f32 %v2678, %v2682
        %vm2684 = vweird.f32 %v2675
        %vm2685 = vweird.f32 %v2678
        %vm2686 = vmor %vm2684, %vm2685
        %v2687 = vsel %vm2686, %v2678, %v2683
        %v2688 = vrsqrt.pop %v2676
        %v2689 = vmul.f32 %v2688, %v2676
        %v2690 = vmul.f32 %v2689, %v2688
        %v2691 = vmul.f32 0.5, %v2690
        %v2692 = vsub.f32 1.5, %v2691
        %v2693 = vmul.f32 %v2688, %v2692
        %vm2694 = vweird.f32 %v2676
        %vm2695 = vweird.f32 %v2688
        %vm2696 = vmor %vm2694, %vm2695
        %v2697 = vsel %vm2696, %v2688, %v2693
        %v2698 = vrsqrt.pop %v2677
        %v2699 = vmul.f32 %v2698, %v2677
        %v2700 = vmul.f32 %v2699, %v2698
        %v2701 = vmul.f32 0.5, %v2700
        %v2702 = vsub.f32 1.5, %v2701
        %v2703 = vmul.f32 %v2698, %v2702
        %vm2704 = vweird.f32 %v2677
        %vm2705 = vweird.f32 %v2698
        %vm2706 = vmor %vm2704, %vm2705
        %v2707 = vsel %vm2706, %v2698, %v2703
        %v2708 = vmul.f32 %v2657, %v2687
        %v2709 = vmul.f32 %v2658, %v2697
        %v2710 = vmul.f32 %v2659, %v2707
        %v2711 = vperm.slane %v611, 0
        %v2712 = vmul.f32 %v2708, %v2711
        %v2713 = vmul.f32 %v2709, %v2711
        %v2714 = vmul.f32 %v2710, %v2711
        %v2715 = vperm.slane %v612, 0
        %v2716 = vadd.f32 %v2712, %v2715
        %v2717 = vadd.f32 %v2713, %v2715
        %v2718 = vadd.f32 %v2714, %v2715
        %v2719 = vld [vmem:[%s11] sm:$0xf]
        %v2720 = vld [vmem:[%s11 + $0x4] sm:$0xf]
        %v2721 = vld [vmem:[%s11 + $0x8] sm:$0xf]
        %v2722 = vld [vmem:[%s11 + $0xc] sm:$0xf]
        %v2723 = vld [vmem:[%s12] sm:$0xf]
        %v2724 = vld [vmem:[%s12 + $0x4] sm:$0xf]
        %v2725 = vld [vmem:[%s12 + $0x8] sm:$0xf]
        %v2726 = vld [vmem:[%s12 + $0xc] sm:$0xf]
        %v2727 = vld [vmem:[%s13] sm:$0xf]
        %v2728 = vld [vmem:[%s13 + $0x4] sm:$0xf]
        %v2729 = vld [vmem:[%s13 + $0x8] sm:$0xf]
        %v2730 = vld [vmem:[%s13 + $0xc] sm:$0xf]
        %v2731 = vld [vmem:[%s14] sm:$0xf]
        %v2732 = vld [vmem:[%s14 + $0x4] sm:$0xf]
        %v2733 = vld [vmem:[%s14 + $0x8] sm:$0xf]
        %v2734 = vld [vmem:[%s14 + $0xc] sm:$0xf]
        %v2735 = vld [vmem:[%s14 + $0x10] sm:$0xf]
        %v2736 = vld [vmem:[%s14 + $0x14] sm:$0xf]
        %v2737 = vld [vmem:[%s14 + $0x18] sm:$0xf]
        %v2738 = vld [vmem:[%s14 + $0x1c] sm:$0xf]
        %v2739 = vld [vmem:[%s14 + $0x20] sm:$0xf]
        %v2740 = vld [vmem:[%s14 + $0x24] sm:$0xf]
        %v2741 = vld [vmem:[%s14 + $0x28] sm:$0xf]
        %v2742 = vld [vmem:[%s14 + $0x2c] sm:$0xf]
        %v2743 = vld [vmem:[%s14 + $0x30] sm:$0xf]
        %v2744 = vld [vmem:[%s14 + $0x34] sm:$0xf]
        %v2745 = vld [vmem:[%s14 + $0x38] sm:$0xf]
        %v2746 = vld [vmem:[%s14 + $0x3c] sm:$0xf]
        %v2747 = vld [vmem:[%s15] sm:$0xff]
        %v2748 = vsel %vm748, %v2716, 0.0
        %2749 = vadd.xlane.f32.xlu0 %v2748
        %v2750 = vpop.xlane.xlu0 %2749
        %v2751 = vsel %vm748, %v2717, 0.0
        %2752 = vadd.xlane.f32.xlu0 %v2751
        %v2753 = vpop.xlane.xlu0 %2752
        %v2754 = vsel %vm755, %v2718, 0.0
        %2755 = vadd.xlane.f32.xlu0 %v2754
        %v2756 = vpop.xlane.xlu0 %2755
        %v2757 = vmul.f32 %v2750, %v765
        %v2758 = vmul.f32 %v2753, %v765
        %v2759 = vmul.f32 %v2756, %v765
        %v2760 = vsub.f32 %v2716, %v2757
        %v2761 = vsub.f32 %v2717, %v2758
        %v2762 = vsub.f32 %v2718, %v2759
        %v2763 = vmul.f32 %v2760, %v2760
        %v2764 = vmul.f32 %v2761, %v2761
        %v2765 = vmul.f32 %v2762, %v2762
        %v2766 = vsel %vm748, %v2763, 0.0
        %2767 = vadd.xlane.f32.xlu0 %v2766
        %v2768 = vpop.xlane.xlu0 %2767
        %v2769 = vsel %vm748, %v2764, 0.0
        %2770 = vadd.xlane.f32.xlu0 %v2769
        %v2771 = vpop.xlane.xlu0 %2770
        %v2772 = vsel %vm755, %v2765, 0.0
        %2773 = vadd.xlane.f32.xlu0 %v2772
        %v2774 = vpop.xlane.xlu0 %2773
        %v2775 = vmul.f32 %v2768, %v765
        %v2776 = vmul.f32 %v2771, %v765
        %v2777 = vmul.f32 %v2774, %v765
        %v2778 = vadd.f32 %v2775, 1e-05
        %v2779 = vadd.f32 %v2776, 1e-05
        %v2780 = vadd.f32 %v2777, 1e-05
        %v2781 = vrsqrt.pop %v2778
        %v2782 = vmul.f32 %v2781, %v2778
        %v2783 = vmul.f32 %v2782, %v2781
        %v2784 = vmul.f32 0.5, %v2783
        %v2785 = vsub.f32 1.5, %v2784
        %v2786 = vmul.f32 %v2781, %v2785
        %vm2787 = vweird.f32 %v2778
        %vm2788 = vweird.f32 %v2781
        %vm2789 = vmor %vm2787, %vm2788
        %v2790 = vsel %vm2789, %v2781, %v2786
        %v2791 = vrsqrt.pop %v2779
        %v2792 = vmul.f32 %v2791, %v2779
        %v2793 = vmul.f32 %v2792, %v2791
        %v2794 = vmul.f32 0.5, %v2793
        %v2795 = vsub.f32 1.5, %v2794
        %v2796 = vmul.f32 %v2791, %v2795
        %vm2797 = vweird.f32 %v2779
        %vm2798 = vweird.f32 %v2791
        %vm2799 = vmor %vm2797, %vm2798
        %v2800 = vsel %vm2799, %v2791, %v2796
        %v2801 = vrsqrt.pop %v2780
        %v2802 = vmul.f32 %v2801, %v2780
        %v2803 = vmul.f32 %v2802, %v2801
        %v2804 = vmul.f32 0.5, %v2803
        %v2805 = vsub.f32 1.5, %v2804
        %v2806 = vmul.f32 %v2801, %v2805
        %vm2807 = vweird.f32 %v2780
        %vm2808 = vweird.f32 %v2801
        %vm2809 = vmor %vm2807, %vm2808
        %v2810 = vsel %vm2809, %v2801, %v2806
        %v2811 = vmul.f32 %v2760, %v2790
        %v2812 = vmul.f32 %v2761, %v2800
        %v2813 = vmul.f32 %v2762, %v2810
        %v2814 = vperm.slane %v2747, 0
        %v2815 = vmul.f32 %v2811, %v2814
        %v2816 = vmul.f32 %v2812, %v2814
        %v2817 = vmul.f32 %v2813, %v2814
        %v2818 = vperm.slane %v2747, 1
        %v2819 = vadd.f32 %v2815, %v2818
        %v2820 = vadd.f32 %v2816, %v2818
        %v2821 = vadd.f32 %v2817, %v2818
        %v2822 = vpack.c.bf16 %v2820, %v2819
        %v2823 = vpack.c.bf16 %v2821, %v2821
        %v2824 = vperm.slane %v2747, 6
        %v2829 = vunpack.c.l.b16 %v2719
        %v2830 = vunpack.c.l.b16 %v2720
        %v2831 = vunpack.c.l.b16 %v2721
        %v2832 = vunpack.c.l.b16 %v2722
        %v2833 = vpack.c.b16 %v2830, %v2829
        %v2834 = vpack.c.b16 %v2832, %v2831
        %v2838 = vsel %vm748, %v2822, 0
        %v2841 = vsel %vm748, %v2823, 0
        %2843 = vmatpush.bf16.msra.mxu0 0
        %2844 = vmatpush.bf16.msra.mxu0 0
        %2845 = vmatpush.bf16.msra.mxu0 0
        %2846 = vmatpush.bf16.msra.mxu0 0
        %2847 = vmatpush.bf16.msra.mxu0 0
        %2848 = vmatpush.bf16.msra.mxu0 0
        %2849 = vmatpush.bf16.msra.mxu0 %v2834
        %2850 = vmatpush.bf16.msra.mxu0 %v2833
        %2851 = vmatmul.bf16.gmra.mxu0 %v2838
        %v2852 = vpop.f32.mrf.mxu0
        %v2853 = vadd.f32 %v2824, %v2852
        %v2854 = vpop.f32.mrf.mxu0
        %v2855 = vadd.f32 %v2824, %v2854
        %2856 = vmatmul.bf16.gmra.mxu0 %v2841
        %v2857 = vpop.f32.mrf.mxu0
        %v2858 = vadd.f32 %v2824, %v2857
        %v2859 = vpop.f32.mrf.mxu0
        %2860 = vdwg.mxu0
        %2864 = vrot.lane.b32.xlu0 %v2853, 96
        %v2865 = vpop.permute.xlu0 %2864
        %2866 = vrot.lane.b32.xlu0 %v2855, 96
        %v2867 = vpop.permute.xlu0 %2866
        %2868 = vrot.lane.b32.xlu0 %v2858, 96
        %v2869 = vpop.permute.xlu0 %2868
        %v2870 = vsel %vm879, %v2853, 0
        %v2872 = vsel %vm879, %v2855, 0
        %v2874 = vsel %vm879, %v2858, 0
        %v2876 = vsel %vm879, %v2865, 0
        %v2878 = vsel %vm879, %v2867, 0
        %v2880 = vsel %vm879, %v2869, 0
        %2882 = vmatpush.xpose.msra.mxu0 0.0
        %2883 = vmatpush.xpose.msra.mxu0 0.0
        %2884 = vmatpush.xpose.msra.mxu0 0.0
        %2885 = vmatpush.xpose.msra.mxu0 0.0
        %2886 = vmatpush.xpose.msra.mxu0 0.0
        %2887 = vmatpush.xpose.msra.mxu0 0.0
        %2888 = vmatpush.xpose.msra.mxu0 0.0
        %2889 = vmatpush.xpose.msra.mxu0 0.0
        %2890 = vmatpush.xpose.msra.mxu0 0.0
        %2891 = vmatpush.xpose.msra.mxu0 0.0
        %2892 = vmatpush.xpose.msra.mxu0 0.0
        %2893 = vmatpush.xpose.msra.mxu0 0.0
        %2894 = vmatpush.xpose.msra.mxu0 0.0
        %2895 = vmatpush.xpose.msra.mxu0 %v2880
        %2896 = vmatpush.xpose.msra.mxu0 %v2878
        %2897 = vmatpush.xpose.msra.mxu0 %v2876
        %2898 = vmatmul.f32.gmra.mxu0 %v2870
        %v2899 = vpop.f32.mrf.mxu0
        %v2900 = vadd.f32 0.0, %v2899
        %2901 = vmatmul.f32.gmra.mxu0 %v2872
        %v2902 = vpop.f32.mrf.mxu0
        %v2903 = vadd.f32 0.0, %v2902
        %2904 = vmatmul.f32.gmra.mxu0 %v2874
        %v2905 = vpop.f32.mrf.mxu0
        %v2906 = vadd.f32 0.0, %v2905
        %2907 = vdwg.mxu0
        %v2908 = vsel %vm918, %v2900, -inf
        %2909 = vmax.xlane.f32.xlu0 %v2908
        %v2910 = vpop.xlane.xlu0 %2909
        %v2911 = vsel %vm918, %v2903, -inf
        %2912 = vmax.xlane.f32.xlu0 %v2911
        %v2913 = vpop.xlane.xlu0 %2912
        %v2914 = vsel %vm925, %v2906, -inf
        %2915 = vmax.xlane.f32.xlu0 %v2914
        %v2916 = vpop.xlane.xlu0 %2915
        %v2917 = vsub.f32 %v2900, %v2910
        %v2918 = vsub.f32 %v2903, %v2913
        %v2919 = vsub.f32 %v2906, %v2916
        %v2920 = vmul.f32 %v2917, 1.442695
        %v2921 = vpow.pop %v2920
        %v2922 = vmul.f32 %v2918, 1.442695
        %v2923 = vpow.pop %v2922
        %v2924 = vmul.f32 %v2919, 1.442695
        %v2925 = vpow.pop %v2924
        %v2926 = vsel %vm918, %v2921, 0.0
        %2927 = vadd.xlane.f32.xlu0 %v2926
        %v2928 = vpop.xlane.xlu0 %2927
        %v2929 = vsel %vm918, %v2923, 0.0
        %2930 = vadd.xlane.f32.xlu0 %v2929
        %v2931 = vpop.xlane.xlu0 %2930
        %v2932 = vsel %vm925, %v2925, 0.0
        %2933 = vadd.xlane.f32.xlu0 %v2932
        %v2934 = vpop.xlane.xlu0 %2933
        %v2935 = vrcp.pop %v2928
        %v2936 = vrcp.pop %v2931
        %v2937 = vrcp.pop %v2934
        %v2938 = vmul.f32 %v2921, %v2935
        %v2939 = vmul.f32 %v2923, %v2936
        %v2940 = vmul.f32 %v2925, %v2937
        %2941 = vrot.lane.b32.xlu0 %v2853, 64
        %v2942 = vpop.permute.xlu0 %2941
        %2943 = vrot.lane.b32.xlu0 %v2855, 64
        %v2944 = vpop.permute.xlu0 %2943
        %2945 = vrot.lane.b32.xlu0 %v2858, 64
        %v2946 = vpop.permute.xlu0 %2945
        %v2950 = vsel %vm918, %v2938, 0
        %v2953 = vsel %vm918, %v2939, 0
        %v2956 = vsel %vm918, %v2940, 0
        %v2958 = vsel %vm970, %v2946, 0
        %2960 = vmatpush.msra.mxu0 0.0
        %2961 = vmatpush.msra.mxu0 0.0
        %2962 = vmatpush.msra.mxu0 0.0
        %2963 = vmatpush.msra.mxu0 0.0
        %2964 = vmatpush.msra.mxu0 0.0
        %2965 = vmatpush.msra.mxu0 0.0
        %2966 = vmatpush.msra.mxu0 0.0
        %2967 = vmatpush.msra.mxu0 0.0
        %2968 = vmatpush.msra.mxu0 0.0
        %2969 = vmatpush.msra.mxu0 0.0
        %2970 = vmatpush.msra.mxu0 0.0
        %2971 = vmatpush.msra.mxu0 0.0
        %2972 = vmatpush.msra.mxu0 0.0
        %2973 = vmatpush.msra.mxu0 %v2958
        %2974 = vmatpush.msra.mxu0 %v2944
        %2975 = vmatpush.msra.mxu0 %v2942
        %2976 = vmatmul.f32.gmra.mxu0 %v2950
        %v2977 = vpop.f32.mrf.mxu0
        %v2978 = vadd.f32 0.0, %v2977
        %2979 = vmatmul.f32.gmra.mxu0 %v2953
        %v2980 = vpop.f32.mrf.mxu0
        %v2981 = vadd.f32 0.0, %v2980
        %2982 = vmatmul.f32.gmra.mxu0 %v2956
        %v2983 = vpop.f32.mrf.mxu0
        %v2984 = vadd.f32 0.0, %v2983
        %2985 = vdwg.mxu0
        %2986 = vrot.lane.b32.xlu0 %v2853, 120
        %v2987 = vpop.permute.xlu0 %2986
        %2988 = vrot.lane.b32.xlu0 %v2855, 120
        %v2989 = vpop.permute.xlu0 %2988
        %2990 = vrot.lane.b32.xlu0 %v2858, 120
        %v2991 = vpop.permute.xlu0 %2990
        %2992 = vrot.lane.b32.xlu0 %v2853, 88
        %v2993 = vpop.permute.xlu0 %2992
        %2994 = vrot.lane.b32.xlu0 %v2855, 88
        %v2995 = vpop.permute.xlu0 %2994
        %2996 = vrot.lane.b32.xlu0 %v2858, 88
        %v2997 = vpop.permute.xlu0 %2996
        %v2998 = vsel %vm879, %v2987, 0
        %v3000 = vsel %vm879, %v2989, 0
        %v3002 = vsel %vm879, %v2991, 0
        %v3004 = vsel %vm879, %v2993, 0
        %v3006 = vsel %vm879, %v2995, 0
        %v3008 = vsel %vm879, %v2997, 0
        %3010 = vmatpush.xpose.msra.mxu0 0.0
        %3011 = vmatpush.xpose.msra.mxu0 0.0
        %3012 = vmatpush.xpose.msra.mxu0 0.0
        %3013 = vmatpush.xpose.msra.mxu0 0.0
        %3014 = vmatpush.xpose.msra.mxu0 0.0
        %3015 = vmatpush.xpose.msra.mxu0 0.0
        %3016 = vmatpush.xpose.msra.mxu0 0.0
        %3017 = vmatpush.xpose.msra.mxu0 0.0
        %3018 = vmatpush.xpose.msra.mxu0 0.0
        %3019 = vmatpush.xpose.msra.mxu0 0.0
        %3020 = vmatpush.xpose.msra.mxu0 0.0
        %3021 = vmatpush.xpose.msra.mxu0 0.0
        %3022 = vmatpush.xpose.msra.mxu0 0.0
        %3023 = vmatpush.xpose.msra.mxu0 %v3008
        %3024 = vmatpush.xpose.msra.mxu0 %v3006
        %3025 = vmatpush.xpose.msra.mxu0 %v3004
        %3026 = vmatmul.f32.gmra.mxu0 %v2998
        %v3027 = vpop.f32.mrf.mxu0
        %v3028 = vadd.f32 0.0, %v3027
        %3029 = vmatmul.f32.gmra.mxu0 %v3000
        %v3030 = vpop.f32.mrf.mxu0
        %v3031 = vadd.f32 0.0, %v3030
        %3032 = vmatmul.f32.gmra.mxu0 %v3002
        %v3033 = vpop.f32.mrf.mxu0
        %v3034 = vadd.f32 0.0, %v3033
        %3035 = vdwg.mxu0
        %v3036 = vsel %vm918, %v3028, -inf
        %3037 = vmax.xlane.f32.xlu0 %v3036
        %v3038 = vpop.xlane.xlu0 %3037
        %v3039 = vsel %vm918, %v3031, -inf
        %3040 = vmax.xlane.f32.xlu0 %v3039
        %v3041 = vpop.xlane.xlu0 %3040
        %v3042 = vsel %vm925, %v3034, -inf
        %3043 = vmax.xlane.f32.xlu0 %v3042
        %v3044 = vpop.xlane.xlu0 %3043
        %v3045 = vsub.f32 %v3028, %v3038
        %v3046 = vsub.f32 %v3031, %v3041
        %v3047 = vsub.f32 %v3034, %v3044
        %v3048 = vmul.f32 %v3045, 1.442695
        %v3049 = vpow.pop %v3048
        %v3050 = vmul.f32 %v3046, 1.442695
        %v3051 = vpow.pop %v3050
        %v3052 = vmul.f32 %v3047, 1.442695
        %v3053 = vpow.pop %v3052
        %v3054 = vsel %vm918, %v3049, 0.0
        %3055 = vadd.xlane.f32.xlu0 %v3054
        %v3056 = vpop.xlane.xlu0 %3055
        %v3057 = vsel %vm918, %v3051, 0.0
        %3058 = vadd.xlane.f32.xlu0 %v3057
        %v3059 = vpop.xlane.xlu0 %3058
        %v3060 = vsel %vm925, %v3053, 0.0
        %3061 = vadd.xlane.f32.xlu0 %v3060
        %v3062 = vpop.xlane.xlu0 %3061
        %v3063 = vrcp.pop %v3056
        %v3064 = vrcp.pop %v3059
        %v3065 = vrcp.pop %v3062
        %v3066 = vmul.f32 %v3049, %v3063
        %v3067 = vmul.f32 %v3051, %v3064
        %v3068 = vmul.f32 %v3053, %v3065
        %3069 = vrot.lane.b32.xlu0 %v2853, 56
        %v3070 = vpop.permute.xlu0 %3069
        %3071 = vrot.lane.b32.xlu0 %v2855, 56
        %v3072 = vpop.permute.xlu0 %3071
        %3073 = vrot.lane.b32.xlu0 %v2858, 56
        %v3074 = vpop.permute.xlu0 %3073
        %v3078 = vsel %vm918, %v3066, 0
        %v3081 = vsel %vm918, %v3067, 0
        %v3084 = vsel %vm918, %v3068, 0
        %v3086 = vsel %vm970, %v3074, 0
        %3088 = vmatpush.msra.mxu0 0.0
        %3089 = vmatpush.msra.mxu0 0.0
        %3090 = vmatpush.msra.mxu0 0.0
        %3091 = vmatpush.msra.mxu0 0.0
        %3092 = vmatpush.msra.mxu0 0.0
        %3093 = vmatpush.msra.mxu0 0.0
        %3094 = vmatpush.msra.mxu0 0.0
        %3095 = vmatpush.msra.mxu0 0.0
        %3096 = vmatpush.msra.mxu0 0.0
        %3097 = vmatpush.msra.mxu0 0.0
        %3098 = vmatpush.msra.mxu0 0.0
        %3099 = vmatpush.msra.mxu0 0.0
        %3100 = vmatpush.msra.mxu0 0.0
        %3101 = vmatpush.msra.mxu0 %v3086
        %3102 = vmatpush.msra.mxu0 %v3072
        %3103 = vmatpush.msra.mxu0 %v3070
        %3104 = vmatmul.f32.gmra.mxu0 %v3078
        %v3105 = vpop.f32.mrf.mxu0
        %v3106 = vadd.f32 0.0, %v3105
        %3107 = vmatmul.f32.gmra.mxu0 %v3081
        %v3108 = vpop.f32.mrf.mxu0
        %v3109 = vadd.f32 0.0, %v3108
        %3110 = vmatmul.f32.gmra.mxu0 %v3084
        %v3111 = vpop.f32.mrf.mxu0
        %v3112 = vadd.f32 0.0, %v3111
        %3113 = vdwg.mxu0
        %3114 = vrot.lane.b32.xlu0 %v2853, 112
        %v3115 = vpop.permute.xlu0 %3114
        %3116 = vrot.lane.b32.xlu0 %v2855, 112
        %v3117 = vpop.permute.xlu0 %3116
        %3118 = vrot.lane.b32.xlu0 %v2858, 112
        %v3119 = vpop.permute.xlu0 %3118
        %3120 = vrot.lane.b32.xlu0 %v2853, 80
        %v3121 = vpop.permute.xlu0 %3120
        %3122 = vrot.lane.b32.xlu0 %v2855, 80
        %v3123 = vpop.permute.xlu0 %3122
        %3124 = vrot.lane.b32.xlu0 %v2858, 80
        %v3125 = vpop.permute.xlu0 %3124
        %v3126 = vsel %vm879, %v3115, 0
        %v3128 = vsel %vm879, %v3117, 0
        %v3130 = vsel %vm879, %v3119, 0
        %v3132 = vsel %vm879, %v3121, 0
        %v3134 = vsel %vm879, %v3123, 0
        %v3136 = vsel %vm879, %v3125, 0
        %3138 = vmatpush.xpose.msra.mxu0 0.0
        %3139 = vmatpush.xpose.msra.mxu0 0.0
        %3140 = vmatpush.xpose.msra.mxu0 0.0
        %3141 = vmatpush.xpose.msra.mxu0 0.0
        %3142 = vmatpush.xpose.msra.mxu0 0.0
        %3143 = vmatpush.xpose.msra.mxu0 0.0
        %3144 = vmatpush.xpose.msra.mxu0 0.0
        %3145 = vmatpush.xpose.msra.mxu0 0.0
        %3146 = vmatpush.xpose.msra.mxu0 0.0
        %3147 = vmatpush.xpose.msra.mxu0 0.0
        %3148 = vmatpush.xpose.msra.mxu0 0.0
        %3149 = vmatpush.xpose.msra.mxu0 0.0
        %3150 = vmatpush.xpose.msra.mxu0 0.0
        %3151 = vmatpush.xpose.msra.mxu0 %v3136
        %3152 = vmatpush.xpose.msra.mxu0 %v3134
        %3153 = vmatpush.xpose.msra.mxu0 %v3132
        %3154 = vmatmul.f32.gmra.mxu0 %v3126
        %v3155 = vpop.f32.mrf.mxu0
        %v3156 = vadd.f32 0.0, %v3155
        %3157 = vmatmul.f32.gmra.mxu0 %v3128
        %v3158 = vpop.f32.mrf.mxu0
        %v3159 = vadd.f32 0.0, %v3158
        %3160 = vmatmul.f32.gmra.mxu0 %v3130
        %v3161 = vpop.f32.mrf.mxu0
        %v3162 = vadd.f32 0.0, %v3161
        %3163 = vdwg.mxu0
        %v3164 = vsel %vm918, %v3156, -inf
        %3165 = vmax.xlane.f32.xlu0 %v3164
        %v3166 = vpop.xlane.xlu0 %3165
        %v3167 = vsel %vm918, %v3159, -inf
        %3168 = vmax.xlane.f32.xlu0 %v3167
        %v3169 = vpop.xlane.xlu0 %3168
        %v3170 = vsel %vm925, %v3162, -inf
        %3171 = vmax.xlane.f32.xlu0 %v3170
        %v3172 = vpop.xlane.xlu0 %3171
        %v3173 = vsub.f32 %v3156, %v3166
        %v3174 = vsub.f32 %v3159, %v3169
        %v3175 = vsub.f32 %v3162, %v3172
        %v3176 = vmul.f32 %v3173, 1.442695
        %v3177 = vpow.pop %v3176
        %v3178 = vmul.f32 %v3174, 1.442695
        %v3179 = vpow.pop %v3178
        %v3180 = vmul.f32 %v3175, 1.442695
        %v3181 = vpow.pop %v3180
        %v3182 = vsel %vm918, %v3177, 0.0
        %3183 = vadd.xlane.f32.xlu0 %v3182
        %v3184 = vpop.xlane.xlu0 %3183
        %v3185 = vsel %vm918, %v3179, 0.0
        %3186 = vadd.xlane.f32.xlu0 %v3185
        %v3187 = vpop.xlane.xlu0 %3186
        %v3188 = vsel %vm925, %v3181, 0.0
        %3189 = vadd.xlane.f32.xlu0 %v3188
        %v3190 = vpop.xlane.xlu0 %3189
        %v3191 = vrcp.pop %v3184
        %v3192 = vrcp.pop %v3187
        %v3193 = vrcp.pop %v3190
        %v3194 = vmul.f32 %v3177, %v3191
        %v3195 = vmul.f32 %v3179, %v3192
        %v3196 = vmul.f32 %v3181, %v3193
        %3197 = vrot.lane.b32.xlu0 %v2853, 48
        %v3198 = vpop.permute.xlu0 %3197
        %3199 = vrot.lane.b32.xlu0 %v2855, 48
        %v3200 = vpop.permute.xlu0 %3199
        %3201 = vrot.lane.b32.xlu0 %v2858, 48
        %v3202 = vpop.permute.xlu0 %3201
        %v3206 = vsel %vm918, %v3194, 0
        %v3209 = vsel %vm918, %v3195, 0
        %v3212 = vsel %vm918, %v3196, 0
        %v3214 = vsel %vm970, %v3202, 0
        %3216 = vmatpush.msra.mxu0 0.0
        %3217 = vmatpush.msra.mxu0 0.0
        %3218 = vmatpush.msra.mxu0 0.0
        %3219 = vmatpush.msra.mxu0 0.0
        %3220 = vmatpush.msra.mxu0 0.0
        %3221 = vmatpush.msra.mxu0 0.0
        %3222 = vmatpush.msra.mxu0 0.0
        %3223 = vmatpush.msra.mxu0 0.0
        %3224 = vmatpush.msra.mxu0 0.0
        %3225 = vmatpush.msra.mxu0 0.0
        %3226 = vmatpush.msra.mxu0 0.0
        %3227 = vmatpush.msra.mxu0 0.0
        %3228 = vmatpush.msra.mxu0 0.0
        %3229 = vmatpush.msra.mxu0 %v3214
        %3230 = vmatpush.msra.mxu0 %v3200
        %3231 = vmatpush.msra.mxu0 %v3198
        %3232 = vmatmul.f32.gmra.mxu0 %v3206
        %v3233 = vpop.f32.mrf.mxu0
        %v3234 = vadd.f32 0.0, %v3233
        %3235 = vmatmul.f32.gmra.mxu0 %v3209
        %v3236 = vpop.f32.mrf.mxu0
        %v3237 = vadd.f32 0.0, %v3236
        %3238 = vmatmul.f32.gmra.mxu0 %v3212
        %v3239 = vpop.f32.mrf.mxu0
        %v3240 = vadd.f32 0.0, %v3239
        %3241 = vdwg.mxu0
        %3242 = vrot.lane.b32.xlu0 %v2853, 104
        %v3243 = vpop.permute.xlu0 %3242
        %3244 = vrot.lane.b32.xlu0 %v2855, 104
        %v3245 = vpop.permute.xlu0 %3244
        %3246 = vrot.lane.b32.xlu0 %v2858, 104
        %v3247 = vpop.permute.xlu0 %3246
        %3248 = vrot.lane.b32.xlu0 %v2853, 72
        %v3249 = vpop.permute.xlu0 %3248
        %3250 = vrot.lane.b32.xlu0 %v2855, 72
        %v3251 = vpop.permute.xlu0 %3250
        %3252 = vrot.lane.b32.xlu0 %v2858, 72
        %v3253 = vpop.permute.xlu0 %3252
        %v3254 = vsel %vm879, %v3243, 0
        %v3256 = vsel %vm879, %v3245, 0
        %v3258 = vsel %vm879, %v3247, 0
        %v3260 = vsel %vm879, %v3249, 0
        %v3262 = vsel %vm879, %v3251, 0
        %v3264 = vsel %vm879, %v3253, 0
        %3266 = vmatpush.xpose.msra.mxu0 0.0
        %3267 = vmatpush.xpose.msra.mxu0 0.0
        %3268 = vmatpush.xpose.msra.mxu0 0.0
        %3269 = vmatpush.xpose.msra.mxu0 0.0
        %3270 = vmatpush.xpose.msra.mxu0 0.0
        %3271 = vmatpush.xpose.msra.mxu0 0.0
        %3272 = vmatpush.xpose.msra.mxu0 0.0
        %3273 = vmatpush.xpose.msra.mxu0 0.0
        %3274 = vmatpush.xpose.msra.mxu0 0.0
        %3275 = vmatpush.xpose.msra.mxu0 0.0
        %3276 = vmatpush.xpose.msra.mxu0 0.0
        %3277 = vmatpush.xpose.msra.mxu0 0.0
        %3278 = vmatpush.xpose.msra.mxu0 0.0
        %3279 = vmatpush.xpose.msra.mxu0 %v3264
        %3280 = vmatpush.xpose.msra.mxu0 %v3262
        %3281 = vmatpush.xpose.msra.mxu0 %v3260
        %3282 = vmatmul.f32.gmra.mxu0 %v3254
        %v3283 = vpop.f32.mrf.mxu0
        %v3284 = vadd.f32 0.0, %v3283
        %3285 = vmatmul.f32.gmra.mxu0 %v3256
        %v3286 = vpop.f32.mrf.mxu0
        %v3287 = vadd.f32 0.0, %v3286
        %3288 = vmatmul.f32.gmra.mxu0 %v3258
        %v3289 = vpop.f32.mrf.mxu0
        %v3290 = vadd.f32 0.0, %v3289
        %3291 = vdwg.mxu0
        %v3292 = vsel %vm918, %v3284, -inf
        %3293 = vmax.xlane.f32.xlu0 %v3292
        %v3294 = vpop.xlane.xlu0 %3293
        %v3295 = vsel %vm918, %v3287, -inf
        %3296 = vmax.xlane.f32.xlu0 %v3295
        %v3297 = vpop.xlane.xlu0 %3296
        %v3298 = vsel %vm925, %v3290, -inf
        %3299 = vmax.xlane.f32.xlu0 %v3298
        %v3300 = vpop.xlane.xlu0 %3299
        %v3301 = vsub.f32 %v3284, %v3294
        %v3302 = vsub.f32 %v3287, %v3297
        %v3303 = vsub.f32 %v3290, %v3300
        %v3304 = vmul.f32 %v3301, 1.442695
        %v3305 = vpow.pop %v3304
        %v3306 = vmul.f32 %v3302, 1.442695
        %v3307 = vpow.pop %v3306
        %v3308 = vmul.f32 %v3303, 1.442695
        %v3309 = vpow.pop %v3308
        %v3310 = vsel %vm918, %v3305, 0.0
        %3311 = vadd.xlane.f32.xlu0 %v3310
        %v3312 = vpop.xlane.xlu0 %3311
        %v3313 = vsel %vm918, %v3307, 0.0
        %3314 = vadd.xlane.f32.xlu0 %v3313
        %v3315 = vpop.xlane.xlu0 %3314
        %v3316 = vsel %vm925, %v3309, 0.0
        %3317 = vadd.xlane.f32.xlu0 %v3316
        %v3318 = vpop.xlane.xlu0 %3317
        %v3319 = vrcp.pop %v3312
        %v3320 = vrcp.pop %v3315
        %v3321 = vrcp.pop %v3318
        %v3322 = vmul.f32 %v3305, %v3319
        %v3323 = vmul.f32 %v3307, %v3320
        %v3324 = vmul.f32 %v3309, %v3321
        %3325 = vrot.lane.b32.xlu0 %v2853, 40
        %v3326 = vpop.permute.xlu0 %3325
        %3327 = vrot.lane.b32.xlu0 %v2855, 40
        %v3328 = vpop.permute.xlu0 %3327
        %3329 = vrot.lane.b32.xlu0 %v2858, 40
        %v3330 = vpop.permute.xlu0 %3329
        %v3334 = vsel %vm918, %v3322, 0
        %v3337 = vsel %vm918, %v3323, 0
        %v3340 = vsel %vm918, %v3324, 0
        %v3342 = vsel %vm970, %v3330, 0
        %3344 = vmatpush.msra.mxu0 0.0
        %3345 = vmatpush.msra.mxu0 0.0
        %3346 = vmatpush.msra.mxu0 0.0
        %3347 = vmatpush.msra.mxu0 0.0
        %3348 = vmatpush.msra.mxu0 0.0
        %3349 = vmatpush.msra.mxu0 0.0
        %3350 = vmatpush.msra.mxu0 0.0
        %3351 = vmatpush.msra.mxu0 0.0
        %3352 = vmatpush.msra.mxu0 0.0
        %3353 = vmatpush.msra.mxu0 0.0
        %3354 = vmatpush.msra.mxu0 0.0
        %3355 = vmatpush.msra.mxu0 0.0
        %3356 = vmatpush.msra.mxu0 0.0
        %3357 = vmatpush.msra.mxu0 %v3342
        %3358 = vmatpush.msra.mxu0 %v3328
        %3359 = vmatpush.msra.mxu0 %v3326
        %3360 = vmatmul.f32.gmra.mxu0 %v3334
        %v3361 = vpop.f32.mrf.mxu0
        %v3362 = vadd.f32 0.0, %v3361
        %3363 = vmatmul.f32.gmra.mxu0 %v3337
        %v3364 = vpop.f32.mrf.mxu0
        %v3365 = vadd.f32 0.0, %v3364
        %3366 = vmatmul.f32.gmra.mxu0 %v3340
        %v3367 = vpop.f32.mrf.mxu0
        %v3368 = vadd.f32 0.0, %v3367
        %3369 = vdwg.mxu0
        %3373 = vrot.lane.b32.xlu0 %v3106, 8
        %v3374 = vpop.permute.xlu0 %3373
        %3375 = vrot.lane.b32.xlu0 %v3109, 8
        %v3376 = vpop.permute.xlu0 %3375
        %3377 = vrot.lane.b32.xlu0 %v3112, 8
        %v3378 = vpop.permute.xlu0 %3377
        %3385 = vrot.lane.b32.xlu0 %v3234, 16
        %v3386 = vpop.permute.xlu0 %3385
        %3387 = vrot.lane.b32.xlu0 %v3237, 16
        %v3388 = vpop.permute.xlu0 %3387
        %3389 = vrot.lane.b32.xlu0 %v3240, 16
        %v3390 = vpop.permute.xlu0 %3389
        %3397 = vrot.lane.b32.xlu0 %v3362, 24
        %v3398 = vpop.permute.xlu0 %3397
        %3399 = vrot.lane.b32.xlu0 %v3365, 24
        %v3400 = vpop.permute.xlu0 %3399
        %3401 = vrot.lane.b32.xlu0 %v3368, 24
        %v3402 = vpop.permute.xlu0 %3401
        %v3406 = vsel %vm879, %v2978, %v3374
        %v3407 = vsel %vm879, %v2981, %v3376
        %v3408 = vsel %vm879, %v2984, %v3378
        %v3409 = vsel %vm1422, %v3406, %v3386
        %v3410 = vsel %vm1422, %v3407, %v3388
        %v3411 = vsel %vm1422, %v3408, %v3390
        %v3412 = vsel %vm1426, %v3409, %v3398
        %v3413 = vsel %vm1426, %v3410, %v3400
        %v3414 = vsel %vm1426, %v3411, %v3402
        %v3415 = vpack.c.bf16 %v3413, %v3412
        %v3416 = vpack.c.bf16 %v3414, %v3414
        %v3421 = vunpack.c.l.b16 %v2723
        %v3422 = vunpack.c.l.b16 %v2724
        %v3423 = vunpack.c.l.b16 %v2725
        %v3424 = vunpack.c.l.b16 %v2726
        %v3425 = vpack.c.b16 %v3422, %v3421
        %v3426 = vpack.c.b16 %v3424, %v3423
        %v3430 = vsel %vm748, %v3415, 0
        %v3433 = vsel %vm748, %v3416, 0
        %3435 = vmatpush.bf16.msra.mxu0 0
        %3436 = vmatpush.bf16.msra.mxu0 0
        %3437 = vmatpush.bf16.msra.mxu0 0
        %3438 = vmatpush.bf16.msra.mxu0 0
        %3439 = vmatpush.bf16.msra.mxu0 0
        %3440 = vmatpush.bf16.msra.mxu0 0
        %3441 = vmatpush.bf16.msra.mxu0 %v3426
        %3442 = vmatpush.bf16.msra.mxu0 %v3425
        %3443 = vmatmul.bf16.gmra.mxu0 %v3430
        %v3444 = vpop.f32.mrf.mxu0
        %v3445 = vadd.f32 0.0, %v3444
        %v3446 = vpop.f32.mrf.mxu0
        %v3447 = vadd.f32 0.0, %v3446
        %3448 = vmatmul.bf16.gmra.mxu0 %v3433
        %v3449 = vpop.f32.mrf.mxu0
        %v3450 = vadd.f32 0.0, %v3449
        %v3451 = vpop.f32.mrf.mxu0
        %3452 = vdwg.mxu0
        %v3453 = vadd.f32 %v2716, %v3445
        %v3454 = vadd.f32 %v2717, %v3447
        %v3455 = vadd.f32 %v2718, %v3450
        %v3456 = vperm.slane %v2747, 4
        %v3457 = vadd.f32 %v3453, %v3456
        %v3458 = vadd.f32 %v3454, %v3456
        %v3459 = vadd.f32 %v3455, %v3456
        %v3460 = vsel %vm748, %v3457, 0.0
        %3461 = vadd.xlane.f32.xlu0 %v3460
        %v3462 = vpop.xlane.xlu0 %3461
        %v3463 = vsel %vm748, %v3458, 0.0
        %3464 = vadd.xlane.f32.xlu0 %v3463
        %v3465 = vpop.xlane.xlu0 %3464
        %v3466 = vsel %vm755, %v3459, 0.0
        %3467 = vadd.xlane.f32.xlu0 %v3466
        %v3468 = vpop.xlane.xlu0 %3467
        %v3469 = vmul.f32 %v3462, %v765
        %v3470 = vmul.f32 %v3465, %v765
        %v3471 = vmul.f32 %v3468, %v765
        %v3472 = vsub.f32 %v3457, %v3469
        %v3473 = vsub.f32 %v3458, %v3470
        %v3474 = vsub.f32 %v3459, %v3471
        %v3475 = vmul.f32 %v3472, %v3472
        %v3476 = vmul.f32 %v3473, %v3473
        %v3477 = vmul.f32 %v3474, %v3474
        %v3478 = vsel %vm748, %v3475, 0.0
        %3479 = vadd.xlane.f32.xlu0 %v3478
        %v3480 = vpop.xlane.xlu0 %3479
        %v3481 = vsel %vm748, %v3476, 0.0
        %3482 = vadd.xlane.f32.xlu0 %v3481
        %v3483 = vpop.xlane.xlu0 %3482
        %v3484 = vsel %vm755, %v3477, 0.0
        %3485 = vadd.xlane.f32.xlu0 %v3484
        %v3486 = vpop.xlane.xlu0 %3485
        %v3487 = vmul.f32 %v3480, %v765
        %v3488 = vmul.f32 %v3483, %v765
        %v3489 = vmul.f32 %v3486, %v765
        %v3490 = vadd.f32 %v3487, 1e-05
        %v3491 = vadd.f32 %v3488, 1e-05
        %v3492 = vadd.f32 %v3489, 1e-05
        %v3493 = vrsqrt.pop %v3490
        %v3494 = vmul.f32 %v3493, %v3490
        %v3495 = vmul.f32 %v3494, %v3493
        %v3496 = vmul.f32 0.5, %v3495
        %v3497 = vsub.f32 1.5, %v3496
        %v3498 = vmul.f32 %v3493, %v3497
        %vm3499 = vweird.f32 %v3490
        %vm3500 = vweird.f32 %v3493
        %vm3501 = vmor %vm3499, %vm3500
        %v3502 = vsel %vm3501, %v3493, %v3498
        %v3503 = vrsqrt.pop %v3491
        %v3504 = vmul.f32 %v3503, %v3491
        %v3505 = vmul.f32 %v3504, %v3503
        %v3506 = vmul.f32 0.5, %v3505
        %v3507 = vsub.f32 1.5, %v3506
        %v3508 = vmul.f32 %v3503, %v3507
        %vm3509 = vweird.f32 %v3491
        %vm3510 = vweird.f32 %v3503
        %vm3511 = vmor %vm3509, %vm3510
        %v3512 = vsel %vm3511, %v3503, %v3508
        %v3513 = vrsqrt.pop %v3492
        %v3514 = vmul.f32 %v3513, %v3492
        %v3515 = vmul.f32 %v3514, %v3513
        %v3516 = vmul.f32 0.5, %v3515
        %v3517 = vsub.f32 1.5, %v3516
        %v3518 = vmul.f32 %v3513, %v3517
        %vm3519 = vweird.f32 %v3492
        %vm3520 = vweird.f32 %v3513
        %vm3521 = vmor %vm3519, %vm3520
        %v3522 = vsel %vm3521, %v3513, %v3518
        %v3523 = vmul.f32 %v3472, %v3502
        %v3524 = vmul.f32 %v3473, %v3512
        %v3525 = vmul.f32 %v3474, %v3522
        %v3526 = vperm.slane %v2747, 2
        %v3527 = vmul.f32 %v3523, %v3526
        %v3528 = vmul.f32 %v3524, %v3526
        %v3529 = vmul.f32 %v3525, %v3526
        %v3530 = vperm.slane %v2747, 3
        %v3531 = vadd.f32 %v3527, %v3530
        %v3532 = vadd.f32 %v3528, %v3530
        %v3533 = vadd.f32 %v3529, %v3530
        %v3534 = vpack.c.bf16 %v3532, %v3531
        %v3535 = vpack.c.bf16 %v3533, %v3533
        %v3536 = vperm.slane %v2747, 7
        %v3541 = vunpack.c.l.b16 %v2727
        %v3542 = vunpack.c.l.b16 %v2728
        %v3543 = vunpack.c.l.b16 %v2729
        %v3544 = vunpack.c.l.b16 %v2730
        %v3545 = vpack.c.b16 %v3542, %v3541
        %v3546 = vpack.c.b16 %v3544, %v3543
        %v3550 = vsel %vm748, %v3534, 0
        %v3553 = vsel %vm748, %v3535, 0
        %3555 = vmatpush.bf16.msra.mxu0 0
        %3556 = vmatpush.bf16.msra.mxu0 0
        %3557 = vmatpush.bf16.msra.mxu0 0
        %3558 = vmatpush.bf16.msra.mxu0 0
        %3559 = vmatpush.bf16.msra.mxu0 0
        %3560 = vmatpush.bf16.msra.mxu0 0
        %3561 = vmatpush.bf16.msra.mxu0 %v3546
        %3562 = vmatpush.bf16.msra.mxu0 %v3545
        %3563 = vmatmul.bf16.gmra.mxu0 %v3550
        %v3564 = vpop.f32.mrf.mxu0
        %v3565 = vadd.f32 %v3536, %v3564
        %v3566 = vpop.f32.mrf.mxu0
        %v3567 = vadd.f32 %v3536, %v3566
        %3568 = vmatmul.bf16.gmra.mxu0 %v3553
        %v3569 = vpop.f32.mrf.mxu0
        %v3570 = vadd.f32 %v3536, %v3569
        %v3571 = vpop.f32.mrf.mxu0
        %3572 = vdwg.mxu0
        %v3573 = vmul.f32 %v3565, %v3565
        %v3574 = vmul.f32 %v3567, %v3567
        %v3575 = vmul.f32 %v3570, %v3570
        %v3576 = vmul.f32 %v3565, %v3573
        %v3577 = vmul.f32 %v3567, %v3574
        %v3578 = vmul.f32 %v3570, %v3575
        %v3579 = vmul.f32 %v3576, 0.044715
        %v3580 = vmul.f32 %v3577, 0.044715
        %v3581 = vmul.f32 %v3578, 0.044715
        %v3582 = vadd.f32 %v3565, %v3579
        %v3583 = vadd.f32 %v3567, %v3580
        %v3584 = vadd.f32 %v3570, %v3581
        %v3585 = vmul.f32 %v3582, 0.7978846
        %v3586 = vmul.f32 %v3583, 0.7978846
        %v3587 = vmul.f32 %v3584, 0.7978846
        %v3588 = vtanh.pop %v3585
        %v3589 = vtanh.pop %v3586
        %v3590 = vtanh.pop %v3587
        %v3591 = vadd.f32 %v3588, 1.0
        %v3592 = vadd.f32 %v3589, 1.0
        %v3593 = vadd.f32 %v3590, 1.0
        %v3594 = vmul.f32 %v3591, 0.5
        %v3595 = vmul.f32 %v3592, 0.5
        %v3596 = vmul.f32 %v3593, 0.5
        %v3597 = vmul.f32 %v3565, %v3594
        %v3598 = vmul.f32 %v3567, %v3595
        %v3599 = vmul.f32 %v3570, %v3596
        %v3600 = vpack.c.bf16 %v3598, %v3597
        %v3601 = vpack.c.bf16 %v3599, %v3599
        %v3602 = vperm.slane %v2747, 5
        %v3619 = vunpack.c.l.b16 %v2731
        %v3620 = vunpack.c.l.b16 %v2732
        %v3621 = vunpack.c.l.b16 %v2733
        %v3622 = vunpack.c.l.b16 %v2734
        %v3623 = vunpack.c.l.b16 %v2735
        %v3624 = vunpack.c.l.b16 %v2736
        %v3625 = vunpack.c.l.b16 %v2737
        %v3626 = vunpack.c.l.b16 %v2738
        %v3627 = vunpack.c.l.b16 %v2739
        %v3628 = vunpack.c.l.b16 %v2740
        %v3629 = vunpack.c.l.b16 %v2741
        %v3630 = vunpack.c.l.b16 %v2742
        %v3631 = vunpack.c.l.b16 %v2743
        %v3632 = vunpack.c.l.b16 %v2744
        %v3633 = vunpack.c.l.b16 %v2745
        %v3634 = vunpack.c.l.b16 %v2746
        %v3635 = vpack.c.b16 %v3620, %v3619
        %v3636 = vpack.c.b16 %v3622, %v3621
        %v3637 = vpack.c.b16 %v3624, %v3623
        %v3638 = vpack.c.b16 %v3626, %v3625
        %v3639 = vpack.c.b16 %v3628, %v3627
        %v3640 = vpack.c.b16 %v3630, %v3629
        %v3641 = vpack.c.b16 %v3632, %v3631
        %v3642 = vpack.c.b16 %v3634, %v3633
        %3651 = vmatpush.bf16.msra.mxu0 %v3642
        %3652 = vmatpush.bf16.msra.mxu0 %v3641
        %3653 = vmatpush.bf16.msra.mxu0 %v3640
        %3654 = vmatpush.bf16.msra.mxu0 %v3639
        %3655 = vmatpush.bf16.msra.mxu0 %v3638
        %3656 = vmatpush.bf16.msra.mxu0 %v3637
        %3657 = vmatpush.bf16.msra.mxu0 %v3636
        %3658 = vmatpush.bf16.msra.mxu0 %v3635
        %3659 = vmatmul.bf16.gmra.mxu0 %v3600
        %v3660 = vpop.f32.mrf.mxu0
        %v3661 = vadd.f32 %v3602, %v3660
        %v3662 = vpop.f32.mrf.mxu0
        %v3663 = vadd.f32 %v3602, %v3662
        %3664 = vmatmul.bf16.gmra.mxu0 %v3601
        %v3665 = vpop.f32.mrf.mxu0
        %v3666 = vpop.f32.mrf.mxu0
        %3667 = vdwg.mxu0
        %v3668 = vadd.f32 %v3457, %v3661
        %v3669 = vadd.f32 %v3458, %v3663
        %v3670 = vsel %vm748, %v3668, 0.0
        %3671 = vadd.xlane.f32.xlu0 %v3670
        %v3672 = vpop.xlane.xlu0 %3671
        %v3673 = vsel %vm748, %v3669, 0.0
        %3674 = vadd.xlane.f32.xlu0 %v3673
        %v3675 = vpop.xlane.xlu0 %3674
        %v3676 = vmul.f32 %v3672, %v765
        %v3677 = vmul.f32 %v3675, %v765
        %v3678 = vsub.f32 %v3668, %v3676
        %v3679 = vsub.f32 %v3669, %v3677
        %v3680 = vmul.f32 %v3678, %v3678
        %v3681 = vmul.f32 %v3679, %v3679
        %v3682 = vsel %vm748, %v3680, 0.0
        %3683 = vadd.xlane.f32.xlu0 %v3682
        %v3684 = vpop.xlane.xlu0 %3683
        %v3685 = vsel %vm748, %v3681, 0.0
        %3686 = vadd.xlane.f32.xlu0 %v3685
        %v3687 = vpop.xlane.xlu0 %3686
        %v3688 = vmul.f32 %v3684, %v765
        %v3689 = vmul.f32 %v3687, %v765
        %v3690 = vadd.f32 %v3688, 1e-05
        %v3691 = vadd.f32 %v3689, 1e-05
        %v3692 = vrsqrt.pop %v3690
        %v3693 = vmul.f32 %v3692, %v3690
        %v3694 = vmul.f32 %v3693, %v3692
        %v3695 = vmul.f32 0.5, %v3694
        %v3696 = vsub.f32 1.5, %v3695
        %v3697 = vmul.f32 %v3692, %v3696
        %vm3698 = vweird.f32 %v3690
        %vm3699 = vweird.f32 %v3692
        %vm3700 = vmor %vm3698, %vm3699
        %v3701 = vsel %vm3700, %v3692, %v3697
        %v3702 = vrsqrt.pop %v3691
        %v3703 = vmul.f32 %v3702, %v3691
        %v3704 = vmul.f32 %v3703, %v3702
        %v3705 = vmul.f32 0.5, %v3704
        %v3706 = vsub.f32 1.5, %v3705
        %v3707 = vmul.f32 %v3702, %v3706
        %vm3708 = vweird.f32 %v3691
        %vm3709 = vweird.f32 %v3702
        %vm3710 = vmor %vm3708, %vm3709
        %v3711 = vsel %vm3710, %v3702, %v3707
        %v3712 = vmul.f32 %v3678, %v3701
        %v3713 = vmul.f32 %v3679, %v3711
        %v3714 = vperm.slane %v613, 0
        %v3715 = vmul.f32 %v3712, %v3714
        %v3716 = vmul.f32 %v3713, %v3714
        %v3717 = vperm.slane %v614, 0
        %v3718 = vadd.f32 %v3715, %v3717
        %v3719 = vadd.f32 %v3716, %v3717
        %v3720 = vpack.c.bf16 %v3719, %v3718
        %v3721 = vld [vmem:[%s16] sm:$0xf]
        %v3722 = vld [vmem:[%s16 + $0x4] sm:$0xf]
        %v3723 = vld [vmem:[%s16 + $0x8] sm:$0xf]
        %v3724 = vld [vmem:[%s16 + $0xc] sm:$0xf]
        %v3725 = vperm.slane %v615, 0
        %v3730 = vunpack.c.l.b16 %v3721
        %v3731 = vunpack.c.l.b16 %v3722
        %v3732 = vunpack.c.l.b16 %v3723
        %v3733 = vunpack.c.l.b16 %v3724
        %v3734 = vpack.c.b16 %v3731, %v3730
        %v3735 = vpack.c.b16 %v3733, %v3732
        %v3739 = vsel %vm748, %v3720, 0
        %3741 = vmatpush.bf16.msra.mxu0 0
        %3742 = vmatpush.bf16.msra.mxu0 0
        %3743 = vmatpush.bf16.msra.mxu0 0
        %3744 = vmatpush.bf16.msra.mxu0 0
        %3745 = vmatpush.bf16.msra.mxu0 0
        %3746 = vmatpush.bf16.msra.mxu0 0
        %3747 = vmatpush.bf16.msra.mxu0 %v3735
        %3748 = vmatpush.bf16.msra.mxu0 %v3734
        %3749 = vmatmul.bf16.gmra.mxu0 %v3739
        %v3750 = vpop.f32.mrf.mxu0
        %v3751 = vadd.f32 %v3725, %v3750
        %v3752 = vpop.f32.mrf.mxu0
        %v3753 = vadd.f32 %v3725, %v3752
        %3754 = vdwg.mxu0
        %3755 = vst.msk [vmem:[%s584] sm:$0xff] %vm643, %v3751
        %3756 = vst.msk [vmem:[%s584 + $0x8] sm:$0xff] %vm643, %v3753
        %v3757 = vsub.f32 %v3751, %v604
        %v3758 = vsub.f32 %v3753, %v605
        %v3759 = vmul.f32 %v3757, %v3757
        %v3760 = vmul.f32 %v3758, %v3758
        %v3761 = vsel %vm643, %v3759, 0.0
        %3762 = vadd.xlane.f32.xlu0 %v3761
        %v3763 = vpop.xlane.xlu0 %3762
        %v3764 = vsel %vm643, %v3760, 0.0
        %3765 = vadd.xlane.f32.xlu0 %v3764
        %v3766 = vpop.xlane.xlu0 %3765
        %v3767 = vrcp.pop 48.0
        %v3768 = vmul.f32 48.0, %v3767
        %v3769 = vsub.f32 1.0, %v3768
        %v3770 = vmul.f32 %v3767, %v3769
        %v3771 = vadd.f32 %v3767, %v3770
        %vm3772 = vweird.f32 %v3767
        %v3773 = vsel %vm3772, %v3767, %v3771
        %v3774 = vmul.f32 %v3763, %v3773
        %v3775 = vmul.f32 %v3766, %v3773
        %v3776 = vmul.f32 %v3774, %v607
        %v3777 = vmul.f32 %v3775, %v608
        %3778 = vrot.lane.b32.xlu0 %v607, 1
        %v3779 = vpop.permute.xlu0 %3778
        %3780 = vrot.lane.b32.xlu0 %v608, 1
        %v3781 = vpop.permute.xlu0 %3780
        %vm3784 = vcmask 7168
        %v3785 = vsel %vm3784, %v3776, %v3779
        %v3786 = vsel %vm3784, %v3777, %v3781
        %vm3787 = vcmask 15360
        %v3788 = vsel %vm3787, %v3785, 0.0
        %v3789 = vsel %vm3787, %v3786, 0.0
        %v3790 = vadd.f32 %v3788, %v3789
        %v3791 = vrot.slane %v3790, 4
        %v3792 = vadd.f32 %v3790, %v3791
        %v3793 = vrot.slane %v3792, 2
        %v3794 = vadd.f32 %v3792, %v3793
        %v3795 = vrot.slane %v3794, 1
        %v3796 = vadd.f32 %v3794, %v3795
        %vm3797 = vcmask 8192
        %3798 = vst.msk [vmem:[%s602] sm:$0x1] %vm3797, %v3796
        %s3799 = sand.u32 %s408, 1
        %s3800 = scalar_lea.sflag [#allocation3], %s3799
        %s3801 = sand.u32 %s408, 1
        %s3802 = smul.addr %s3801, 16
        %s3803 = scalar_lea.vmem [#allocation2], %s3802
        %p3804 = scmp.lt.s32.totalorder %s33, 1
        %s3805 = scalar_select %p3804, %s33, 1
        %s3806 = scalar_lea.vmem %s18, %s3805
        // Predicated region
        $region89: #{forward.1} parent=87 // pred_check
          %p3807 = pneg %p418
        $region90: #{forward.1} parent=87 // pred_check_branch
          %3809 = sbr.rel (%p3807) target = $region92
        $region91: #{forward.1} parent=87 // pred_region
          %3811 = vsyncadd %s3800, 0
          %s3812 = smul.addr %s33, 2
          %s3813 = smul.addr %s3812, 8
          %s3814 = scalar_lea.hbm %s17, %s3813
          %s3815 = sshll.u32 %s3803, 4
          %s3816 = int_to_ptr.vmem [resolvable:$true] %s3815
          %s3817 = sshll.u32 %s3814, 4
          %s3818 = int_to_ptr.hbm [resolvable:$true] %s3817
          %3823 = dma.vmem_to_hbm [thread:$0]  %s3816, 256, %s3818, %s3800, 128, 128, 8
        $region92: #{forward.1} parent=87 // pred_fallthru
          _
        // Predicated region
        $region93: #{forward.1} parent=87 // pred_check
          %p3824 = pneg %p444
        $region94: #{forward.1} parent=87 // pred_check_branch
          %3826 = sbr.rel (%p3824) target = $region96
        $region95: #{forward.1} parent=87 // pred_region
          _
        $region96: #{forward.1} parent=87 // pred_fallthru
          _
      $region88: #{forward.1} parent=5 // pred_fallthru
        _
      %p3827 = scmp.le.s32.totalorder 2, %s28
      // Predicated region
      $region97: #{forward.1} parent=5 // pred_check
        %p3828 = pneg %p3827
      $region98: #{forward.1} parent=5 // pred_check_branch
        %3830 = sbr.rel (%p3828) target = $region100
      $region99: #{forward.1} parent=5 // pred_region
        %s3831 = ssub.s32 %s28, 2
        // Predicated region
        $region101: #{forward.1} parent=99 // pred_check
          %p3832 = pneg %p424
        $region102: #{forward.1} parent=99 // pred_check_branch
          %3834 = sbr.rel (%p3832) target = $region104
        $region103: #{forward.1} parent=99 // pred_region
          %s3835 = sand.u32 %s409, 1
          %s3836 = scalar_lea.sflag [#allocation3], %s3835
          %s3837 = sand.u32 %s409, 1
          %s3838 = smul.addr %s3837, 16
          %s3839 = scalar_lea.vmem [#allocation2], %s3838
          %3841 = dma.done %s3836, 256
        $region104: #{forward.1} parent=99 // pred_fallthru
          _
        // Predicated region
        $region105: #{forward.1} parent=99 // pred_check
          %p3842 = pneg %p450
        $region106: #{forward.1} parent=99 // pred_check_branch
          %3844 = sbr.rel (%p3842) target = $region108
        $region107: #{forward.1} parent=99 // pred_region
          %p3845 = scmp.lt.s32.totalorder %s34, 1
          %s3846 = scalar_select %p3845, %s34, 1
          %s3847 = scalar_lea.vmem %s18, %s3846
        $region108: #{forward.1} parent=99 // pred_fallthru
          _
      $region100: #{forward.1} parent=5 // pred_fallthru
        _
    $region6: #{forward.1} parent=1 // loop_footer
      %s32 = sadd.s32 1, %s28
    $region7: #{forward.1} parent=1 // loop_footer_branch
      %27 = sbr.rel target = $region3
    $region8: #{forward.1} parent=1 // loop_exit
      _
    %3848 = vsyncpa [#allocation3], 1
    %s3849 = scalar_lea.sflag [#allocation3], 1
    %3850 = vsyncpa %s3849, 1

</llo_original>
